<compile_context>
chip_gen: v5e
topology: v5e:2x2
jax: 0.10.0
libtpu: 0.0.40
codegen_flags: <defaults>
</compile_context>

<pallas_src>
import functools

import numpy as np
import jax
import jax.numpy as jnp
from jax.experimental import pallas as pl
from jax.experimental.pallas import tpu as pltpu

BN_EPS = 1e-5

# Lane padding of each conv's (folded) input width, and static row layout of the
# bf16 weight blob: (row0, rows, cols) per band.  Batch-independent.
LP1, LP2, LP3 = 128, 256, 256
W_B1 = (0, 5 * LP1, 28 * 6)                      # conv1 band        [640, 168]
W_B2 = (5 * LP1, 5 * LP2, 10 * 16)               # pool1+conv2 band  [1280, 160]
W_B3 = (5 * LP1 + 5 * LP2, 5 * LP3, 1 * 120)     # pool2+conv3 band  [1280, 120]
W_ROWS = W_B3[0] + W_B3[1]                       # 3200
W_LANES = 168


# ----------------------------------------------------------------------------
# Static layout of the f32 "everything else" blob (shared by prep and kernel).
# ----------------------------------------------------------------------------
def _fblob_layout(batch):
    lanes = max(168, 28 * batch)
    lay = {}
    r = 0

    def add(name, rows, cols):
        nonlocal r
        lay[name] = (r, rows, cols)
        r += -(-rows // 8) * 8            # keep every region 8-row aligned

    add("gat1", 28 * 6, 6)                # per-channel gather  (ow*oc, oc)
    add("bc1", 6, 28 * 6)                 # per-channel bcast   (oc, ow*oc)
    add("gat2", 10 * 16, 16)
    add("bc2", 16, 10 * 16)
    add("prow1", 14 * batch, 28 * batch)  # row-pair-sum pool matrices
    add("prow2", 5 * batch, 10 * batch)
    add("fw1", 120, 84)
    add("fw2", 84, 10)
    add("vec", 8, lanes)                  # 8 packed row vectors (see prep)
    return lay, -(-r // 8) * 8, lanes


# ----------------------------------------------------------------------------
# The single fused kernel.
# ----------------------------------------------------------------------------
def lenet5_kernel(x_ref, w_ref, f_ref, o_ref, *, batch):
    b = batch
    lay, _, _ = _fblob_layout(b)

    def fmat(name):
        r, nr, nc = lay[name]
        return f_ref[r:r + nr, 0:nc]

    vrow = lay["vec"][0]

    def fvec(i, n):                                   # [1, n] row vector
        return f_ref[vrow + i:vrow + i + 1, 0:n]

    def conv(act, w_off, k, lane_pad):
        """Merged-K conv: lane-stack the k row-shifted slices (at lane_pad-
        aligned offsets) and hit the concatenated band blob with ONE bf16 dot."""
        r0, nr, nc = w_off
        band = w_ref[r0:r0 + nr, 0:nc]                # bf16 [k*lane_pad, OW*OC]
        rows, lanes = act.shape
        ohb = rows - (k - 1) * b
        if lane_pad > lanes:
            act = jnp.concatenate(
                [act, jnp.zeros((rows, lane_pad - lanes), act.dtype)], axis=1)
        stacked = jnp.concatenate(
            [act[di * b:di * b + ohb, :] for di in range(k)], axis=1)
        return jnp.dot(stacked.astype(jnp.bfloat16), band,
                       preferred_element_type=jnp.float32)

    def bn_relu(y, gat, bcast, gamma, beta_lanes, inv_n):
        """Training-mode BatchNorm2d (+ReLU) on a [rows=(oh,b), lanes=(ow,oc)]
        tile.  E[x^2]-E[x]^2 form, stats in f32, affine folded."""
        m = y.shape[0]
        ones = jnp.ones((1, m), jnp.float32)
        rs = jnp.dot(ones, y, preferred_element_type=jnp.float32)       # sum x
        ss = jnp.dot(ones, y * y, preferred_element_type=jnp.float32)   # sum x^2
        ch = jnp.dot(jnp.concatenate([rs, ss], axis=0), gat,
                     preferred_element_type=jnp.float32) * inv_n        # [2, OC]
        mu = ch[0:1, :]
        var = ch[1:2, :] - mu * mu
        scale = gamma * jax.lax.rsqrt(var + BN_EPS)                     # [1, OC]
        sb = jnp.dot(jnp.concatenate([scale, mu * scale], axis=0), bcast,
                     preferred_element_type=jnp.float32)                # [2, OW*OC]
        return jnp.maximum(y * sb[0:1, :] + (beta_lanes - sb[1:2, :]), 0.0)

    x = x_ref[...]                                            # [32b, 32*3]

    # conv1 + bn1 + relu : 32x32x3 -> 28x28x6
    y1 = conv(x, W_B1, 5, LP1)                                # [28b, 28*6]
    a1 = bn_relu(y1, fmat("gat1"), fmat("bc1"), fvec(0, 6), fvec(1, 168),
                 1.0 / (b * 28 * 28))
    # pool1 row-pair sum (column averaging is folded into conv2's bands)
    p1 = jnp.dot(fmat("prow1"), a1, preferred_element_type=jnp.float32)  # [14b, 168]

    # (pool1 cols +) conv2 + bn2 + relu : 14x14x6 -> 10x10x16
    y2 = conv(p1, W_B2, 5, LP2)                               # [10b, 10*16]
    a2 = bn_relu(y2, fmat("gat2"), fmat("bc2"), fvec(2, 16), fvec(3, 160),
                 1.0 / (b * 10 * 10))
    p2 = jnp.dot(fmat("prow2"), a2, preferred_element_type=jnp.float32)  # [5b, 160]

    # (pool2 cols +) conv3 + bn3 + relu : 5x5x16 -> 1x1x120  (== x.view(-1,120))
    # OW == 1, so the gather/broadcast matmuls would be identities -> skipped.
    y3 = conv(p2, W_B3, 5, LP3)                               # [b, 120]
    ones_b = jnp.ones((1, b), jnp.float32)
    mu3 = jnp.dot(ones_b, y3, preferred_element_type=jnp.float32) * (1.0 / b)
    ex2 = jnp.dot(ones_b, y3 * y3, preferred_element_type=jnp.float32) * (1.0 / b)
    scale3 = fvec(4, 120) * jax.lax.rsqrt(ex2 - mu3 * mu3 + BN_EPS)
    a3 = jnp.maximum((y3 - mu3) * scale3 + fvec(5, 120), 0.0)  # [b, 120]

    # fc1 + relu + fc2 (kept in f32: negligible cost, protects logit precision)
    h = jnp.maximum(
        jnp.dot(a3, fmat("fw1"), preferred_element_type=jnp.float32) + fvec(6, 84),
        0.0)
    o_ref[...] = (jnp.dot(h, fmat("fw2"), preferred_element_type=jnp.float32)
                  + fvec(7, 10))


# ----------------------------------------------------------------------------
# pallas_call wrapper
# ----------------------------------------------------------------------------
def _full_block(arr):
    nd = arr.ndim
    return pl.BlockSpec(arr.shape, lambda *_: (0,) * nd)


def lenet5_forward(x_nchw, wblob, fblob):
    b, c, h, w = x_nchw.shape
    # NCHW -> rows=(h, b), lanes=(w, c): one cheap XLA transpose on the tiny input.
    x_rows = jnp.transpose(x_nchw.astype(jnp.float32),
                           (2, 0, 3, 1)).reshape(h * b, w * c)
    kernel = functools.partial(lenet5_kernel, batch=b)
    return pl.pallas_call(
        kernel,
        out_shape=jax.ShapeDtypeStruct((b, 10), jnp.float32),
        in_specs=[_full_block(x_rows), _full_block(wblob), _full_block(fblob)],
        out_specs=pl.BlockSpec((b, 10), lambda *_: (0, 0)),
        compiler_params=pltpu.CompilerParams(
            vmem_limit_bytes=16 * 1024 * 1024),   # real footprint ~2 MiB
    )(x_rows, wblob, fblob)


# ----------------------------------------------------------------------------
# Host-side (numpy) precomputation of the two packed constant operands.
# ----------------------------------------------------------------------------
def _conv_bands(w_oihw, w_in):
    """PyTorch conv weight [OC,Cin,K,K] -> per-vertical-offset band matrices
    [K, W_in*Cin, OW*OC] such that conv = sum_di rowshift_di(act) @ bands[di]."""
    w = np.asarray(w_oihw, np.float32)
    oc, cin, k, _ = w.shape
    ow = w_in - k + 1
    bands = np.zeros((k, w_in * cin, ow * oc), np.float32)
    for di in range(k):
        for dj in range(k):
            blk = w[:, :, di, dj].T                  # [Cin, OC]
            for o in range(ow):
                wp = o + dj
                bands[di, wp * cin:(wp + 1) * cin, o * oc:(o + 1) * oc] = blk
    return bands


def _pool_col(w_in, c):
    """Column-pair-average matrix [w_in*c, (w_in//2)*c] (0.25 coefficients)."""
    w_out = w_in // 2
    m = np.zeros((w_in * c, w_out * c), np.float32)
    for wo in range(w_out):
        for ch in range(c):
            m[(2 * wo) * c + ch, wo * c + ch] = 0.25
            m[(2 * wo + 1) * c + ch, wo * c + ch] = 0.25
    return m


def _pool_row(h_in, batch):
    """Row-pair-sum matrix [ (h_in//2)*B, h_in*B ] for rows=(h,b)."""
    h_out = h_in // 2
    m = np.zeros((h_out * batch, h_in * batch), np.float32)
    for r in range(h_out):
        for b in range(batch):
            m[r * batch + b, (2 * r) * batch + b] = 1.0
            m[r * batch + b, (2 * r + 1) * batch + b] = 1.0
    return m


def _merged_band(bands, lane_pad, left=None):
    """Stack (left @ band_di) at rows [di*lane_pad, di*lane_pad+L) of one matrix."""
    k = bands.shape[0]
    mats = [bands[i] if left is None else left @ bands[i] for i in range(k)]
    rows, cols = mats[0].shape
    assert rows <= lane_pad
    out = np.zeros((k * lane_pad, cols), np.float32)
    for i in range(k):
        out[i * lane_pad:i * lane_pad + rows, :] = mats[i]
    return out


def prepare_params(params, batch):
    # --- bf16 weight blob: all conv bands, with pool columns folded in ---------
    band1 = _merged_band(_conv_bands(params["w1"], 32), LP1)
    band2 = _merged_band(_conv_bands(params["w2"], 14), LP2,
                         left=_pool_col(28, 6))
    band3 = _merged_band(_conv_bands(params["w3"], 5), LP3,
                         left=_pool_col(10, 16))
    wblob = np.zeros((W_ROWS, W_LANES), np.float32)
    for (r0, nr, nc), band in ((W_B1, band1), (W_B2, band2), (W_B3, band3)):
        wblob[r0:r0 + nr, :nc] = band

    # --- f32 blob: gather/bcast/pool matrices, FC weights, per-channel rows ----
    lay, nrows, lanes = _fblob_layout(batch)
    f = np.zeros((nrows, lanes), np.float32)

    def put(name, arr):
        r, nr, nc = lay[name]
        f[r:r + nr, :nc] = np.asarray(arr, np.float32).reshape(nr, nc)

    gat1 = np.tile(np.eye(6, dtype=np.float32), (28, 1))     # [168, 6]
    gat2 = np.tile(np.eye(16, dtype=np.float32), (10, 1))    # [160, 16]
    put("gat1", gat1)
    put("bc1", gat1.T)
    put("gat2", gat2)
    put("bc2", gat2.T)
    put("prow1", _pool_row(28, batch))
    put("prow2", _pool_row(10, batch))
    put("fw1", np.asarray(params["fw1"], np.float32).T)      # [120, 84]
    put("fw2", np.asarray(params["fw2"], np.float32).T)      # [84, 10]

    vr = lay["vec"][0]

    def putv(i, arr):
        a = np.asarray(arr, np.float32).ravel()
        f[vr + i, :a.size] = a

    putv(0, params["g1"])
    putv(1, np.tile(np.asarray(params["be1"], np.float32), 28))   # beta1 -> lanes
    putv(2, params["g2"])
    putv(3, np.tile(np.asarray(params["be2"], np.float32), 10))   # beta2 -> lanes
    putv(4, params["g3"])
    putv(5, params["be3"])
    putv(6, params["fb1"])
    putv(7, params["fb2"])

    return jnp.asarray(wblob, jnp.bfloat16), jnp.asarray(f, jnp.float32)


# ----------------------------------------------------------------------------
# Parameter construction (deterministic, synthetic) + pure-JAX reference.
# ----------------------------------------------------------------------------
def init_params(key):
    ks = jax.random.split(key, 16)

    def nrm(k, shape, scale):
        return scale * jax.random.normal(k, shape, dtype=jnp.float32)

    return {
        "w1": nrm(ks[0], (6, 3, 5, 5), 0.1), "b1": nrm(ks[1], (6,), 0.1),
        "g1": 1.0 + nrm(ks[2], (6,), 0.05), "be1": nrm(ks[3], (6,), 0.05),
        "w2": nrm(ks[4], (16, 6, 5, 5), 0.1), "b2": nrm(ks[5], (16,), 0.1),
        "g2": 1.0 + nrm(ks[6], (16,), 0.05), "be2": nrm(ks[7], (16,), 0.05),
        "w3": nrm(ks[8], (120, 16, 5, 5), 0.05), "b3": nrm(ks[9], (120,), 0.05),
        "g3": 1.0 + nrm(ks[10], (120,), 0.05), "be3": nrm(ks[11], (120,), 0.05),
        "fw1": nrm(ks[12], (84, 120), 0.1), "fb1": nrm(ks[13], (84,), 0.1),
        "fw2": nrm(ks[14], (10, 84), 0.1), "fb2": nrm(ks[15], (10,), 0.1),
    }


def lenet5_reference(x_nchw, p):
    """Pure-JAX reference matching the PyTorch module in its default train() mode."""
    hi = jax.lax.Precision.HIGHEST
    x = x_nchw.astype(jnp.float32)

    def conv(x, w, b):
        y = jax.lax.conv_general_dilated(
            x, w, window_strides=(1, 1), padding="VALID",
            dimension_numbers=("NCHW", "OIHW", "NCHW"), precision=hi)
        return y + b.reshape(1, -1, 1, 1)

    def bn(y, g, be):
        mu = jnp.mean(y, axis=(0, 2, 3), keepdims=True)
        var = jnp.mean((y - mu) ** 2, axis=(0, 2, 3), keepdims=True)  # biased
        return ((y - mu) * jax.lax.rsqrt(var + BN_EPS) * g.reshape(1, -1, 1, 1)
                + be.reshape(1, -1, 1, 1))

    def pool(y):
        n, c, h, w = y.shape
        return y.reshape(n, c, h // 2, 2, w // 2, 2).mean(axis=(3, 5))

    y = jax.nn.relu(bn(conv(x, p["w1"], p["b1"]), p["g1"], p["be1"]))
    y = pool(y)
    y = jax.nn.relu(bn(conv(y, p["w2"], p["b2"]), p["g2"], p["be2"]))
    y = pool(y)
    y = jax.nn.relu(bn(conv(y, p["w3"], p["b3"]), p["g3"], p["be3"]))
    y = y.reshape(-1, 120)
    h = jax.nn.relu(jnp.dot(y, p["fw1"].T, precision=hi) + p["fb1"])
    return jnp.dot(h, p["fw2"].T, precision=hi) + p["fb2"]


# ----------------------------------------------------------------------------
if __name__ == "__main__":
    key = jax.random.PRNGKey(0)
    k_x, k_p = jax.random.split(key)
    # LeNet5 arithmetic requires 32x32 spatial input (conv3 reduces 5x5 -> 1x1).
    # batch=4: train-mode BN normalizes conv3's 1x1 map over the batch alone, so
    # a few samples keep those statistics well-conditioned for the bf16 check.
    x = jax.random.normal(k_x, (4, 3, 32, 32), dtype=jnp.float32)
    params = init_params(k_p)

    wblob, fblob = prepare_params(params, batch=x.shape[0])
    fwd = jax.jit(lenet5_forward)
    out = jax.block_until_ready(fwd(x, wblob, fblob))
    assert out.shape == (x.shape[0], 10), out.shape

    # Sanity check against a pure-JAX f32 reference of the PyTorch module.
    # Tolerance accounts for bf16 MXU operands on the conv band dots.
    ref = jax.block_until_ready(lenet5_reference(x, params))
    max_err = float(jnp.max(jnp.abs(out - ref)))
    assert jnp.allclose(out, ref, rtol=3e-2, atol=3e-2), max_err

    print("KERNEL_OK")
</pallas_src>

<mosaic_0001>
module attributes {stable_mosaic.version = 11 : i64} {
  func.func @lenet5_kernel(%arg0: memref<128x96xf32, #tpu.memory_space<vmem>>, %arg1: memref<3200x168xbf16, #tpu.memory_space<vmem>>, %arg2: memref<648x168xf32, #tpu.memory_space<vmem>>, %arg3: memref<4x10xf32, #tpu.memory_space<vmem>>) attributes {dimension_semantics = [], scalar_prefetch = 0 : i64, scratch_operands = 0 : i64, tpu.core_type = #tpu.core_type<tc>} {
    %c0 = arith.constant 0 : index
    %c0_0 = arith.constant 0 : index
    %0 = vector.load %arg0[%c0, %c0_0] : memref<128x96xf32, #tpu.memory_space<vmem>>, vector<128x96xf32>
    %c0_1 = arith.constant 0 : index
    %c0_2 = arith.constant 0 : index
    %1 = vector.load %arg1[%c0_1, %c0_2] : memref<3200x168xbf16, #tpu.memory_space<vmem>>, vector<640x168xbf16>
    %cst = arith.constant 0.000000e+00 : f32
    %2 = vector.broadcast %cst : f32 to vector<128x32xf32>
    %3 = tpu.concatenate %0, %2 in 1 : vector<128x96xf32>, vector<128x32xf32> -> vector<128x128xf32>
    %4 = vector.extract_strided_slice %3 {offsets = [0, 0], sizes = [112, 128], strides = [1, 1]} : vector<128x128xf32> to vector<112x128xf32>
    %5 = vector.extract_strided_slice %3 {offsets = [4, 0], sizes = [112, 128], strides = [1, 1]} : vector<128x128xf32> to vector<112x128xf32>
    %6 = vector.extract_strided_slice %3 {offsets = [8, 0], sizes = [112, 128], strides = [1, 1]} : vector<128x128xf32> to vector<112x128xf32>
    %7 = vector.extract_strided_slice %3 {offsets = [12, 0], sizes = [112, 128], strides = [1, 1]} : vector<128x128xf32> to vector<112x128xf32>
    %8 = vector.extract_strided_slice %3 {offsets = [16, 0], sizes = [112, 128], strides = [1, 1]} : vector<128x128xf32> to vector<112x128xf32>
    %9 = tpu.concatenate %4, %5, %6, %7, %8 in 1 : vector<112x128xf32>, vector<112x128xf32>, vector<112x128xf32>, vector<112x128xf32>, vector<112x128xf32> -> vector<112x640xf32>
    %10 = arith.truncf %9 : vector<112x640xf32> to vector<112x640xbf16>
    %cst_3 = arith.constant dense<0.000000e+00> : vector<112x168xf32>
    %11 = tpu.matmul %10, %1, %cst_3 {dimension_numbers = #tpu.dot_dimension_numbers<[1], [0], [0], [1], [0, 0, 1, 1], [], []>} : vector<112x640xbf16>, vector<640x168xbf16>, vector<112x168xf32> -> vector<112x168xf32>
    %c0_4 = arith.constant 0 : index
    %c0_5 = arith.constant 0 : index
    %12 = vector.load %arg2[%c0_4, %c0_5] : memref<648x168xf32, #tpu.memory_space<vmem>>, vector<168x6xf32>
    %c168 = arith.constant 168 : index
    %c0_6 = arith.constant 0 : index
    %13 = vector.load %arg2[%c168, %c0_6] : memref<648x168xf32, #tpu.memory_space<vmem>>, vector<6x168xf32>
    %c640 = arith.constant 640 : index
    %c0_7 = arith.constant 0 : index
    %14 = vector.load %arg2[%c640, %c0_7] : memref<648x168xf32, #tpu.memory_space<vmem>>, vector<1x6xf32>
    %c641 = arith.constant 641 : index
    %c0_8 = arith.constant 0 : index
    %15 = vector.load %arg2[%c641, %c0_8] : memref<648x168xf32, #tpu.memory_space<vmem>>, vector<1x168xf32>
    %cst_9 = arith.constant 1.000000e+00 : f32
    %16 = vector.broadcast %cst_9 : f32 to vector<1x112xf32>
    %cst_10 = arith.constant dense<0.000000e+00> : vector<1x168xf32>
    %17 = tpu.matmul %16, %11, %cst_10 {dimension_numbers = #tpu.dot_dimension_numbers<[1], [0], [0], [1], [0, 0, 1, 1], [], []>} : vector<1x112xf32>, vector<112x168xf32>, vector<1x168xf32> -> vector<1x168xf32>
    %18 = arith.mulf %11, %11 : vector<112x168xf32>
    %cst_11 = arith.constant dense<0.000000e+00> : vector<1x168xf32>
    %19 = tpu.matmul %16, %18, %cst_11 {dimension_numbers = #tpu.dot_dimension_numbers<[1], [0], [0], [1], [0, 0, 1, 1], [], []>} : vector<1x112xf32>, vector<112x168xf32>, vector<1x168xf32> -> vector<1x168xf32>
    %20 = tpu.concatenate %17, %19 in 0 : vector<1x168xf32>, vector<1x168xf32> -> vector<2x168xf32>
    %cst_12 = arith.constant dense<0.000000e+00> : vector<2x6xf32>
    %21 = tpu.matmul %20, %12, %cst_12 {dimension_numbers = #tpu.dot_dimension_numbers<[1], [0], [0], [1], [0, 0, 1, 1], [], []>} : vector<2x168xf32>, vector<168x6xf32>, vector<2x6xf32> -> vector<2x6xf32>
    %cst_13 = arith.constant 3.18877544E-4 : f32
    %22 = vector.broadcast %cst_13 : f32 to vector<2x6xf32>
    %23 = arith.mulf %21, %22 : vector<2x6xf32>
    %24 = vector.extract_strided_slice %23 {offsets = [0, 0], sizes = [1, 6], strides = [1, 1]} : vector<2x6xf32> to vector<1x6xf32>
    %25 = vector.extract_strided_slice %23 {offsets = [1, 0], sizes = [1, 6], strides = [1, 1]} : vector<2x6xf32> to vector<1x6xf32>
    %26 = arith.mulf %24, %24 : vector<1x6xf32>
    %27 = arith.subf %25, %26 : vector<1x6xf32>
    %cst_14 = arith.constant 9.99999974E-6 : f32
    %28 = vector.broadcast %cst_14 : f32 to vector<1x6xf32>
    %29 = arith.addf %27, %28 : vector<1x6xf32>
    %30 = math.rsqrt %29 : vector<1x6xf32>
    %31 = arith.mulf %14, %30 : vector<1x6xf32>
    %32 = arith.mulf %24, %31 : vector<1x6xf32>
    %33 = tpu.concatenate %31, %32 in 0 : vector<1x6xf32>, vector<1x6xf32> -> vector<2x6xf32>
    %cst_15 = arith.constant dense<0.000000e+00> : vector<2x168xf32>
    %34 = tpu.matmul %33, %13, %cst_15 {dimension_numbers = #tpu.dot_dimension_numbers<[1], [0], [0], [1], [0, 0, 1, 1], [], []>} : vector<2x6xf32>, vector<6x168xf32>, vector<2x168xf32> -> vector<2x168xf32>
    %35 = vector.extract_strided_slice %34 {offsets = [0, 0], sizes = [1, 168], strides = [1, 1]} : vector<2x168xf32> to vector<1x168xf32>
    %36 = vector.broadcast %35 : vector<1x168xf32> to vector<112x168xf32>
    %37 = arith.mulf %11, %36 : vector<112x168xf32>
    %38 = vector.extract_strided_slice %34 {offsets = [1, 0], sizes = [1, 168], strides = [1, 1]} : vector<2x168xf32> to vector<1x168xf32>
    %39 = arith.subf %15, %38 : vector<1x168xf32>
    %40 = vector.broadcast %39 : vector<1x168xf32> to vector<112x168xf32>
    %41 = arith.addf %37, %40 : vector<112x168xf32>
    %cst_16 = arith.constant 0.000000e+00 : f32
    %42 = vector.broadcast %cst_16 : f32 to vector<112x168xf32>
    %43 = arith.maximumf %41, %42 : vector<112x168xf32>
    %c352 = arith.constant 352 : index
    %c0_17 = arith.constant 0 : index
    %44 = vector.load %arg2[%c352, %c0_17] : memref<648x168xf32, #tpu.memory_space<vmem>>, vector<56x112xf32>
    %cst_18 = arith.constant dense<0.000000e+00> : vector<56x168xf32>
    %45 = tpu.matmul %44, %43, %cst_18 {dimension_numbers = #tpu.dot_dimension_numbers<[1], [0], [0], [1], [0, 0, 1, 1], [], []>} : vector<56x112xf32>, vector<112x168xf32>, vector<56x168xf32> -> vector<56x168xf32>
    %c640_19 = arith.constant 640 : index
    %c0_20 = arith.constant 0 : index
    %46 = vector.load %arg1[%c640_19, %c0_20] : memref<3200x168xbf16, #tpu.memory_space<vmem>>, vector<1280x160xbf16>
    %cst_21 = arith.constant 0.000000e+00 : f32
    %47 = vector.broadcast %cst_21 : f32 to vector<56x88xf32>
    %48 = tpu.concatenate %45, %47 in 1 : vector<56x168xf32>, vector<56x88xf32> -> vector<56x256xf32>
    %49 = vector.extract_strided_slice %48 {offsets = [0, 0], sizes = [40, 256], strides = [1, 1]} : vector<56x256xf32> to vector<40x256xf32>
    %50 = vector.extract_strided_slice %48 {offsets = [4, 0], sizes = [40, 256], strides = [1, 1]} : vector<56x256xf32> to vector<40x256xf32>
    %51 = vector.extract_strided_slice %48 {offsets = [8, 0], sizes = [40, 256], strides = [1, 1]} : vector<56x256xf32> to vector<40x256xf32>
    %52 = vector.extract_strided_slice %48 {offsets = [12, 0], sizes = [40, 256], strides = [1, 1]} : vector<56x256xf32> to vector<40x256xf32>
    %53 = vector.extract_strided_slice %48 {offsets = [16, 0], sizes = [40, 256], strides = [1, 1]} : vector<56x256xf32> to vector<40x256xf32>
    %54 = tpu.concatenate %49, %50, %51, %52, %53 in 1 : vector<40x256xf32>, vector<40x256xf32>, vector<40x256xf32>, vector<40x256xf32>, vector<40x256xf32> -> vector<40x1280xf32>
    %55 = arith.truncf %54 : vector<40x1280xf32> to vector<40x1280xbf16>
    %cst_22 = arith.constant dense<0.000000e+00> : vector<40x160xf32>
    %56 = tpu.matmul %55, %46, %cst_22 {dimension_numbers = #tpu.dot_dimension_numbers<[1], [0], [0], [1], [0, 0, 1, 1], [], []>} : vector<40x1280xbf16>, vector<1280x160xbf16>, vector<40x160xf32> -> vector<40x160xf32>
    %c176 = arith.constant 176 : index
    %c0_23 = arith.constant 0 : index
    %57 = vector.load %arg2[%c176, %c0_23] : memref<648x168xf32, #tpu.memory_space<vmem>>, vector<160x16xf32>
    %c336 = arith.constant 336 : index
    %c0_24 = arith.constant 0 : index
    %58 = vector.load %arg2[%c336, %c0_24] : memref<648x168xf32, #tpu.memory_space<vmem>>, vector<16x160xf32>
    %c642 = arith.constant 642 : index
    %c0_25 = arith.constant 0 : index
    %59 = vector.load %arg2[%c642, %c0_25] : memref<648x168xf32, #tpu.memory_space<vmem>>, vector<1x16xf32>
    %c643 = arith.constant 643 : index
    %c0_26 = arith.constant 0 : index
    %60 = vector.load %arg2[%c643, %c0_26] : memref<648x168xf32, #tpu.memory_space<vmem>>, vector<1x160xf32>
    %cst_27 = arith.constant 1.000000e+00 : f32
    %61 = vector.broadcast %cst_27 : f32 to vector<1x40xf32>
    %cst_28 = arith.constant dense<0.000000e+00> : vector<1x160xf32>
    %62 = tpu.matmul %61, %56, %cst_28 {dimension_numbers = #tpu.dot_dimension_numbers<[1], [0], [0], [1], [0, 0, 1, 1], [], []>} : vector<1x40xf32>, vector<40x160xf32>, vector<1x160xf32> -> vector<1x160xf32>
    %63 = arith.mulf %56, %56 : vector<40x160xf32>
    %cst_29 = arith.constant dense<0.000000e+00> : vector<1x160xf32>
    %64 = tpu.matmul %61, %63, %cst_29 {dimension_numbers = #tpu.dot_dimension_numbers<[1], [0], [0], [1], [0, 0, 1, 1], [], []>} : vector<1x40xf32>, vector<40x160xf32>, vector<1x160xf32> -> vector<1x160xf32>
    %65 = tpu.concatenate %62, %64 in 0 : vector<1x160xf32>, vector<1x160xf32> -> vector<2x160xf32>
    %cst_30 = arith.constant dense<0.000000e+00> : vector<2x16xf32>
    %66 = tpu.matmul %65, %57, %cst_30 {dimension_numbers = #tpu.dot_dimension_numbers<[1], [0], [0], [1], [0, 0, 1, 1], [], []>} : vector<2x160xf32>, vector<160x16xf32>, vector<2x16xf32> -> vector<2x16xf32>
    %cst_31 = arith.constant 2.500000e-03 : f32
    %67 = vector.broadcast %cst_31 : f32 to vector<2x16xf32>
    %68 = arith.mulf %66, %67 : vector<2x16xf32>
    %69 = vector.extract_strided_slice %68 {offsets = [0, 0], sizes = [1, 16], strides = [1, 1]} : vector<2x16xf32> to vector<1x16xf32>
    %70 = vector.extract_strided_slice %68 {offsets = [1, 0], sizes = [1, 16], strides = [1, 1]} : vector<2x16xf32> to vector<1x16xf32>
    %71 = arith.mulf %69, %69 : vector<1x16xf32>
    %72 = arith.subf %70, %71 : vector<1x16xf32>
    %cst_32 = arith.constant 9.99999974E-6 : f32
    %73 = vector.broadcast %cst_32 : f32 to vector<1x16xf32>
    %74 = arith.addf %72, %73 : vector<1x16xf32>
    %75 = math.rsqrt %74 : vector<1x16xf32>
    %76 = arith.mulf %59, %75 : vector<1x16xf32>
    %77 = arith.mulf %69, %76 : vector<1x16xf32>
    %78 = tpu.concatenate %76, %77 in 0 : vector<1x16xf32>, vector<1x16xf32> -> vector<2x16xf32>
    %cst_33 = arith.constant dense<0.000000e+00> : vector<2x160xf32>
    %79 = tpu.matmul %78, %58, %cst_33 {dimension_numbers = #tpu.dot_dimension_numbers<[1], [0], [0], [1], [0, 0, 1, 1], [], []>} : vector<2x16xf32>, vector<16x160xf32>, vector<2x160xf32> -> vector<2x160xf32>
    %80 = vector.extract_strided_slice %79 {offsets = [0, 0], sizes = [1, 160], strides = [1, 1]} : vector<2x160xf32> to vector<1x160xf32>
    %81 = vector.broadcast %80 : vector<1x160xf32> to vector<40x160xf32>
    %82 = arith.mulf %56, %81 : vector<40x160xf32>
    %83 = vector.extract_strided_slice %79 {offsets = [1, 0], sizes = [1, 160], strides = [1, 1]} : vector<2x160xf32> to vector<1x160xf32>
    %84 = arith.subf %60, %83 : vector<1x160xf32>
    %85 = vector.broadcast %84 : vector<1x160xf32> to vector<40x160xf32>
    %86 = arith.addf %82, %85 : vector<40x160xf32>
    %cst_34 = arith.constant 0.000000e+00 : f32
    %87 = vector.broadcast %cst_34 : f32 to vector<40x160xf32>
    %88 = arith.maximumf %86, %87 : vector<40x160xf32>
    %c408 = arith.constant 408 : index
    %c0_35 = arith.constant 0 : index
    %89 = vector.load %arg2[%c408, %c0_35] : memref<648x168xf32, #tpu.memory_space<vmem>>, vector<20x40xf32>
    %cst_36 = arith.constant dense<0.000000e+00> : vector<20x160xf32>
    %90 = tpu.matmul %89, %88, %cst_36 {dimension_numbers = #tpu.dot_dimension_numbers<[1], [0], [0], [1], [0, 0, 1, 1], [], []>} : vector<20x40xf32>, vector<40x160xf32>, vector<20x160xf32> -> vector<20x160xf32>
    %c1920 = arith.constant 1920 : index
    %c0_37 = arith.constant 0 : index
    %91 = vector.load %arg1[%c1920, %c0_37] : memref<3200x168xbf16, #tpu.memory_space<vmem>>, vector<1280x120xbf16>
    %cst_38 = arith.constant 0.000000e+00 : f32
    %92 = vector.broadcast %cst_38 : f32 to vector<20x96xf32>
    %93 = tpu.concatenate %90, %92 in 1 : vector<20x160xf32>, vector<20x96xf32> -> vector<20x256xf32>
    %94 = vector.extract_strided_slice %93 {offsets = [0, 0], sizes = [4, 256], strides = [1, 1]} : vector<20x256xf32> to vector<4x256xf32>
    %95 = vector.extract_strided_slice %93 {offsets = [4, 0], sizes = [4, 256], strides = [1, 1]} : vector<20x256xf32> to vector<4x256xf32>
    %96 = vector.extract_strided_slice %93 {offsets = [8, 0], sizes = [4, 256], strides = [1, 1]} : vector<20x256xf32> to vector<4x256xf32>
    %97 = vector.extract_strided_slice %93 {offsets = [12, 0], sizes = [4, 256], strides = [1, 1]} : vector<20x256xf32> to vector<4x256xf32>
    %98 = vector.extract_strided_slice %93 {offsets = [16, 0], sizes = [4, 256], strides = [1, 1]} : vector<20x256xf32> to vector<4x256xf32>
    %99 = tpu.concatenate %94, %95, %96, %97, %98 in 1 : vector<4x256xf32>, vector<4x256xf32>, vector<4x256xf32>, vector<4x256xf32>, vector<4x256xf32> -> vector<4x1280xf32>
    %100 = arith.truncf %99 : vector<4x1280xf32> to vector<4x1280xbf16>
    %cst_39 = arith.constant dense<0.000000e+00> : vector<4x120xf32>
    %101 = tpu.matmul %100, %91, %cst_39 {dimension_numbers = #tpu.dot_dimension_numbers<[1], [0], [0], [1], [0, 0, 1, 1], [], []>} : vector<4x1280xbf16>, vector<1280x120xbf16>, vector<4x120xf32> -> vector<4x120xf32>
    %cst_40 = arith.constant 1.000000e+00 : f32
    %102 = vector.broadcast %cst_40 : f32 to vector<1x4xf32>
    %cst_41 = arith.constant dense<0.000000e+00> : vector<1x120xf32>
    %103 = tpu.matmul %102, %101, %cst_41 {dimension_numbers = #tpu.dot_dimension_numbers<[1], [0], [0], [1], [0, 0, 1, 1], [], []>} : vector<1x4xf32>, vector<4x120xf32>, vector<1x120xf32> -> vector<1x120xf32>
    %cst_42 = arith.constant 2.500000e-01 : f32
    %104 = vector.broadcast %cst_42 : f32 to vector<1x120xf32>
    %105 = arith.mulf %103, %104 : vector<1x120xf32>
    %106 = arith.mulf %101, %101 : vector<4x120xf32>
    %cst_43 = arith.constant dense<0.000000e+00> : vector<1x120xf32>
    %107 = tpu.matmul %102, %106, %cst_43 {dimension_numbers = #tpu.dot_dimension_numbers<[1], [0], [0], [1], [0, 0, 1, 1], [], []>} : vector<1x4xf32>, vector<4x120xf32>, vector<1x120xf32> -> vector<1x120xf32>
    %cst_44 = arith.constant 2.500000e-01 : f32
    %108 = vector.broadcast %cst_44 : f32 to vector<1x120xf32>
    %109 = arith.mulf %107, %108 : vector<1x120xf32>
    %c644 = arith.constant 644 : index
    %c0_45 = arith.constant 0 : index
    %110 = vector.load %arg2[%c644, %c0_45] : memref<648x168xf32, #tpu.memory_space<vmem>>, vector<1x120xf32>
    %111 = arith.mulf %105, %105 : vector<1x120xf32>
    %112 = arith.subf %109, %111 : vector<1x120xf32>
    %cst_46 = arith.constant 9.99999974E-6 : f32
    %113 = vector.broadcast %cst_46 : f32 to vector<1x120xf32>
    %114 = arith.addf %112, %113 : vector<1x120xf32>
    %115 = math.rsqrt %114 : vector<1x120xf32>
    %116 = arith.mulf %110, %115 : vector<1x120xf32>
    %117 = vector.broadcast %105 : vector<1x120xf32> to vector<4x120xf32>
    %118 = arith.subf %101, %117 : vector<4x120xf32>
    %119 = vector.broadcast %116 : vector<1x120xf32> to vector<4x120xf32>
    %120 = arith.mulf %118, %119 : vector<4x120xf32>
    %c645 = arith.constant 645 : index
    %c0_47 = arith.constant 0 : index
    %121 = vector.load %arg2[%c645, %c0_47] : memref<648x168xf32, #tpu.memory_space<vmem>>, vector<1x120xf32>
    %122 = vector.broadcast %121 : vector<1x120xf32> to vector<4x120xf32>
    %123 = arith.addf %120, %122 : vector<4x120xf32>
    %cst_48 = arith.constant 0.000000e+00 : f32
    %124 = vector.broadcast %cst_48 : f32 to vector<4x120xf32>
    %125 = arith.maximumf %123, %124 : vector<4x120xf32>
    %c432 = arith.constant 432 : index
    %c0_49 = arith.constant 0 : index
    %126 = vector.load %arg2[%c432, %c0_49] : memref<648x168xf32, #tpu.memory_space<vmem>>, vector<120x84xf32>
    %cst_50 = arith.constant dense<0.000000e+00> : vector<4x84xf32>
    %127 = tpu.matmul %125, %126, %cst_50 {dimension_numbers = #tpu.dot_dimension_numbers<[1], [0], [0], [1], [0, 0, 1, 1], [], []>} : vector<4x120xf32>, vector<120x84xf32>, vector<4x84xf32> -> vector<4x84xf32>
    %c646 = arith.constant 646 : index
    %c0_51 = arith.constant 0 : index
    %128 = vector.load %arg2[%c646, %c0_51] : memref<648x168xf32, #tpu.memory_space<vmem>>, vector<1x84xf32>
    %129 = vector.broadcast %128 : vector<1x84xf32> to vector<4x84xf32>
    %130 = arith.addf %127, %129 : vector<4x84xf32>
    %cst_52 = arith.constant 0.000000e+00 : f32
    %131 = vector.broadcast %cst_52 : f32 to vector<4x84xf32>
    %132 = arith.maximumf %130, %131 : vector<4x84xf32>
    %c552 = arith.constant 552 : index
    %c0_53 = arith.constant 0 : index
    %133 = vector.load %arg2[%c552, %c0_53] : memref<648x168xf32, #tpu.memory_space<vmem>>, vector<84x10xf32>
    %cst_54 = arith.constant dense<0.000000e+00> : vector<4x10xf32>
    %134 = tpu.matmul %132, %133, %cst_54 {dimension_numbers = #tpu.dot_dimension_numbers<[1], [0], [0], [1], [0, 0, 1, 1], [], []>} : vector<4x84xf32>, vector<84x10xf32>, vector<4x10xf32> -> vector<4x10xf32>
    %c647 = arith.constant 647 : index
    %c0_55 = arith.constant 0 : index
    %135 = vector.load %arg2[%c647, %c0_55] : memref<648x168xf32, #tpu.memory_space<vmem>>, vector<1x10xf32>
    %136 = vector.broadcast %135 : vector<1x10xf32> to vector<4x10xf32>
    %137 = arith.addf %134, %136 : vector<4x10xf32>
    %c0_56 = arith.constant 0 : index
    %c0_57 = arith.constant 0 : index
    %138 = vector.load %arg3[%c0_56, %c0_57] : memref<4x10xf32, #tpu.memory_space<vmem>>, vector<4x10xf32>
    tpu.vector_store %arg3[%c0_56, %c0_57], %137 {strides = array<i32>} : memref<4x10xf32, #tpu.memory_space<vmem>>, vector<4x10xf32>,
    return
  }
}

</mosaic_0001>

<llo_original>
// kernel: lenet5_forward.1
$region0: #{lenet5_forward.1}
  #allocation0 [shape = 'u32[]', space=smem, size = 0x4, offset = 0x4, fixed_abs, tag = 'smem constant byte address 0x4 - core index']
  #allocation1 [shape = 'u32[72,128]{1,0:T(1,128)}', space=vmem, size = 0x9000, scoped, tag = 'internal scratch']
  %s0 = inlined_call_operand.vmem [shape: f32[128,96], index: 0, kind: input, shape index: {}]
  %s1 = inlined_call_operand.vmem [shape: bf16[3200,168], index: 1, kind: input, shape index: {}]
  %s2 = inlined_call_operand.vmem [shape: f32[648,168], index: 2, kind: input, shape index: {}]
  %s3 = inlined_call_operand.hbm [shape: f32[4,10], index: 3, kind: output, shape index: {}]
  %s4 = sld [smem:[#allocation0]]
  $region22: #{lenet5_forward.1} parent=0
    _
  %s6 = ssub.s32 1, %s4
  %s7 = scalar_select 0, %s6, %s4
  $region1: #{lenet5_forward.1} parent=0
    #allocation2 [shape = 'u8[2048]{0}', space=vmem, size = 0x800, scoped, tag = 'output window, operand 0, single buffered']
    #allocation3 [shape = 's32[1]{0}', space=sflag, size = 0x4, scoped, tag = 'scoped memory for lenet5_forward.1']
    %8 = vsyncpa [#allocation3], 0
    // Predicated region
    $region2: #{lenet5_forward.1} parent=1 // pred_check
      _
    $region3: #{lenet5_forward.1} parent=1 // pred_check_branch
      %10 = sbr.rel (0) target = $region5
    $region4: #{lenet5_forward.1} parent=1 // pred_region
      _
    $region5: #{lenet5_forward.1} parent=1 // pred_fallthru
      _
    // Predicated region
    $region6: #{lenet5_forward.1} parent=1 // pred_check
      _
    $region7: #{lenet5_forward.1} parent=1 // pred_check_branch
      %12 = sbr.rel (0) target = $region9
    $region8: #{lenet5_forward.1} parent=1 // pred_region
      _
    $region9: #{lenet5_forward.1} parent=1 // pred_fallthru
      _
    // Predicated region
    $region10: #{lenet5_forward.1} parent=1 // pred_check
      _
    $region11: #{lenet5_forward.1} parent=1 // pred_check_branch
      %14 = sbr.rel (0) target = $region13
    $region12: #{lenet5_forward.1} parent=1 // pred_region
      _
    $region13: #{lenet5_forward.1} parent=1 // pred_fallthru
      _
    %v15 = vld [vmem:[%s0] sm:$0xff]
    %v16 = vld [vmem:[%s0 + $0x8] sm:$0xff]
    %v17 = vld [vmem:[%s0 + $0x10] sm:$0xff]
    %v18 = vld [vmem:[%s0 + $0x18] sm:$0xff]
    %v19 = vld [vmem:[%s0 + $0x20] sm:$0xff]
    %v20 = vld [vmem:[%s0 + $0x28] sm:$0xff]
    %v21 = vld [vmem:[%s0 + $0x30] sm:$0xff]
    %v22 = vld [vmem:[%s0 + $0x38] sm:$0xff]
    %v23 = vld [vmem:[%s0 + $0x40] sm:$0xff]
    %v24 = vld [vmem:[%s0 + $0x48] sm:$0xff]
    %v25 = vld [vmem:[%s0 + $0x50] sm:$0xff]
    %v26 = vld [vmem:[%s0 + $0x58] sm:$0xff]
    %v27 = vld [vmem:[%s0 + $0x60] sm:$0xff]
    %v28 = vld [vmem:[%s0 + $0x68] sm:$0xff]
    %v29 = vld [vmem:[%s0 + $0x70] sm:$0xff]
    %v30 = vld [vmem:[%s0 + $0x78] sm:$0xff]
    %v31 = vld [vmem:[%s1] sm:$0xff]
    %v32 = vld [vmem:[%s1 + $0x8] sm:$0xff]
    %v33 = vld [vmem:[%s1 + $0x10] sm:$0xff]
    %v34 = vld [vmem:[%s1 + $0x18] sm:$0xff]
    %v35 = vld [vmem:[%s1 + $0x20] sm:$0xff]
    %v36 = vld [vmem:[%s1 + $0x28] sm:$0xff]
    %v37 = vld [vmem:[%s1 + $0x30] sm:$0xff]
    %v38 = vld [vmem:[%s1 + $0x38] sm:$0xff]
    %v39 = vld [vmem:[%s1 + $0x40] sm:$0xff]
    %v40 = vld [vmem:[%s1 + $0x48] sm:$0xff]
    %v41 = vld [vmem:[%s1 + $0x50] sm:$0xff]
    %v42 = vld [vmem:[%s1 + $0x58] sm:$0xff]
    %v43 = vld [vmem:[%s1 + $0x60] sm:$0xff]
    %v44 = vld [vmem:[%s1 + $0x68] sm:$0xff]
    %v45 = vld [vmem:[%s1 + $0x70] sm:$0xff]
    %v46 = vld [vmem:[%s1 + $0x78] sm:$0xff]
    %v47 = vld [vmem:[%s1 + $0x80] sm:$0xff]
    %v48 = vld [vmem:[%s1 + $0x88] sm:$0xff]
    %v49 = vld [vmem:[%s1 + $0x90] sm:$0xff]
    %v50 = vld [vmem:[%s1 + $0x98] sm:$0xff]
    %v51 = vld [vmem:[%s1 + $0xa0] sm:$0xff]
    %v52 = vld [vmem:[%s1 + $0xa8] sm:$0xff]
    %v53 = vld [vmem:[%s1 + $0xb0] sm:$0xff]
    %v54 = vld [vmem:[%s1 + $0xb8] sm:$0xff]
    %v55 = vld [vmem:[%s1 + $0xc0] sm:$0xff]
    %v56 = vld [vmem:[%s1 + $0xc8] sm:$0xff]
    %v57 = vld [vmem:[%s1 + $0xd0] sm:$0xff]
    %v58 = vld [vmem:[%s1 + $0xd8] sm:$0xff]
    %v59 = vld [vmem:[%s1 + $0xe0] sm:$0xff]
    %v60 = vld [vmem:[%s1 + $0xe8] sm:$0xff]
    %v61 = vld [vmem:[%s1 + $0xf0] sm:$0xff]
    %v62 = vld [vmem:[%s1 + $0xf8] sm:$0xff]
    %v63 = vld [vmem:[%s1 + $0x100] sm:$0xff]
    %v64 = vld [vmem:[%s1 + $0x108] sm:$0xff]
    %v65 = vld [vmem:[%s1 + $0x110] sm:$0xff]
    %v66 = vld [vmem:[%s1 + $0x118] sm:$0xff]
    %v67 = vld [vmem:[%s1 + $0x120] sm:$0xff]
    %v68 = vld [vmem:[%s1 + $0x128] sm:$0xff]
    %v69 = vld [vmem:[%s1 + $0x130] sm:$0xff]
    %v70 = vld [vmem:[%s1 + $0x138] sm:$0xff]
    %v71 = vld [vmem:[%s1 + $0x140] sm:$0xff]
    %v72 = vld [vmem:[%s1 + $0x148] sm:$0xff]
    %v73 = vld [vmem:[%s1 + $0x150] sm:$0xff]
    %v74 = vld [vmem:[%s1 + $0x158] sm:$0xff]
    %v75 = vld [vmem:[%s1 + $0x160] sm:$0xff]
    %v76 = vld [vmem:[%s1 + $0x168] sm:$0xff]
    %v77 = vld [vmem:[%s1 + $0x170] sm:$0xff]
    %v78 = vld [vmem:[%s1 + $0x178] sm:$0xff]
    %v79 = vld [vmem:[%s1 + $0x180] sm:$0xff]
    %v80 = vld [vmem:[%s1 + $0x188] sm:$0xff]
    %v81 = vld [vmem:[%s1 + $0x190] sm:$0xff]
    %v82 = vld [vmem:[%s1 + $0x198] sm:$0xff]
    %v83 = vld [vmem:[%s1 + $0x1a0] sm:$0xff]
    %v84 = vld [vmem:[%s1 + $0x1a8] sm:$0xff]
    %v85 = vld [vmem:[%s1 + $0x1b0] sm:$0xff]
    %v86 = vld [vmem:[%s1 + $0x1b8] sm:$0xff]
    %v87 = vld [vmem:[%s1 + $0x1c0] sm:$0xff]
    %v88 = vld [vmem:[%s1 + $0x1c8] sm:$0xff]
    %v89 = vld [vmem:[%s1 + $0x1d0] sm:$0xff]
    %v90 = vld [vmem:[%s1 + $0x1d8] sm:$0xff]
    %v91 = vld [vmem:[%s1 + $0x1e0] sm:$0xff]
    %v92 = vld [vmem:[%s1 + $0x1e8] sm:$0xff]
    %v93 = vld [vmem:[%s1 + $0x1f0] sm:$0xff]
    %v94 = vld [vmem:[%s1 + $0x1f8] sm:$0xff]
    %v95 = vld [vmem:[%s1 + $0x200] sm:$0xff]
    %v96 = vld [vmem:[%s1 + $0x208] sm:$0xff]
    %v97 = vld [vmem:[%s1 + $0x210] sm:$0xff]
    %v98 = vld [vmem:[%s1 + $0x218] sm:$0xff]
    %v99 = vld [vmem:[%s1 + $0x220] sm:$0xff]
    %v100 = vld [vmem:[%s1 + $0x228] sm:$0xff]
    %v101 = vld [vmem:[%s1 + $0x230] sm:$0xff]
    %v102 = vld [vmem:[%s1 + $0x238] sm:$0xff]
    %v103 = vld [vmem:[%s1 + $0x240] sm:$0xff]
    %v104 = vld [vmem:[%s1 + $0x248] sm:$0xff]
    %v105 = vld [vmem:[%s1 + $0x250] sm:$0xff]
    %v106 = vld [vmem:[%s1 + $0x258] sm:$0xff]
    %v107 = vld [vmem:[%s1 + $0x260] sm:$0xff]
    %v108 = vld [vmem:[%s1 + $0x268] sm:$0xff]
    %v109 = vld [vmem:[%s1 + $0x270] sm:$0xff]
    %v110 = vld [vmem:[%s1 + $0x278] sm:$0xff]
    %vm111 = vcmask 785408
    %v112 = vsel %vm111, %v15, 0.0
    %v113 = vsel %vm111, %v16, 0.0
    %v114 = vsel %vm111, %v17, 0.0
    %v115 = vsel %vm111, %v18, 0.0
    %v116 = vsel %vm111, %v19, 0.0
    %v117 = vsel %vm111, %v20, 0.0
    %v118 = vsel %vm111, %v21, 0.0
    %v119 = vsel %vm111, %v22, 0.0
    %v120 = vsel %vm111, %v23, 0.0
    %v121 = vsel %vm111, %v24, 0.0
    %v122 = vsel %vm111, %v25, 0.0
    %v123 = vsel %vm111, %v26, 0.0
    %v124 = vsel %vm111, %v27, 0.0
    %v125 = vsel %vm111, %v28, 0.0
    %v126 = vsel %vm111, %v29, 0.0
    %v127 = vsel %vm111, %v30, 0.0
    %vm143 = vcmask 1043456
    %v144 = vrot.slane %v112, 4
    %v145 = vrot.slane %v113, 4
    %v146 = vsel %vm143, %v144, %v145
    %v147 = vrot.slane %v114, 4
    %v148 = vsel %vm143, %v145, %v147
    %v149 = vrot.slane %v115, 4
    %v150 = vsel %vm143, %v147, %v149
    %v151 = vrot.slane %v116, 4
    %v152 = vsel %vm143, %v149, %v151
    %v153 = vrot.slane %v117, 4
    %v154 = vsel %vm143, %v151, %v153
    %v155 = vrot.slane %v118, 4
    %v156 = vsel %vm143, %v153, %v155
    %v157 = vrot.slane %v119, 4
    %v158 = vsel %vm143, %v155, %v157
    %v159 = vrot.slane %v120, 4
    %v160 = vsel %vm143, %v157, %v159
    %v161 = vrot.slane %v121, 4
    %v162 = vsel %vm143, %v159, %v161
    %v163 = vrot.slane %v122, 4
    %v164 = vsel %vm143, %v161, %v163
    %v165 = vrot.slane %v123, 4
    %v166 = vsel %vm143, %v163, %v165
    %v167 = vrot.slane %v124, 4
    %v168 = vsel %vm143, %v165, %v167
    %v169 = vrot.slane %v125, 4
    %v170 = vsel %vm143, %v167, %v169
    %v171 = vrot.slane %v126, 4
    %v172 = vsel %vm143, %v169, %v171
    %v188 = vrot.slane %v127, 4
    %v189 = vsel %vm143, %v171, %v188
    %v191 = vpack.c.bf16 %v113, %v112
    %v192 = vpack.c.bf16 %v148, %v146
    %v193 = vpack.c.bf16 %v114, %v113
    %v194 = vpack.c.bf16 %v150, %v148
    %v195 = vpack.c.bf16 %v115, %v114
    %v196 = vpack.c.bf16 %v152, %v150
    %v197 = vpack.c.bf16 %v116, %v115
    %v198 = vpack.c.bf16 %v154, %v152
    %v199 = vpack.c.bf16 %v117, %v116
    %v200 = vpack.c.bf16 %v156, %v154
    %v201 = vpack.c.bf16 %v118, %v117
    %v202 = vpack.c.bf16 %v158, %v156
    %v203 = vpack.c.bf16 %v119, %v118
    %v204 = vpack.c.bf16 %v160, %v158
    %v205 = vpack.c.bf16 %v120, %v119
    %v206 = vpack.c.bf16 %v162, %v160
    %v207 = vpack.c.bf16 %v121, %v120
    %v208 = vpack.c.bf16 %v164, %v162
    %v209 = vpack.c.bf16 %v122, %v121
    %v210 = vpack.c.bf16 %v166, %v164
    %v211 = vpack.c.bf16 %v123, %v122
    %v212 = vpack.c.bf16 %v168, %v166
    %v213 = vpack.c.bf16 %v124, %v123
    %v214 = vpack.c.bf16 %v170, %v168
    %v215 = vpack.c.bf16 %v125, %v124
    %v216 = vpack.c.bf16 %v172, %v170
    %v217 = vpack.c.bf16 %v126, %v125
    %v218 = vpack.c.bf16 %v189, %v172
    %v219 = vpack.c.bf16 %v127, %v126
    %v300 = vunpack.c.l.b16 %v31
    %v301 = vunpack.c.h.b16 %v31
    %v302 = vunpack.c.l.b16 %v32
    %v303 = vunpack.c.h.b16 %v32
    %v304 = vunpack.c.l.b16 %v33
    %v305 = vunpack.c.h.b16 %v33
    %v306 = vunpack.c.l.b16 %v34
    %v307 = vunpack.c.h.b16 %v34
    %v308 = vunpack.c.l.b16 %v35
    %v309 = vunpack.c.h.b16 %v35
    %v310 = vunpack.c.l.b16 %v36
    %v311 = vunpack.c.h.b16 %v36
    %v312 = vunpack.c.l.b16 %v37
    %v313 = vunpack.c.h.b16 %v37
    %v314 = vunpack.c.l.b16 %v38
    %v315 = vunpack.c.h.b16 %v38
    %v316 = vunpack.c.l.b16 %v39
    %v317 = vunpack.c.h.b16 %v39
    %v318 = vunpack.c.l.b16 %v40
    %v319 = vunpack.c.h.b16 %v40
    %v320 = vunpack.c.l.b16 %v41
    %v321 = vunpack.c.h.b16 %v41
    %v322 = vunpack.c.l.b16 %v42
    %v323 = vunpack.c.h.b16 %v42
    %v324 = vunpack.c.l.b16 %v43
    %v325 = vunpack.c.h.b16 %v43
    %v326 = vunpack.c.l.b16 %v44
    %v327 = vunpack.c.h.b16 %v44
    %v328 = vunpack.c.l.b16 %v45
    %v329 = vunpack.c.h.b16 %v45
    %v330 = vunpack.c.l.b16 %v46
    %v331 = vunpack.c.h.b16 %v46
    %v332 = vunpack.c.l.b16 %v47
    %v333 = vunpack.c.h.b16 %v47
    %v334 = vunpack.c.l.b16 %v48
    %v335 = vunpack.c.h.b16 %v48
    %v336 = vunpack.c.l.b16 %v49
    %v337 = vunpack.c.h.b16 %v49
    %v338 = vunpack.c.l.b16 %v50
    %v339 = vunpack.c.h.b16 %v50
    %v340 = vunpack.c.l.b16 %v51
    %v341 = vunpack.c.h.b16 %v51
    %v342 = vunpack.c.l.b16 %v52
    %v343 = vunpack.c.h.b16 %v52
    %v344 = vunpack.c.l.b16 %v53
    %v345 = vunpack.c.h.b16 %v53
    %v346 = vunpack.c.l.b16 %v54
    %v347 = vunpack.c.h.b16 %v54
    %v348 = vunpack.c.l.b16 %v55
    %v349 = vunpack.c.h.b16 %v55
    %v350 = vunpack.c.l.b16 %v56
    %v351 = vunpack.c.h.b16 %v56
    %v352 = vunpack.c.l.b16 %v57
    %v353 = vunpack.c.h.b16 %v57
    %v354 = vunpack.c.l.b16 %v58
    %v355 = vunpack.c.h.b16 %v58
    %v356 = vunpack.c.l.b16 %v59
    %v357 = vunpack.c.h.b16 %v59
    %v358 = vunpack.c.l.b16 %v60
    %v359 = vunpack.c.h.b16 %v60
    %v360 = vunpack.c.l.b16 %v61
    %v361 = vunpack.c.h.b16 %v61
    %v362 = vunpack.c.l.b16 %v62
    %v363 = vunpack.c.h.b16 %v62
    %v364 = vunpack.c.l.b16 %v63
    %v365 = vunpack.c.h.b16 %v63
    %v366 = vunpack.c.l.b16 %v64
    %v367 = vunpack.c.h.b16 %v64
    %v368 = vunpack.c.l.b16 %v65
    %v369 = vunpack.c.h.b16 %v65
    %v370 = vunpack.c.l.b16 %v66
    %v371 = vunpack.c.h.b16 %v66
    %v372 = vunpack.c.l.b16 %v67
    %v373 = vunpack.c.h.b16 %v67
    %v374 = vunpack.c.l.b16 %v68
    %v375 = vunpack.c.h.b16 %v68
    %v376 = vunpack.c.l.b16 %v69
    %v377 = vunpack.c.h.b16 %v69
    %v378 = vunpack.c.l.b16 %v70
    %v379 = vunpack.c.h.b16 %v70
    %v380 = vunpack.c.l.b16 %v71
    %v381 = vunpack.c.h.b16 %v71
    %v382 = vunpack.c.l.b16 %v72
    %v383 = vunpack.c.h.b16 %v72
    %v384 = vunpack.c.l.b16 %v73
    %v385 = vunpack.c.h.b16 %v73
    %v386 = vunpack.c.l.b16 %v74
    %v387 = vunpack.c.h.b16 %v74
    %v388 = vunpack.c.l.b16 %v75
    %v389 = vunpack.c.h.b16 %v75
    %v390 = vunpack.c.l.b16 %v76
    %v391 = vunpack.c.h.b16 %v76
    %v392 = vunpack.c.l.b16 %v77
    %v393 = vunpack.c.h.b16 %v77
    %v394 = vunpack.c.l.b16 %v78
    %v395 = vunpack.c.h.b16 %v78
    %v396 = vunpack.c.l.b16 %v79
    %v397 = vunpack.c.h.b16 %v79
    %v398 = vunpack.c.l.b16 %v80
    %v399 = vunpack.c.h.b16 %v80
    %v400 = vunpack.c.l.b16 %v81
    %v401 = vunpack.c.h.b16 %v81
    %v402 = vunpack.c.l.b16 %v82
    %v403 = vunpack.c.h.b16 %v82
    %v404 = vunpack.c.l.b16 %v83
    %v405 = vunpack.c.h.b16 %v83
    %v406 = vunpack.c.l.b16 %v84
    %v407 = vunpack.c.h.b16 %v84
    %v408 = vunpack.c.l.b16 %v85
    %v409 = vunpack.c.h.b16 %v85
    %v410 = vunpack.c.l.b16 %v86
    %v411 = vunpack.c.h.b16 %v86
    %v412 = vunpack.c.l.b16 %v87
    %v413 = vunpack.c.h.b16 %v87
    %v414 = vunpack.c.l.b16 %v88
    %v415 = vunpack.c.h.b16 %v88
    %v416 = vunpack.c.l.b16 %v89
    %v417 = vunpack.c.h.b16 %v89
    %v418 = vunpack.c.l.b16 %v90
    %v419 = vunpack.c.h.b16 %v90
    %v420 = vunpack.c.l.b16 %v91
    %v421 = vunpack.c.h.b16 %v91
    %v422 = vunpack.c.l.b16 %v92
    %v423 = vunpack.c.h.b16 %v92
    %v424 = vunpack.c.l.b16 %v93
    %v425 = vunpack.c.h.b16 %v93
    %v426 = vunpack.c.l.b16 %v94
    %v427 = vunpack.c.h.b16 %v94
    %v428 = vunpack.c.l.b16 %v95
    %v429 = vunpack.c.h.b16 %v95
    %v430 = vunpack.c.l.b16 %v96
    %v431 = vunpack.c.h.b16 %v96
    %v432 = vunpack.c.l.b16 %v97
    %v433 = vunpack.c.h.b16 %v97
    %v434 = vunpack.c.l.b16 %v98
    %v435 = vunpack.c.h.b16 %v98
    %v436 = vunpack.c.l.b16 %v99
    %v437 = vunpack.c.h.b16 %v99
    %v438 = vunpack.c.l.b16 %v100
    %v439 = vunpack.c.h.b16 %v100
    %v440 = vunpack.c.l.b16 %v101
    %v441 = vunpack.c.h.b16 %v101
    %v442 = vunpack.c.l.b16 %v102
    %v443 = vunpack.c.h.b16 %v102
    %v444 = vunpack.c.l.b16 %v103
    %v445 = vunpack.c.h.b16 %v103
    %v446 = vunpack.c.l.b16 %v104
    %v447 = vunpack.c.h.b16 %v104
    %v448 = vunpack.c.l.b16 %v105
    %v449 = vunpack.c.h.b16 %v105
    %v450 = vunpack.c.l.b16 %v106
    %v451 = vunpack.c.h.b16 %v106
    %v452 = vunpack.c.l.b16 %v107
    %v453 = vunpack.c.h.b16 %v107
    %v454 = vunpack.c.l.b16 %v108
    %v455 = vunpack.c.h.b16 %v108
    %v456 = vunpack.c.l.b16 %v109
    %v457 = vunpack.c.h.b16 %v109
    %v458 = vunpack.c.l.b16 %v110
    %v459 = vunpack.c.h.b16 %v110
    %v460 = vpack.c.b16 %v302, %v300
    %v461 = vpack.c.b16 %v303, %v301
    %v462 = vpack.c.b16 %v306, %v304
    %v463 = vpack.c.b16 %v307, %v305
    %v464 = vpack.c.b16 %v310, %v308
    %v465 = vpack.c.b16 %v311, %v309
    %v466 = vpack.c.b16 %v314, %v312
    %v467 = vpack.c.b16 %v315, %v313
    %v468 = vpack.c.b16 %v318, %v316
    %v469 = vpack.c.b16 %v319, %v317
    %v470 = vpack.c.b16 %v322, %v320
    %v471 = vpack.c.b16 %v323, %v321
    %v472 = vpack.c.b16 %v326, %v324
    %v473 = vpack.c.b16 %v327, %v325
    %v474 = vpack.c.b16 %v330, %v328
    %v475 = vpack.c.b16 %v331, %v329
    %v476 = vpack.c.b16 %v334, %v332
    %v477 = vpack.c.b16 %v335, %v333
    %v478 = vpack.c.b16 %v338, %v336
    %v479 = vpack.c.b16 %v339, %v337
    %v480 = vpack.c.b16 %v342, %v340
    %v481 = vpack.c.b16 %v343, %v341
    %v482 = vpack.c.b16 %v346, %v344
    %v483 = vpack.c.b16 %v347, %v345
    %v484 = vpack.c.b16 %v350, %v348
    %v485 = vpack.c.b16 %v351, %v349
    %v486 = vpack.c.b16 %v354, %v352
    %v487 = vpack.c.b16 %v355, %v353
    %v488 = vpack.c.b16 %v358, %v356
    %v489 = vpack.c.b16 %v359, %v357
    %v490 = vpack.c.b16 %v362, %v360
    %v491 = vpack.c.b16 %v363, %v361
    %v492 = vpack.c.b16 %v366, %v364
    %v493 = vpack.c.b16 %v367, %v365
    %v494 = vpack.c.b16 %v370, %v368
    %v495 = vpack.c.b16 %v371, %v369
    %v496 = vpack.c.b16 %v374, %v372
    %v497 = vpack.c.b16 %v375, %v373
    %v498 = vpack.c.b16 %v378, %v376
    %v499 = vpack.c.b16 %v379, %v377
    %v500 = vpack.c.b16 %v382, %v380
    %v501 = vpack.c.b16 %v383, %v381
    %v502 = vpack.c.b16 %v386, %v384
    %v503 = vpack.c.b16 %v387, %v385
    %v504 = vpack.c.b16 %v390, %v388
    %v505 = vpack.c.b16 %v391, %v389
    %v506 = vpack.c.b16 %v394, %v392
    %v507 = vpack.c.b16 %v395, %v393
    %v508 = vpack.c.b16 %v398, %v396
    %v509 = vpack.c.b16 %v399, %v397
    %v510 = vpack.c.b16 %v402, %v400
    %v511 = vpack.c.b16 %v403, %v401
    %v512 = vpack.c.b16 %v406, %v404
    %v513 = vpack.c.b16 %v407, %v405
    %v514 = vpack.c.b16 %v410, %v408
    %v515 = vpack.c.b16 %v411, %v409
    %v516 = vpack.c.b16 %v414, %v412
    %v517 = vpack.c.b16 %v415, %v413
    %v518 = vpack.c.b16 %v418, %v416
    %v519 = vpack.c.b16 %v419, %v417
    %v520 = vpack.c.b16 %v422, %v420
    %v521 = vpack.c.b16 %v423, %v421
    %v522 = vpack.c.b16 %v426, %v424
    %v523 = vpack.c.b16 %v427, %v425
    %v524 = vpack.c.b16 %v430, %v428
    %v525 = vpack.c.b16 %v431, %v429
    %v526 = vpack.c.b16 %v434, %v432
    %v527 = vpack.c.b16 %v435, %v433
    %v528 = vpack.c.b16 %v438, %v436
    %v529 = vpack.c.b16 %v439, %v437
    %v530 = vpack.c.b16 %v442, %v440
    %v531 = vpack.c.b16 %v443, %v441
    %v532 = vpack.c.b16 %v446, %v444
    %v533 = vpack.c.b16 %v447, %v445
    %v534 = vpack.c.b16 %v450, %v448
    %v535 = vpack.c.b16 %v451, %v449
    %v536 = vpack.c.b16 %v454, %v452
    %v537 = vpack.c.b16 %v455, %v453
    %v538 = vpack.c.b16 %v458, %v456
    %v539 = vpack.c.b16 %v459, %v457
    %620 = vmatpush.bf16.msra.mxu0 %v474
    %621 = vmatpush.bf16.msra.mxu0 %v472
    %622 = vmatpush.bf16.msra.mxu0 %v470
    %623 = vmatpush.bf16.msra.mxu0 %v468
    %624 = vmatpush.bf16.msra.mxu0 %v466
    %625 = vmatpush.bf16.msra.mxu0 %v464
    %626 = vmatpush.bf16.msra.mxu0 %v462
    %627 = vmatpush.bf16.msra.mxu0 %v460
    %628 = vmatmul.bf16.gmra.mxu0 %v191
    %v629 = vpop.f32.mrf.mxu0
    %v630 = vadd.f32 0.0, %v629
    %v631 = vpop.f32.mrf.mxu0
    %v632 = vadd.f32 0.0, %v631
    %633 = vmatmul.bf16.gmra.mxu0 %v195
    %v634 = vpop.f32.mrf.mxu0
    %v635 = vadd.f32 0.0, %v634
    %v636 = vpop.f32.mrf.mxu0
    %v637 = vadd.f32 0.0, %v636
    %638 = vmatmul.bf16.gmra.mxu0 %v199
    %v639 = vpop.f32.mrf.mxu0
    %v640 = vadd.f32 0.0, %v639
    %v641 = vpop.f32.mrf.mxu0
    %v642 = vadd.f32 0.0, %v641
    %643 = vmatmul.bf16.gmra.mxu0 %v203
    %v644 = vpop.f32.mrf.mxu0
    %v645 = vadd.f32 0.0, %v644
    %v646 = vpop.f32.mrf.mxu0
    %v647 = vadd.f32 0.0, %v646
    %648 = vmatmul.bf16.gmra.mxu0 %v207
    %v649 = vpop.f32.mrf.mxu0
    %v650 = vadd.f32 0.0, %v649
    %v651 = vpop.f32.mrf.mxu0
    %v652 = vadd.f32 0.0, %v651
    %653 = vmatmul.bf16.gmra.mxu0 %v211
    %v654 = vpop.f32.mrf.mxu0
    %v655 = vadd.f32 0.0, %v654
    %v656 = vpop.f32.mrf.mxu0
    %v657 = vadd.f32 0.0, %v656
    %658 = vmatmul.bf16.gmra.mxu0 %v215
    %v659 = vpop.f32.mrf.mxu0
    %v660 = vadd.f32 0.0, %v659
    %v661 = vpop.f32.mrf.mxu0
    %v662 = vadd.f32 0.0, %v661
    %663 = vdwg.mxu0
    %664 = vmatpush.bf16.msra.mxu0 %v490
    %665 = vmatpush.bf16.msra.mxu0 %v488
    %666 = vmatpush.bf16.msra.mxu0 %v486
    %667 = vmatpush.bf16.msra.mxu0 %v484
    %668 = vmatpush.bf16.msra.mxu0 %v482
    %669 = vmatpush.bf16.msra.mxu0 %v480
    %670 = vmatpush.bf16.msra.mxu0 %v478
    %671 = vmatpush.bf16.msra.mxu0 %v476
    %672 = vmatmul.bf16.gmra.mxu0 %v192
    %v673 = vpop.f32.mrf.mxu0
    %v674 = vadd.f32 %v630, %v673
    %v675 = vpop.f32.mrf.mxu0
    %v676 = vadd.f32 %v632, %v675
    %677 = vmatmul.bf16.gmra.mxu0 %v196
    %v678 = vpop.f32.mrf.mxu0
    %v679 = vadd.f32 %v635, %v678
    %v680 = vpop.f32.mrf.mxu0
    %v681 = vadd.f32 %v637, %v680
    %682 = vmatmul.bf16.gmra.mxu0 %v200
    %v683 = vpop.f32.mrf.mxu0
    %v684 = vadd.f32 %v640, %v683
    %v685 = vpop.f32.mrf.mxu0
    %v686 = vadd.f32 %v642, %v685
    %687 = vmatmul.bf16.gmra.mxu0 %v204
    %v688 = vpop.f32.mrf.mxu0
    %v689 = vadd.f32 %v645, %v688
    %v690 = vpop.f32.mrf.mxu0
    %v691 = vadd.f32 %v647, %v690
    %692 = vmatmul.bf16.gmra.mxu0 %v208
    %v693 = vpop.f32.mrf.mxu0
    %v694 = vadd.f32 %v650, %v693
    %v695 = vpop.f32.mrf.mxu0
    %v696 = vadd.f32 %v652, %v695
    %697 = vmatmul.bf16.gmra.mxu0 %v212
    %v698 = vpop.f32.mrf.mxu0
    %v699 = vadd.f32 %v655, %v698
    %v700 = vpop.f32.mrf.mxu0
    %v701 = vadd.f32 %v657, %v700
    %702 = vmatmul.bf16.gmra.mxu0 %v216
    %v703 = vpop.f32.mrf.mxu0
    %v704 = vadd.f32 %v660, %v703
    %v705 = vpop.f32.mrf.mxu0
    %v706 = vadd.f32 %v662, %v705
    %707 = vdwg.mxu0
    %708 = vmatpush.bf16.msra.mxu0 %v506
    %709 = vmatpush.bf16.msra.mxu0 %v504
    %710 = vmatpush.bf16.msra.mxu0 %v502
    %711 = vmatpush.bf16.msra.mxu0 %v500
    %712 = vmatpush.bf16.msra.mxu0 %v498
    %713 = vmatpush.bf16.msra.mxu0 %v496
    %714 = vmatpush.bf16.msra.mxu0 %v494
    %715 = vmatpush.bf16.msra.mxu0 %v492
    %716 = vmatmul.bf16.gmra.mxu0 %v193
    %v717 = vpop.f32.mrf.mxu0
    %v718 = vadd.f32 %v674, %v717
    %v719 = vpop.f32.mrf.mxu0
    %v720 = vadd.f32 %v676, %v719
    %721 = vmatmul.bf16.gmra.mxu0 %v197
    %v722 = vpop.f32.mrf.mxu0
    %v723 = vadd.f32 %v679, %v722
    %v724 = vpop.f32.mrf.mxu0
    %v725 = vadd.f32 %v681, %v724
    %726 = vmatmul.bf16.gmra.mxu0 %v201
    %v727 = vpop.f32.mrf.mxu0
    %v728 = vadd.f32 %v684, %v727
    %v729 = vpop.f32.mrf.mxu0
    %v730 = vadd.f32 %v686, %v729
    %731 = vmatmul.bf16.gmra.mxu0 %v205
    %v732 = vpop.f32.mrf.mxu0
    %v733 = vadd.f32 %v689, %v732
    %v734 = vpop.f32.mrf.mxu0
    %v735 = vadd.f32 %v691, %v734
    %736 = vmatmul.bf16.gmra.mxu0 %v209
    %v737 = vpop.f32.mrf.mxu0
    %v738 = vadd.f32 %v694, %v737
    %v739 = vpop.f32.mrf.mxu0
    %v740 = vadd.f32 %v696, %v739
    %741 = vmatmul.bf16.gmra.mxu0 %v213
    %v742 = vpop.f32.mrf.mxu0
    %v743 = vadd.f32 %v699, %v742
    %v744 = vpop.f32.mrf.mxu0
    %v745 = vadd.f32 %v701, %v744
    %746 = vmatmul.bf16.gmra.mxu0 %v217
    %v747 = vpop.f32.mrf.mxu0
    %v748 = vadd.f32 %v704, %v747
    %v749 = vpop.f32.mrf.mxu0
    %v750 = vadd.f32 %v706, %v749
    %751 = vdwg.mxu0
    %752 = vmatpush.bf16.msra.mxu0 %v522
    %753 = vmatpush.bf16.msra.mxu0 %v520
    %754 = vmatpush.bf16.msra.mxu0 %v518
    %755 = vmatpush.bf16.msra.mxu0 %v516
    %756 = vmatpush.bf16.msra.mxu0 %v514
    %757 = vmatpush.bf16.msra.mxu0 %v512
    %758 = vmatpush.bf16.msra.mxu0 %v510
    %759 = vmatpush.bf16.msra.mxu0 %v508
    %760 = vmatmul.bf16.gmra.mxu0 %v194
    %v761 = vpop.f32.mrf.mxu0
    %v762 = vadd.f32 %v718, %v761
    %v763 = vpop.f32.mrf.mxu0
    %v764 = vadd.f32 %v720, %v763
    %765 = vmatmul.bf16.gmra.mxu0 %v198
    %v766 = vpop.f32.mrf.mxu0
    %v767 = vadd.f32 %v723, %v766
    %v768 = vpop.f32.mrf.mxu0
    %v769 = vadd.f32 %v725, %v768
    %770 = vmatmul.bf16.gmra.mxu0 %v202
    %v771 = vpop.f32.mrf.mxu0
    %v772 = vadd.f32 %v728, %v771
    %v773 = vpop.f32.mrf.mxu0
    %v774 = vadd.f32 %v730, %v773
    %775 = vmatmul.bf16.gmra.mxu0 %v206
    %v776 = vpop.f32.mrf.mxu0
    %v777 = vadd.f32 %v733, %v776
    %v778 = vpop.f32.mrf.mxu0
    %v779 = vadd.f32 %v735, %v778
    %780 = vmatmul.bf16.gmra.mxu0 %v210
    %v781 = vpop.f32.mrf.mxu0
    %v782 = vadd.f32 %v738, %v781
    %v783 = vpop.f32.mrf.mxu0
    %v784 = vadd.f32 %v740, %v783
    %785 = vmatmul.bf16.gmra.mxu0 %v214
    %v786 = vpop.f32.mrf.mxu0
    %v787 = vadd.f32 %v743, %v786
    %v788 = vpop.f32.mrf.mxu0
    %v789 = vadd.f32 %v745, %v788
    %790 = vmatmul.bf16.gmra.mxu0 %v218
    %v791 = vpop.f32.mrf.mxu0
    %v792 = vadd.f32 %v748, %v791
    %v793 = vpop.f32.mrf.mxu0
    %v794 = vadd.f32 %v750, %v793
    %795 = vdwg.mxu0
    %796 = vmatpush.bf16.msra.mxu0 %v538
    %797 = vmatpush.bf16.msra.mxu0 %v536
    %798 = vmatpush.bf16.msra.mxu0 %v534
    %799 = vmatpush.bf16.msra.mxu0 %v532
    %800 = vmatpush.bf16.msra.mxu0 %v530
    %801 = vmatpush.bf16.msra.mxu0 %v528
    %802 = vmatpush.bf16.msra.mxu0 %v526
    %803 = vmatpush.bf16.msra.mxu0 %v524
    %804 = vmatmul.bf16.gmra.mxu0 %v195
    %v805 = vpop.f32.mrf.mxu0
    %v806 = vadd.f32 %v762, %v805
    %v807 = vpop.f32.mrf.mxu0
    %v808 = vadd.f32 %v764, %v807
    %809 = vmatmul.bf16.gmra.mxu0 %v199
    %v810 = vpop.f32.mrf.mxu0
    %v811 = vadd.f32 %v767, %v810
    %v812 = vpop.f32.mrf.mxu0
    %v813 = vadd.f32 %v769, %v812
    %814 = vmatmul.bf16.gmra.mxu0 %v203
    %v815 = vpop.f32.mrf.mxu0
    %v816 = vadd.f32 %v772, %v815
    %v817 = vpop.f32.mrf.mxu0
    %v818 = vadd.f32 %v774, %v817
    %819 = vmatmul.bf16.gmra.mxu0 %v207
    %v820 = vpop.f32.mrf.mxu0
    %v821 = vadd.f32 %v777, %v820
    %v822 = vpop.f32.mrf.mxu0
    %v823 = vadd.f32 %v779, %v822
    %824 = vmatmul.bf16.gmra.mxu0 %v211
    %v825 = vpop.f32.mrf.mxu0
    %v826 = vadd.f32 %v782, %v825
    %v827 = vpop.f32.mrf.mxu0
    %v828 = vadd.f32 %v784, %v827
    %829 = vmatmul.bf16.gmra.mxu0 %v215
    %v830 = vpop.f32.mrf.mxu0
    %v831 = vadd.f32 %v787, %v830
    %v832 = vpop.f32.mrf.mxu0
    %v833 = vadd.f32 %v789, %v832
    %834 = vmatmul.bf16.gmra.mxu0 %v219
    %v835 = vpop.f32.mrf.mxu0
    %v836 = vadd.f32 %v792, %v835
    %v837 = vpop.f32.mrf.mxu0
    %v838 = vadd.f32 %v794, %v837
    %839 = vdwg.mxu0
    %840 = vmatpush.bf16.msra.mxu0 %v475
    %841 = vmatpush.bf16.msra.mxu0 %v473
    %842 = vmatpush.bf16.msra.mxu0 %v471
    %843 = vmatpush.bf16.msra.mxu0 %v469
    %844 = vmatpush.bf16.msra.mxu0 %v467
    %845 = vmatpush.bf16.msra.mxu0 %v465
    %846 = vmatpush.bf16.msra.mxu0 %v463
    %847 = vmatpush.bf16.msra.mxu0 %v461
    %848 = vmatmul.bf16.gmra.mxu0 %v191
    %v849 = vpop.f32.mrf.mxu0
    %v850 = vadd.f32 0.0, %v849
    %v851 = vpop.f32.mrf.mxu0
    %v852 = vadd.f32 0.0, %v851
    %853 = vmatmul.bf16.gmra.mxu0 %v195
    %v854 = vpop.f32.mrf.mxu0
    %v855 = vadd.f32 0.0, %v854
    %v856 = vpop.f32.mrf.mxu0
    %v857 = vadd.f32 0.0, %v856
    %858 = vmatmul.bf16.gmra.mxu0 %v199
    %v859 = vpop.f32.mrf.mxu0
    %v860 = vadd.f32 0.0, %v859
    %v861 = vpop.f32.mrf.mxu0
    %v862 = vadd.f32 0.0, %v861
    %863 = vmatmul.bf16.gmra.mxu0 %v203
    %v864 = vpop.f32.mrf.mxu0
    %v865 = vadd.f32 0.0, %v864
    %v866 = vpop.f32.mrf.mxu0
    %v867 = vadd.f32 0.0, %v866
    %868 = vmatmul.bf16.gmra.mxu0 %v207
    %v869 = vpop.f32.mrf.mxu0
    %v870 = vadd.f32 0.0, %v869
    %v871 = vpop.f32.mrf.mxu0
    %v872 = vadd.f32 0.0, %v871
    %873 = vmatmul.bf16.gmra.mxu0 %v211
    %v874 = vpop.f32.mrf.mxu0
    %v875 = vadd.f32 0.0, %v874
    %v876 = vpop.f32.mrf.mxu0
    %v877 = vadd.f32 0.0, %v876
    %878 = vmatmul.bf16.gmra.mxu0 %v215
    %v879 = vpop.f32.mrf.mxu0
    %v880 = vadd.f32 0.0, %v879
    %v881 = vpop.f32.mrf.mxu0
    %v882 = vadd.f32 0.0, %v881
    %883 = vdwg.mxu0
    %884 = vmatpush.bf16.msra.mxu0 %v491
    %885 = vmatpush.bf16.msra.mxu0 %v489
    %886 = vmatpush.bf16.msra.mxu0 %v487
    %887 = vmatpush.bf16.msra.mxu0 %v485
    %888 = vmatpush.bf16.msra.mxu0 %v483
    %889 = vmatpush.bf16.msra.mxu0 %v481
    %890 = vmatpush.bf16.msra.mxu0 %v479
    %891 = vmatpush.bf16.msra.mxu0 %v477
    %892 = vmatmul.bf16.gmra.mxu0 %v192
    %v893 = vpop.f32.mrf.mxu0
    %v894 = vadd.f32 %v850, %v893
    %v895 = vpop.f32.mrf.mxu0
    %v896 = vadd.f32 %v852, %v895
    %897 = vmatmul.bf16.gmra.mxu0 %v196
    %v898 = vpop.f32.mrf.mxu0
    %v899 = vadd.f32 %v855, %v898
    %v900 = vpop.f32.mrf.mxu0
    %v901 = vadd.f32 %v857, %v900
    %902 = vmatmul.bf16.gmra.mxu0 %v200
    %v903 = vpop.f32.mrf.mxu0
    %v904 = vadd.f32 %v860, %v903
    %v905 = vpop.f32.mrf.mxu0
    %v906 = vadd.f32 %v862, %v905
    %907 = vmatmul.bf16.gmra.mxu0 %v204
    %v908 = vpop.f32.mrf.mxu0
    %v909 = vadd.f32 %v865, %v908
    %v910 = vpop.f32.mrf.mxu0
    %v911 = vadd.f32 %v867, %v910
    %912 = vmatmul.bf16.gmra.mxu0 %v208
    %v913 = vpop.f32.mrf.mxu0
    %v914 = vadd.f32 %v870, %v913
    %v915 = vpop.f32.mrf.mxu0
    %v916 = vadd.f32 %v872, %v915
    %917 = vmatmul.bf16.gmra.mxu0 %v212
    %v918 = vpop.f32.mrf.mxu0
    %v919 = vadd.f32 %v875, %v918
    %v920 = vpop.f32.mrf.mxu0
    %v921 = vadd.f32 %v877, %v920
    %922 = vmatmul.bf16.gmra.mxu0 %v216
    %v923 = vpop.f32.mrf.mxu0
    %v924 = vadd.f32 %v880, %v923
    %v925 = vpop.f32.mrf.mxu0
    %v926 = vadd.f32 %v882, %v925
    %927 = vdwg.mxu0
    %928 = vmatpush.bf16.msra.mxu0 %v507
    %929 = vmatpush.bf16.msra.mxu0 %v505
    %930 = vmatpush.bf16.msra.mxu0 %v503
    %931 = vmatpush.bf16.msra.mxu0 %v501
    %932 = vmatpush.bf16.msra.mxu0 %v499
    %933 = vmatpush.bf16.msra.mxu0 %v497
    %934 = vmatpush.bf16.msra.mxu0 %v495
    %935 = vmatpush.bf16.msra.mxu0 %v493
    %936 = vmatmul.bf16.gmra.mxu0 %v193
    %v937 = vpop.f32.mrf.mxu0
    %v938 = vadd.f32 %v894, %v937
    %v939 = vpop.f32.mrf.mxu0
    %v940 = vadd.f32 %v896, %v939
    %941 = vmatmul.bf16.gmra.mxu0 %v197
    %v942 = vpop.f32.mrf.mxu0
    %v943 = vadd.f32 %v899, %v942
    %v944 = vpop.f32.mrf.mxu0
    %v945 = vadd.f32 %v901, %v944
    %946 = vmatmul.bf16.gmra.mxu0 %v201
    %v947 = vpop.f32.mrf.mxu0
    %v948 = vadd.f32 %v904, %v947
    %v949 = vpop.f32.mrf.mxu0
    %v950 = vadd.f32 %v906, %v949
    %951 = vmatmul.bf16.gmra.mxu0 %v205
    %v952 = vpop.f32.mrf.mxu0
    %v953 = vadd.f32 %v909, %v952
    %v954 = vpop.f32.mrf.mxu0
    %v955 = vadd.f32 %v911, %v954
    %956 = vmatmul.bf16.gmra.mxu0 %v209
    %v957 = vpop.f32.mrf.mxu0
    %v958 = vadd.f32 %v914, %v957
    %v959 = vpop.f32.mrf.mxu0
    %v960 = vadd.f32 %v916, %v959
    %961 = vmatmul.bf16.gmra.mxu0 %v213
    %v962 = vpop.f32.mrf.mxu0
    %v963 = vadd.f32 %v919, %v962
    %v964 = vpop.f32.mrf.mxu0
    %v965 = vadd.f32 %v921, %v964
    %966 = vmatmul.bf16.gmra.mxu0 %v217
    %v967 = vpop.f32.mrf.mxu0
    %v968 = vadd.f32 %v924, %v967
    %v969 = vpop.f32.mrf.mxu0
    %v970 = vadd.f32 %v926, %v969
    %971 = vdwg.mxu0
    %972 = vmatpush.bf16.msra.mxu0 %v523
    %973 = vmatpush.bf16.msra.mxu0 %v521
    %974 = vmatpush.bf16.msra.mxu0 %v519
    %975 = vmatpush.bf16.msra.mxu0 %v517
    %976 = vmatpush.bf16.msra.mxu0 %v515
    %977 = vmatpush.bf16.msra.mxu0 %v513
    %978 = vmatpush.bf16.msra.mxu0 %v511
    %979 = vmatpush.bf16.msra.mxu0 %v509
    %980 = vmatmul.bf16.gmra.mxu0 %v194
    %v981 = vpop.f32.mrf.mxu0
    %v982 = vadd.f32 %v938, %v981
    %v983 = vpop.f32.mrf.mxu0
    %v984 = vadd.f32 %v940, %v983
    %985 = vmatmul.bf16.gmra.mxu0 %v198
    %v986 = vpop.f32.mrf.mxu0
    %v987 = vadd.f32 %v943, %v986
    %v988 = vpop.f32.mrf.mxu0
    %v989 = vadd.f32 %v945, %v988
    %990 = vmatmul.bf16.gmra.mxu0 %v202
    %v991 = vpop.f32.mrf.mxu0
    %v992 = vadd.f32 %v948, %v991
    %v993 = vpop.f32.mrf.mxu0
    %v994 = vadd.f32 %v950, %v993
    %995 = vmatmul.bf16.gmra.mxu0 %v206
    %v996 = vpop.f32.mrf.mxu0
    %v997 = vadd.f32 %v953, %v996
    %v998 = vpop.f32.mrf.mxu0
    %v999 = vadd.f32 %v955, %v998
    %1000 = vmatmul.bf16.gmra.mxu0 %v210
    %v1001 = vpop.f32.mrf.mxu0
    %v1002 = vadd.f32 %v958, %v1001
    %v1003 = vpop.f32.mrf.mxu0
    %v1004 = vadd.f32 %v960, %v1003
    %1005 = vmatmul.bf16.gmra.mxu0 %v214
    %v1006 = vpop.f32.mrf.mxu0
    %v1007 = vadd.f32 %v963, %v1006
    %v1008 = vpop.f32.mrf.mxu0
    %v1009 = vadd.f32 %v965, %v1008
    %1010 = vmatmul.bf16.gmra.mxu0 %v218
    %v1011 = vpop.f32.mrf.mxu0
    %v1012 = vadd.f32 %v968, %v1011
    %v1013 = vpop.f32.mrf.mxu0
    %v1014 = vadd.f32 %v970, %v1013
    %1015 = vdwg.mxu0
    %1016 = vmatpush.bf16.msra.mxu0 %v539
    %1017 = vmatpush.bf16.msra.mxu0 %v537
    %1018 = vmatpush.bf16.msra.mxu0 %v535
    %1019 = vmatpush.bf16.msra.mxu0 %v533
    %1020 = vmatpush.bf16.msra.mxu0 %v531
    %1021 = vmatpush.bf16.msra.mxu0 %v529
    %1022 = vmatpush.bf16.msra.mxu0 %v527
    %1023 = vmatpush.bf16.msra.mxu0 %v525
    %1024 = vmatmul.bf16.gmra.mxu0 %v195
    %v1025 = vpop.f32.mrf.mxu0
    %v1026 = vadd.f32 %v982, %v1025
    %v1027 = vpop.f32.mrf.mxu0
    %v1028 = vadd.f32 %v984, %v1027
    %1029 = vmatmul.bf16.gmra.mxu0 %v199
    %v1030 = vpop.f32.mrf.mxu0
    %v1031 = vadd.f32 %v987, %v1030
    %v1032 = vpop.f32.mrf.mxu0
    %v1033 = vadd.f32 %v989, %v1032
    %1034 = vmatmul.bf16.gmra.mxu0 %v203
    %v1035 = vpop.f32.mrf.mxu0
    %v1036 = vadd.f32 %v992, %v1035
    %v1037 = vpop.f32.mrf.mxu0
    %v1038 = vadd.f32 %v994, %v1037
    %1039 = vmatmul.bf16.gmra.mxu0 %v207
    %v1040 = vpop.f32.mrf.mxu0
    %v1041 = vadd.f32 %v997, %v1040
    %v1042 = vpop.f32.mrf.mxu0
    %v1043 = vadd.f32 %v999, %v1042
    %1044 = vmatmul.bf16.gmra.mxu0 %v211
    %v1045 = vpop.f32.mrf.mxu0
    %v1046 = vadd.f32 %v1002, %v1045
    %v1047 = vpop.f32.mrf.mxu0
    %v1048 = vadd.f32 %v1004, %v1047
    %1049 = vmatmul.bf16.gmra.mxu0 %v215
    %v1050 = vpop.f32.mrf.mxu0
    %v1051 = vadd.f32 %v1007, %v1050
    %v1052 = vpop.f32.mrf.mxu0
    %v1053 = vadd.f32 %v1009, %v1052
    %1054 = vmatmul.bf16.gmra.mxu0 %v219
    %v1055 = vpop.f32.mrf.mxu0
    %v1056 = vadd.f32 %v1012, %v1055
    %v1057 = vpop.f32.mrf.mxu0
    %v1058 = vadd.f32 %v1014, %v1057
    %1059 = vdwg.mxu0
    %v1060 = vld [vmem:[%s2] sm:$0xff]
    %v1061 = vld [vmem:[%s2 + $0x10] sm:$0xff]
    %v1062 = vld [vmem:[%s2 + $0x20] sm:$0xff]
    %v1063 = vld [vmem:[%s2 + $0x30] sm:$0xff]
    %v1064 = vld [vmem:[%s2 + $0x40] sm:$0xff]
    %v1065 = vld [vmem:[%s2 + $0x50] sm:$0xff]
    %v1066 = vld [vmem:[%s2 + $0x60] sm:$0xff]
    %v1067 = vld [vmem:[%s2 + $0x70] sm:$0xff]
    %v1068 = vld [vmem:[%s2 + $0x80] sm:$0xff]
    %v1069 = vld [vmem:[%s2 + $0x90] sm:$0xff]
    %v1070 = vld [vmem:[%s2 + $0xa0] sm:$0xff]
    %v1071 = vld [vmem:[%s2 + $0xb0] sm:$0xff]
    %v1072 = vld [vmem:[%s2 + $0xc0] sm:$0xff]
    %v1073 = vld [vmem:[%s2 + $0xd0] sm:$0xff]
    %v1074 = vld [vmem:[%s2 + $0xe0] sm:$0xff]
    %v1075 = vld [vmem:[%s2 + $0xf0] sm:$0xff]
    %v1076 = vld [vmem:[%s2 + $0x100] sm:$0xff]
    %v1077 = vld [vmem:[%s2 + $0x110] sm:$0xff]
    %v1078 = vld [vmem:[%s2 + $0x120] sm:$0xff]
    %v1079 = vld [vmem:[%s2 + $0x130] sm:$0xff]
    %v1080 = vld [vmem:[%s2 + $0x140] sm:$0xff]
    %v1081 = vld [vmem:[%s2 + $0x150] sm:$0x3f]
    %v1082 = vld [vmem:[%s2 + $0x158] sm:$0x3f]
    %v1083 = vld [vmem:[%s2 + $0x500] ss:$0 sm:$0xff]
    %s1084 = scalar_lea.vmem %s2, 1281
    %v1085 = vld [vmem:[%s1084] ss:$8 sm:$0x3]
    %vm1086 = vcmask 916480
    %v1088 = vsel %vm1086, 1.0, 0
    %1090 = vmatpush.msra.mxu0 0.0
    %1091 = vmatpush.msra.mxu0 0.0
    %1092 = vmatpush.msra.mxu0 %v838
    %1093 = vmatpush.msra.mxu0 %v836
    %1094 = vmatpush.msra.mxu0 %v833
    %1095 = vmatpush.msra.mxu0 %v831
    %1096 = vmatpush.msra.mxu0 %v828
    %1097 = vmatpush.msra.mxu0 %v826
    %1098 = vmatpush.msra.mxu0 %v823
    %1099 = vmatpush.msra.mxu0 %v821
    %1100 = vmatpush.msra.mxu0 %v818
    %1101 = vmatpush.msra.mxu0 %v816
    %1102 = vmatpush.msra.mxu0 %v813
    %1103 = vmatpush.msra.mxu0 %v811
    %1104 = vmatpush.msra.mxu0 %v808
    %1105 = vmatpush.msra.mxu0 %v806
    %1106 = vmatmul.f32.gmra.mxu0 %v1088
    %v1107 = vpop.f32.mrf.mxu0
    %v1108 = vadd.f32 0.0, %v1107
    %1109 = vdwg.mxu0
    %1110 = vmatpush.msra.mxu0 0.0
    %1111 = vmatpush.msra.mxu0 0.0
    %1112 = vmatpush.msra.mxu0 %v1058
    %1113 = vmatpush.msra.mxu0 %v1056
    %1114 = vmatpush.msra.mxu0 %v1053
    %1115 = vmatpush.msra.mxu0 %v1051
    %1116 = vmatpush.msra.mxu0 %v1048
    %1117 = vmatpush.msra.mxu0 %v1046
    %1118 = vmatpush.msra.mxu0 %v1043
    %1119 = vmatpush.msra.mxu0 %v1041
    %1120 = vmatpush.msra.mxu0 %v1038
    %1121 = vmatpush.msra.mxu0 %v1036
    %1122 = vmatpush.msra.mxu0 %v1033
    %1123 = vmatpush.msra.mxu0 %v1031
    %1124 = vmatpush.msra.mxu0 %v1028
    %1125 = vmatpush.msra.mxu0 %v1026
    %1126 = vmatmul.f32.gmra.mxu0 %v1088
    %v1127 = vpop.f32.mrf.mxu0
    %v1128 = vadd.f32 0.0, %v1127
    %1129 = vdwg.mxu0
    %v1130 = vmul.f32 %v806, %v806
    %v1131 = vmul.f32 %v1026, %v1026
    %v1132 = vmul.f32 %v808, %v808
    %v1133 = vmul.f32 %v1028, %v1028
    %v1134 = vmul.f32 %v811, %v811
    %v1135 = vmul.f32 %v1031, %v1031
    %v1136 = vmul.f32 %v813, %v813
    %v1137 = vmul.f32 %v1033, %v1033
    %v1138 = vmul.f32 %v816, %v816
    %v1139 = vmul.f32 %v1036, %v1036
    %v1140 = vmul.f32 %v818, %v818
    %v1141 = vmul.f32 %v1038, %v1038
    %v1142 = vmul.f32 %v821, %v821
    %v1143 = vmul.f32 %v1041, %v1041
    %v1144 = vmul.f32 %v823, %v823
    %v1145 = vmul.f32 %v1043, %v1043
    %v1146 = vmul.f32 %v826, %v826
    %v1147 = vmul.f32 %v1046, %v1046
    %v1148 = vmul.f32 %v828, %v828
    %v1149 = vmul.f32 %v1048, %v1048
    %v1150 = vmul.f32 %v831, %v831
    %v1151 = vmul.f32 %v1051, %v1051
    %v1152 = vmul.f32 %v833, %v833
    %v1153 = vmul.f32 %v1053, %v1053
    %v1154 = vmul.f32 %v836, %v836
    %v1155 = vmul.f32 %v1056, %v1056
    %v1156 = vmul.f32 %v838, %v838
    %v1157 = vmul.f32 %v1058, %v1058
    %1158 = vmatpush.msra.mxu0 0.0
    %1159 = vmatpush.msra.mxu0 0.0
    %1160 = vmatpush.msra.mxu0 %v1156
    %1161 = vmatpush.msra.mxu0 %v1154
    %1162 = vmatpush.msra.mxu0 %v1152
    %1163 = vmatpush.msra.mxu0 %v1150
    %1164 = vmatpush.msra.mxu0 %v1148
    %1165 = vmatpush.msra.mxu0 %v1146
    %1166 = vmatpush.msra.mxu0 %v1144
    %1167 = vmatpush.msra.mxu0 %v1142
    %1168 = vmatpush.msra.mxu0 %v1140
    %1169 = vmatpush.msra.mxu0 %v1138
    %1170 = vmatpush.msra.mxu0 %v1136
    %1171 = vmatpush.msra.mxu0 %v1134
    %1172 = vmatpush.msra.mxu0 %v1132
    %1173 = vmatpush.msra.mxu0 %v1130
    %1174 = vmatmul.f32.gmra.mxu0 %v1088
    %v1175 = vpop.f32.mrf.mxu0
    %v1176 = vadd.f32 0.0, %v1175
    %1177 = vdwg.mxu0
    %1178 = vmatpush.msra.mxu0 0.0
    %1179 = vmatpush.msra.mxu0 0.0
    %1180 = vmatpush.msra.mxu0 %v1157
    %1181 = vmatpush.msra.mxu0 %v1155
    %1182 = vmatpush.msra.mxu0 %v1153
    %1183 = vmatpush.msra.mxu0 %v1151
    %1184 = vmatpush.msra.mxu0 %v1149
    %1185 = vmatpush.msra.mxu0 %v1147
    %1186 = vmatpush.msra.mxu0 %v1145
    %1187 = vmatpush.msra.mxu0 %v1143
    %1188 = vmatpush.msra.mxu0 %v1141
    %1189 = vmatpush.msra.mxu0 %v1139
    %1190 = vmatpush.msra.mxu0 %v1137
    %1191 = vmatpush.msra.mxu0 %v1135
    %1192 = vmatpush.msra.mxu0 %v1133
    %1193 = vmatpush.msra.mxu0 %v1131
    %1194 = vmatmul.f32.gmra.mxu0 %v1088
    %v1195 = vpop.f32.mrf.mxu0
    %v1196 = vadd.f32 0.0, %v1195
    %1197 = vdwg.mxu0
    %v1200 = vrot.slane %v1176, 7
    %v1201 = vrot.slane %v1196, 7
    %vm1204 = vcmask 1040384
    %v1205 = vsel %vm1204, %v1108, %v1200
    %v1206 = vsel %vm1204, %v1128, %v1201
    %vm1207 = vcmask 326656
    %v1209 = vsel %vm1207, %v1206, 0
    %1211 = vmatpush.msra.mxu0 %v1075
    %1212 = vmatpush.msra.mxu0 %v1074
    %1213 = vmatpush.msra.mxu0 %v1073
    %1214 = vmatpush.msra.mxu0 %v1072
    %1215 = vmatpush.msra.mxu0 %v1071
    %1216 = vmatpush.msra.mxu0 %v1070
    %1217 = vmatpush.msra.mxu0 %v1069
    %1218 = vmatpush.msra.mxu0 %v1068
    %1219 = vmatpush.msra.mxu0 %v1067
    %1220 = vmatpush.msra.mxu0 %v1066
    %1221 = vmatpush.msra.mxu0 %v1065
    %1222 = vmatpush.msra.mxu0 %v1064
    %1223 = vmatpush.msra.mxu0 %v1063
    %1224 = vmatpush.msra.mxu0 %v1062
    %1225 = vmatpush.msra.mxu0 %v1061
    %1226 = vmatpush.msra.mxu0 %v1060
    %1227 = vmatmul.f32.gmra.mxu0 %v1205
    %v1228 = vpop.f32.mrf.mxu0
    %v1229 = vadd.f32 0.0, %v1228
    %1230 = vdwg.mxu0
    %1231 = vmatpush.msra.mxu0 0.0
    %1232 = vmatpush.msra.mxu0 0.0
    %1233 = vmatpush.msra.mxu0 0.0
    %1234 = vmatpush.msra.mxu0 0.0
    %1235 = vmatpush.msra.mxu0 0.0
    %1236 = vmatpush.msra.mxu0 0.0
    %1237 = vmatpush.msra.mxu0 0.0
    %1238 = vmatpush.msra.mxu0 0.0
    %1239 = vmatpush.msra.mxu0 0.0
    %1240 = vmatpush.msra.mxu0 0.0
    %1241 = vmatpush.msra.mxu0 0.0
    %1242 = vmatpush.msra.mxu0 %v1080
    %1243 = vmatpush.msra.mxu0 %v1079
    %1244 = vmatpush.msra.mxu0 %v1078
    %1245 = vmatpush.msra.mxu0 %v1077
    %1246 = vmatpush.msra.mxu0 %v1076
    %1247 = vmatmul.f32.gmra.mxu0 %v1209
    %v1248 = vpop.f32.mrf.mxu0
    %v1249 = vadd.f32 %v1229, %v1248
    %1250 = vdwg.mxu0
    %v1251 = vmul.f32 %v1249, 0.00031887754
    %v1252 = vmul.f32 %v1251, %v1251
    %v1254 = vrot.slane %v1252, 7
    %v1256 = vsub.f32 %v1251, %v1254
    %v1257 = vadd.f32 %v1256, 1e-05
    %v1258 = vrsqrt.pop %v1257
    %v1259 = vmul.f32 %v1258, %v1257
    %v1260 = vmul.f32 %v1259, %v1258
    %v1261 = vmul.f32 0.5, %v1260
    %v1262 = vsub.f32 1.5, %v1261
    %v1263 = vmul.f32 %v1258, %v1262
    %vm1264 = vweird.f32 %v1257
    %vm1265 = vweird.f32 %v1258
    %vm1266 = vmor %vm1264, %vm1265
    %v1267 = vsel %vm1266, %v1258, %v1263
    %v1268 = vmul.f32 %v1083, %v1267
    %v1270 = vrot.slane %v1268, 1
    %v1272 = vmul.f32 %v1251, %v1270
    %v1274 = vrot.slane %v1272, 7
    %v1276 = vsel %vm1204, %v1270, %v1274
    %vm1277 = vcmask 48128
    %v1279 = vsel %vm1277, %v1276, 0
    %vm1281 = vcmask 1045504
    %v1283 = vsel %vm1281, %v1081, 0
    %v1286 = vsel %vm1281, %v1082, 0
    %1288 = vmatpush.msra.mxu0 0.0
    %1289 = vmatpush.msra.mxu0 0.0
    %1290 = vmatpush.msra.mxu0 0.0
    %1291 = vmatpush.msra.mxu0 0.0
    %1292 = vmatpush.msra.mxu0 0.0
    %1293 = vmatpush.msra.mxu0 0.0
    %1294 = vmatpush.msra.mxu0 0.0
    %1295 = vmatpush.msra.mxu0 0.0
    %1296 = vmatpush.msra.mxu0 0.0
    %1297 = vmatpush.msra.mxu0 0.0
    %1298 = vmatpush.msra.mxu0 0.0
    %1299 = vmatpush.msra.mxu0 0.0
    %1300 = vmatpush.msra.mxu0 0.0
    %1301 = vmatpush.msra.mxu0 0.0
    %1302 = vmatpush.msra.mxu0 0.0
    %1303 = vmatpush.msra.mxu0 %v1283
    %1304 = vmatmul.f32.gmra.mxu0 %v1279
    %v1305 = vpop.f32.mrf.mxu0
    %v1306 = vadd.f32 0.0, %v1305
    %1307 = vdwg.mxu0
    %1308 = vmatpush.msra.mxu0 0.0
    %1309 = vmatpush.msra.mxu0 0.0
    %1310 = vmatpush.msra.mxu0 0.0
    %1311 = vmatpush.msra.mxu0 0.0
    %1312 = vmatpush.msra.mxu0 0.0
    %1313 = vmatpush.msra.mxu0 0.0
    %1314 = vmatpush.msra.mxu0 0.0
    %1315 = vmatpush.msra.mxu0 0.0
    %1316 = vmatpush.msra.mxu0 0.0
    %1317 = vmatpush.msra.mxu0 0.0
    %1318 = vmatpush.msra.mxu0 0.0
    %1319 = vmatpush.msra.mxu0 0.0
    %1320 = vmatpush.msra.mxu0 0.0
    %1321 = vmatpush.msra.mxu0 0.0
    %1322 = vmatpush.msra.mxu0 0.0
    %1323 = vmatpush.msra.mxu0 %v1286
    %1324 = vmatmul.f32.gmra.mxu0 %v1279
    %v1325 = vpop.f32.mrf.mxu0
    %v1326 = vadd.f32 0.0, %v1325
    %1327 = vdwg.mxu0
    %v1328 = vperm.slane %v1306, 0
    %v1329 = vperm.slane %v1326, 0
    %v1330 = vmul.f32 %v806, %v1328
    %v1331 = vmul.f32 %v1026, %v1329
    %v1332 = vmul.f32 %v808, %v1328
    %v1333 = vmul.f32 %v1028, %v1329
    %v1334 = vmul.f32 %v811, %v1328
    %v1335 = vmul.f32 %v1031, %v1329
    %v1336 = vmul.f32 %v813, %v1328
    %v1337 = vmul.f32 %v1033, %v1329
    %v1338 = vmul.f32 %v816, %v1328
    %v1339 = vmul.f32 %v1036, %v1329
    %v1340 = vmul.f32 %v818, %v1328
    %v1341 = vmul.f32 %v1038, %v1329
    %v1342 = vmul.f32 %v821, %v1328
    %v1343 = vmul.f32 %v1041, %v1329
    %v1344 = vmul.f32 %v823, %v1328
    %v1345 = vmul.f32 %v1043, %v1329
    %v1346 = vmul.f32 %v826, %v1328
    %v1347 = vmul.f32 %v1046, %v1329
    %v1348 = vmul.f32 %v828, %v1328
    %v1349 = vmul.f32 %v1048, %v1329
    %v1350 = vmul.f32 %v831, %v1328
    %v1351 = vmul.f32 %v1051, %v1329
    %v1352 = vmul.f32 %v833, %v1328
    %v1353 = vmul.f32 %v1053, %v1329
    %v1354 = vmul.f32 %v836, %v1328
    %v1355 = vmul.f32 %v1056, %v1329
    %v1356 = vmul.f32 %v838, %v1328
    %v1357 = vmul.f32 %v1058, %v1329
    %1360 = vst [vmem:[#allocation1] sm:$0xff] %v1306
    %1361 = vst [vmem:[#allocation1 + $0x9] sm:$0xff] %v1326
    %s1362 = scalar_lea.vmem [#allocation1], 1
    %v1363 = vld [vmem:[%s1362] ss:$9 sm:$0xff]
    %v1365 = vsub.f32 %v1085, %v1363
    %v1367 = vperm.slane %v1365, 0
    %v1368 = vperm.slane %v1365, 1
    %v1371 = vadd.f32 %v1330, %v1367
    %v1372 = vadd.f32 %v1331, %v1368
    %v1373 = vadd.f32 %v1332, %v1367
    %v1374 = vadd.f32 %v1333, %v1368
    %v1375 = vadd.f32 %v1334, %v1367
    %v1376 = vadd.f32 %v1335, %v1368
    %v1377 = vadd.f32 %v1336, %v1367
    %v1378 = vadd.f32 %v1337, %v1368
    %v1379 = vadd.f32 %v1338, %v1367
    %v1380 = vadd.f32 %v1339, %v1368
    %v1381 = vadd.f32 %v1340, %v1367
    %v1382 = vadd.f32 %v1341, %v1368
    %v1383 = vadd.f32 %v1342, %v1367
    %v1384 = vadd.f32 %v1343, %v1368
    %v1385 = vadd.f32 %v1344, %v1367
    %v1386 = vadd.f32 %v1345, %v1368
    %v1387 = vadd.f32 %v1346, %v1367
    %v1388 = vadd.f32 %v1347, %v1368
    %v1389 = vadd.f32 %v1348, %v1367
    %v1390 = vadd.f32 %v1349, %v1368
    %v1391 = vadd.f32 %v1350, %v1367
    %v1392 = vadd.f32 %v1351, %v1368
    %v1393 = vadd.f32 %v1352, %v1367
    %v1394 = vadd.f32 %v1353, %v1368
    %v1395 = vadd.f32 %v1354, %v1367
    %v1396 = vadd.f32 %v1355, %v1368
    %v1397 = vadd.f32 %v1356, %v1367
    %v1398 = vadd.f32 %v1357, %v1368
    %v1399 = vmax.f32 %v1371, 0.0
    %v1400 = vmax.f32 %v1372, 0.0
    %v1401 = vmax.f32 %v1373, 0.0
    %v1402 = vmax.f32 %v1374, 0.0
    %v1403 = vmax.f32 %v1375, 0.0
    %v1404 = vmax.f32 %v1376, 0.0
    %v1405 = vmax.f32 %v1377, 0.0
    %v1406 = vmax.f32 %v1378, 0.0
    %v1407 = vmax.f32 %v1379, 0.0
    %v1408 = vmax.f32 %v1380, 0.0
    %v1409 = vmax.f32 %v1381, 0.0
    %v1410 = vmax.f32 %v1382, 0.0
    %v1411 = vmax.f32 %v1383, 0.0
    %v1412 = vmax.f32 %v1384, 0.0
    %v1413 = vmax.f32 %v1385, 0.0
    %v1414 = vmax.f32 %v1386, 0.0
    %v1415 = vmax.f32 %v1387, 0.0
    %v1416 = vmax.f32 %v1388, 0.0
    %v1417 = vmax.f32 %v1389, 0.0
    %v1418 = vmax.f32 %v1390, 0.0
    %v1419 = vmax.f32 %v1391, 0.0
    %v1420 = vmax.f32 %v1392, 0.0
    %v1421 = vmax.f32 %v1393, 0.0
    %v1422 = vmax.f32 %v1394, 0.0
    %v1423 = vmax.f32 %v1395, 0.0
    %v1424 = vmax.f32 %v1396, 0.0
    %v1425 = vmax.f32 %v1397, 0.0
    %v1426 = vmax.f32 %v1398, 0.0
    %v1427 = vld [vmem:[%s2 + $0x2c0] sm:$0xff]
    %v1428 = vld [vmem:[%s2 + $0x2d0] sm:$0xff]
    %v1429 = vld [vmem:[%s2 + $0x2e0] sm:$0xff]
    %v1430 = vld [vmem:[%s2 + $0x2f0] sm:$0xff]
    %v1431 = vld [vmem:[%s2 + $0x300] sm:$0xff]
    %v1432 = vld [vmem:[%s2 + $0x310] sm:$0xff]
    %v1433 = vld [vmem:[%s2 + $0x320] sm:$0xff]
    %v1435 = vsel %vm1086, %v1427, 0
    %v1438 = vsel %vm1086, %v1428, 0
    %v1441 = vsel %vm1086, %v1429, 0
    %v1444 = vsel %vm1086, %v1430, 0
    %v1447 = vsel %vm1086, %v1431, 0
    %v1450 = vsel %vm1086, %v1432, 0
    %v1453 = vsel %vm1086, %v1433, 0
    %1455 = vmatpush.msra.mxu0 0.0
    %1456 = vmatpush.msra.mxu0 0.0
    %1457 = vmatpush.msra.mxu0 %v1425
    %1458 = vmatpush.msra.mxu0 %v1423
    %1459 = vmatpush.msra.mxu0 %v1421
    %1460 = vmatpush.msra.mxu0 %v1419
    %1461 = vmatpush.msra.mxu0 %v1417
    %1462 = vmatpush.msra.mxu0 %v1415
    %1463 = vmatpush.msra.mxu0 %v1413
    %1464 = vmatpush.msra.mxu0 %v1411
    %1465 = vmatpush.msra.mxu0 %v1409
    %1466 = vmatpush.msra.mxu0 %v1407
    %1467 = vmatpush.msra.mxu0 %v1405
    %1468 = vmatpush.msra.mxu0 %v1403
    %1469 = vmatpush.msra.mxu0 %v1401
    %1470 = vmatpush.msra.mxu0 %v1399
    %1471 = vmatmul.f32.gmra.mxu0 %v1435
    %v1472 = vpop.f32.mrf.mxu0
    %v1473 = vadd.f32 0.0, %v1472
    %1474 = vmatmul.f32.gmra.mxu0 %v1438
    %v1475 = vpop.f32.mrf.mxu0
    %v1476 = vadd.f32 0.0, %v1475
    %1477 = vmatmul.f32.gmra.mxu0 %v1441
    %v1478 = vpop.f32.mrf.mxu0
    %v1479 = vadd.f32 0.0, %v1478
    %1480 = vmatmul.f32.gmra.mxu0 %v1444
    %v1481 = vpop.f32.mrf.mxu0
    %v1482 = vadd.f32 0.0, %v1481
    %1483 = vmatmul.f32.gmra.mxu0 %v1447
    %v1484 = vpop.f32.mrf.mxu0
    %v1485 = vadd.f32 0.0, %v1484
    %1486 = vmatmul.f32.gmra.mxu0 %v1450
    %v1487 = vpop.f32.mrf.mxu0
    %v1488 = vadd.f32 0.0, %v1487
    %1489 = vmatmul.f32.gmra.mxu0 %v1453
    %v1490 = vpop.f32.mrf.mxu0
    %v1491 = vadd.f32 0.0, %v1490
    %1492 = vdwg.mxu0
    %1493 = vmatpush.msra.mxu0 0.0
    %1494 = vmatpush.msra.mxu0 0.0
    %1495 = vmatpush.msra.mxu0 %v1426
    %1496 = vmatpush.msra.mxu0 %v1424
    %1497 = vmatpush.msra.mxu0 %v1422
    %1498 = vmatpush.msra.mxu0 %v1420
    %1499 = vmatpush.msra.mxu0 %v1418
    %1500 = vmatpush.msra.mxu0 %v1416
    %1501 = vmatpush.msra.mxu0 %v1414
    %1502 = vmatpush.msra.mxu0 %v1412
    %1503 = vmatpush.msra.mxu0 %v1410
    %1504 = vmatpush.msra.mxu0 %v1408
    %1505 = vmatpush.msra.mxu0 %v1406
    %1506 = vmatpush.msra.mxu0 %v1404
    %1507 = vmatpush.msra.mxu0 %v1402
    %1508 = vmatpush.msra.mxu0 %v1400
    %1509 = vmatmul.f32.gmra.mxu0 %v1435
    %v1510 = vpop.f32.mrf.mxu0
    %v1511 = vadd.f32 0.0, %v1510
    %1512 = vmatmul.f32.gmra.mxu0 %v1438
    %v1513 = vpop.f32.mrf.mxu0
    %v1514 = vadd.f32 0.0, %v1513
    %1515 = vmatmul.f32.gmra.mxu0 %v1441
    %v1516 = vpop.f32.mrf.mxu0
    %v1517 = vadd.f32 0.0, %v1516
    %1518 = vmatmul.f32.gmra.mxu0 %v1444
    %v1519 = vpop.f32.mrf.mxu0
    %v1520 = vadd.f32 0.0, %v1519
    %1521 = vmatmul.f32.gmra.mxu0 %v1447
    %v1522 = vpop.f32.mrf.mxu0
    %v1523 = vadd.f32 0.0, %v1522
    %1524 = vmatmul.f32.gmra.mxu0 %v1450
    %v1525 = vpop.f32.mrf.mxu0
    %v1526 = vadd.f32 0.0, %v1525
    %1527 = vmatmul.f32.gmra.mxu0 %v1453
    %v1528 = vpop.f32.mrf.mxu0
    %v1529 = vadd.f32 0.0, %v1528
    %1530 = vdwg.mxu0
    %v1531 = vld [vmem:[%s1 + $0x280] sm:$0xff]
    %v1532 = vld [vmem:[%s1 + $0x288] sm:$0xff]
    %v1533 = vld [vmem:[%s1 + $0x290] sm:$0xff]
    %v1534 = vld [vmem:[%s1 + $0x298] sm:$0xff]
    %v1535 = vld [vmem:[%s1 + $0x2a0] sm:$0xff]
    %v1536 = vld [vmem:[%s1 + $0x2a8] sm:$0xff]
    %v1537 = vld [vmem:[%s1 + $0x2b0] sm:$0xff]
    %v1538 = vld [vmem:[%s1 + $0x2b8] sm:$0xff]
    %v1539 = vld [vmem:[%s1 + $0x2c0] sm:$0xff]
    %v1540 = vld [vmem:[%s1 + $0x2c8] sm:$0xff]
    %v1541 = vld [vmem:[%s1 + $0x2d0] sm:$0xff]
    %v1542 = vld [vmem:[%s1 + $0x2d8] sm:$0xff]
    %v1543 = vld [vmem:[%s1 + $0x2e0] sm:$0xff]
    %v1544 = vld [vmem:[%s1 + $0x2e8] sm:$0xff]
    %v1545 = vld [vmem:[%s1 + $0x2f0] sm:$0xff]
    %v1546 = vld [vmem:[%s1 + $0x2f8] sm:$0xff]
    %v1547 = vld [vmem:[%s1 + $0x300] sm:$0xff]
    %v1548 = vld [vmem:[%s1 + $0x308] sm:$0xff]
    %v1549 = vld [vmem:[%s1 + $0x310] sm:$0xff]
    %v1550 = vld [vmem:[%s1 + $0x318] sm:$0xff]
    %v1551 = vld [vmem:[%s1 + $0x320] sm:$0xff]
    %v1552 = vld [vmem:[%s1 + $0x328] sm:$0xff]
    %v1553 = vld [vmem:[%s1 + $0x330] sm:$0xff]
    %v1554 = vld [vmem:[%s1 + $0x338] sm:$0xff]
    %v1555 = vld [vmem:[%s1 + $0x340] sm:$0xff]
    %v1556 = vld [vmem:[%s1 + $0x348] sm:$0xff]
    %v1557 = vld [vmem:[%s1 + $0x350] sm:$0xff]
    %v1558 = vld [vmem:[%s1 + $0x358] sm:$0xff]
    %v1559 = vld [vmem:[%s1 + $0x360] sm:$0xff]
    %v1560 = vld [vmem:[%s1 + $0x368] sm:$0xff]
    %v1561 = vld [vmem:[%s1 + $0x370] sm:$0xff]
    %v1562 = vld [vmem:[%s1 + $0x378] sm:$0xff]
    %v1563 = vld [vmem:[%s1 + $0x380] sm:$0xff]
    %v1564 = vld [vmem:[%s1 + $0x388] sm:$0xff]
    %v1565 = vld [vmem:[%s1 + $0x390] sm:$0xff]
    %v1566 = vld [vmem:[%s1 + $0x398] sm:$0xff]
    %v1567 = vld [vmem:[%s1 + $0x3a0] sm:$0xff]
    %v1568 = vld [vmem:[%s1 + $0x3a8] sm:$0xff]
    %v1569 = vld [vmem:[%s1 + $0x3b0] sm:$0xff]
    %v1570 = vld [vmem:[%s1 + $0x3b8] sm:$0xff]
    %v1571 = vld [vmem:[%s1 + $0x3c0] sm:$0xff]
    %v1572 = vld [vmem:[%s1 + $0x3c8] sm:$0xff]
    %v1573 = vld [vmem:[%s1 + $0x3d0] sm:$0xff]
    %v1574 = vld [vmem:[%s1 + $0x3d8] sm:$0xff]
    %v1575 = vld [vmem:[%s1 + $0x3e0] sm:$0xff]
    %v1576 = vld [vmem:[%s1 + $0x3e8] sm:$0xff]
    %v1577 = vld [vmem:[%s1 + $0x3f0] sm:$0xff]
    %v1578 = vld [vmem:[%s1 + $0x3f8] sm:$0xff]
    %v1579 = vld [vmem:[%s1 + $0x400] sm:$0xff]
    %v1580 = vld [vmem:[%s1 + $0x408] sm:$0xff]
    %v1581 = vld [vmem:[%s1 + $0x410] sm:$0xff]
    %v1582 = vld [vmem:[%s1 + $0x418] sm:$0xff]
    %v1583 = vld [vmem:[%s1 + $0x420] sm:$0xff]
    %v1584 = vld [vmem:[%s1 + $0x428] sm:$0xff]
    %v1585 = vld [vmem:[%s1 + $0x430] sm:$0xff]
    %v1586 = vld [vmem:[%s1 + $0x438] sm:$0xff]
    %v1587 = vld [vmem:[%s1 + $0x440] sm:$0xff]
    %v1588 = vld [vmem:[%s1 + $0x448] sm:$0xff]
    %v1589 = vld [vmem:[%s1 + $0x450] sm:$0xff]
    %v1590 = vld [vmem:[%s1 + $0x458] sm:$0xff]
    %v1591 = vld [vmem:[%s1 + $0x460] sm:$0xff]
    %v1592 = vld [vmem:[%s1 + $0x468] sm:$0xff]
    %v1593 = vld [vmem:[%s1 + $0x470] sm:$0xff]
    %v1594 = vld [vmem:[%s1 + $0x478] sm:$0xff]
    %v1595 = vld [vmem:[%s1 + $0x480] sm:$0xff]
    %v1596 = vld [vmem:[%s1 + $0x488] sm:$0xff]
    %v1597 = vld [vmem:[%s1 + $0x490] sm:$0xff]
    %v1598 = vld [vmem:[%s1 + $0x498] sm:$0xff]
    %v1599 = vld [vmem:[%s1 + $0x4a0] sm:$0xff]
    %v1600 = vld [vmem:[%s1 + $0x4a8] sm:$0xff]
    %v1601 = vld [vmem:[%s1 + $0x4b0] sm:$0xff]
    %v1602 = vld [vmem:[%s1 + $0x4b8] sm:$0xff]
    %v1603 = vld [vmem:[%s1 + $0x4c0] sm:$0xff]
    %v1604 = vld [vmem:[%s1 + $0x4c8] sm:$0xff]
    %v1605 = vld [vmem:[%s1 + $0x4d0] sm:$0xff]
    %v1606 = vld [vmem:[%s1 + $0x4d8] sm:$0xff]
    %v1607 = vld [vmem:[%s1 + $0x4e0] sm:$0xff]
    %v1608 = vld [vmem:[%s1 + $0x4e8] sm:$0xff]
    %v1609 = vld [vmem:[%s1 + $0x4f0] sm:$0xff]
    %v1610 = vld [vmem:[%s1 + $0x4f8] sm:$0xff]
    %v1611 = vld [vmem:[%s1 + $0x500] sm:$0xff]
    %v1612 = vld [vmem:[%s1 + $0x508] sm:$0xff]
    %v1613 = vld [vmem:[%s1 + $0x510] sm:$0xff]
    %v1614 = vld [vmem:[%s1 + $0x518] sm:$0xff]
    %v1615 = vld [vmem:[%s1 + $0x520] sm:$0xff]
    %v1616 = vld [vmem:[%s1 + $0x528] sm:$0xff]
    %v1617 = vld [vmem:[%s1 + $0x530] sm:$0xff]
    %v1618 = vld [vmem:[%s1 + $0x538] sm:$0xff]
    %v1619 = vld [vmem:[%s1 + $0x540] sm:$0xff]
    %v1620 = vld [vmem:[%s1 + $0x548] sm:$0xff]
    %v1621 = vld [vmem:[%s1 + $0x550] sm:$0xff]
    %v1622 = vld [vmem:[%s1 + $0x558] sm:$0xff]
    %v1623 = vld [vmem:[%s1 + $0x560] sm:$0xff]
    %v1624 = vld [vmem:[%s1 + $0x568] sm:$0xff]
    %v1625 = vld [vmem:[%s1 + $0x570] sm:$0xff]
    %v1626 = vld [vmem:[%s1 + $0x578] sm:$0xff]
    %v1627 = vld [vmem:[%s1 + $0x580] sm:$0xff]
    %v1628 = vld [vmem:[%s1 + $0x588] sm:$0xff]
    %v1629 = vld [vmem:[%s1 + $0x590] sm:$0xff]
    %v1630 = vld [vmem:[%s1 + $0x598] sm:$0xff]
    %v1631 = vld [vmem:[%s1 + $0x5a0] sm:$0xff]
    %v1632 = vld [vmem:[%s1 + $0x5a8] sm:$0xff]
    %v1633 = vld [vmem:[%s1 + $0x5b0] sm:$0xff]
    %v1634 = vld [vmem:[%s1 + $0x5b8] sm:$0xff]
    %v1635 = vld [vmem:[%s1 + $0x5c0] sm:$0xff]
    %v1636 = vld [vmem:[%s1 + $0x5c8] sm:$0xff]
    %v1637 = vld [vmem:[%s1 + $0x5d0] sm:$0xff]
    %v1638 = vld [vmem:[%s1 + $0x5d8] sm:$0xff]
    %v1639 = vld [vmem:[%s1 + $0x5e0] sm:$0xff]
    %v1640 = vld [vmem:[%s1 + $0x5e8] sm:$0xff]
    %v1641 = vld [vmem:[%s1 + $0x5f0] sm:$0xff]
    %v1642 = vld [vmem:[%s1 + $0x5f8] sm:$0xff]
    %v1643 = vld [vmem:[%s1 + $0x600] sm:$0xff]
    %v1644 = vld [vmem:[%s1 + $0x608] sm:$0xff]
    %v1645 = vld [vmem:[%s1 + $0x610] sm:$0xff]
    %v1646 = vld [vmem:[%s1 + $0x618] sm:$0xff]
    %v1647 = vld [vmem:[%s1 + $0x620] sm:$0xff]
    %v1648 = vld [vmem:[%s1 + $0x628] sm:$0xff]
    %v1649 = vld [vmem:[%s1 + $0x630] sm:$0xff]
    %v1650 = vld [vmem:[%s1 + $0x638] sm:$0xff]
    %v1651 = vld [vmem:[%s1 + $0x640] sm:$0xff]
    %v1652 = vld [vmem:[%s1 + $0x648] sm:$0xff]
    %v1653 = vld [vmem:[%s1 + $0x650] sm:$0xff]
    %v1654 = vld [vmem:[%s1 + $0x658] sm:$0xff]
    %v1655 = vld [vmem:[%s1 + $0x660] sm:$0xff]
    %v1656 = vld [vmem:[%s1 + $0x668] sm:$0xff]
    %v1657 = vld [vmem:[%s1 + $0x670] sm:$0xff]
    %v1658 = vld [vmem:[%s1 + $0x678] sm:$0xff]
    %v1659 = vld [vmem:[%s1 + $0x680] sm:$0xff]
    %v1660 = vld [vmem:[%s1 + $0x688] sm:$0xff]
    %v1661 = vld [vmem:[%s1 + $0x690] sm:$0xff]
    %v1662 = vld [vmem:[%s1 + $0x698] sm:$0xff]
    %v1663 = vld [vmem:[%s1 + $0x6a0] sm:$0xff]
    %v1664 = vld [vmem:[%s1 + $0x6a8] sm:$0xff]
    %v1665 = vld [vmem:[%s1 + $0x6b0] sm:$0xff]
    %v1666 = vld [vmem:[%s1 + $0x6b8] sm:$0xff]
    %v1667 = vld [vmem:[%s1 + $0x6c0] sm:$0xff]
    %v1668 = vld [vmem:[%s1 + $0x6c8] sm:$0xff]
    %v1669 = vld [vmem:[%s1 + $0x6d0] sm:$0xff]
    %v1670 = vld [vmem:[%s1 + $0x6d8] sm:$0xff]
    %v1671 = vld [vmem:[%s1 + $0x6e0] sm:$0xff]
    %v1672 = vld [vmem:[%s1 + $0x6e8] sm:$0xff]
    %v1673 = vld [vmem:[%s1 + $0x6f0] sm:$0xff]
    %v1674 = vld [vmem:[%s1 + $0x6f8] sm:$0xff]
    %v1675 = vld [vmem:[%s1 + $0x700] sm:$0xff]
    %v1676 = vld [vmem:[%s1 + $0x708] sm:$0xff]
    %v1677 = vld [vmem:[%s1 + $0x710] sm:$0xff]
    %v1678 = vld [vmem:[%s1 + $0x718] sm:$0xff]
    %v1679 = vld [vmem:[%s1 + $0x720] sm:$0xff]
    %v1680 = vld [vmem:[%s1 + $0x728] sm:$0xff]
    %v1681 = vld [vmem:[%s1 + $0x730] sm:$0xff]
    %v1682 = vld [vmem:[%s1 + $0x738] sm:$0xff]
    %v1683 = vld [vmem:[%s1 + $0x740] sm:$0xff]
    %v1684 = vld [vmem:[%s1 + $0x748] sm:$0xff]
    %v1685 = vld [vmem:[%s1 + $0x750] sm:$0xff]
    %v1686 = vld [vmem:[%s1 + $0x758] sm:$0xff]
    %v1687 = vld [vmem:[%s1 + $0x760] sm:$0xff]
    %v1688 = vld [vmem:[%s1 + $0x768] sm:$0xff]
    %v1689 = vld [vmem:[%s1 + $0x770] sm:$0xff]
    %v1690 = vld [vmem:[%s1 + $0x778] sm:$0xff]
    %v1691 = vsel %vm1207, %v1511, 0.0
    %v1692 = vsel %vm1207, %v1514, 0.0
    %v1693 = vsel %vm1207, %v1517, 0.0
    %v1694 = vsel %vm1207, %v1520, 0.0
    %v1695 = vsel %vm1207, %v1523, 0.0
    %v1696 = vsel %vm1207, %v1526, 0.0
    %v1697 = vsel %vm1207, %v1529, 0.0
    %v1710 = vrot.slane %v1473, 4
    %v1711 = vrot.slane %v1476, 4
    %v1712 = vsel %vm143, %v1710, %v1711
    %v1713 = vrot.slane %v1691, 4
    %v1714 = vrot.slane %v1692, 4
    %v1715 = vsel %vm143, %v1713, %v1714
    %v1716 = vrot.slane %v1479, 4
    %v1717 = vsel %vm143, %v1711, %v1716
    %v1718 = vrot.slane %v1693, 4
    %v1719 = vsel %vm143, %v1714, %v1718
    %v1720 = vrot.slane %v1482, 4
    %v1721 = vsel %vm143, %v1716, %v1720
    %v1722 = vrot.slane %v1694, 4
    %v1723 = vsel %vm143, %v1718, %v1722
    %v1724 = vrot.slane %v1485, 4
    %v1725 = vsel %vm143, %v1720, %v1724
    %v1726 = vrot.slane %v1695, 4
    %v1727 = vsel %vm143, %v1722, %v1726
    %v1728 = vrot.slane %v1488, 4
    %v1729 = vsel %vm143, %v1724, %v1728
    %v1730 = vrot.slane %v1696, 4
    %v1731 = vsel %vm143, %v1726, %v1730
    %v1744 = vrot.slane %v1491, 4
    %v1745 = vsel %vm143, %v1728, %v1744
    %v1746 = vrot.slane %v1697, 4
    %v1747 = vsel %vm143, %v1730, %v1746
    %v1750 = vpack.c.bf16 %v1476, %v1473
    %v1751 = vpack.c.bf16 %v1692, %v1691
    %v1752 = vpack.c.bf16 %v1717, %v1712
    %v1753 = vpack.c.bf16 %v1719, %v1715
    %v1754 = vpack.c.bf16 %v1479, %v1476
    %v1755 = vpack.c.bf16 %v1693, %v1692
    %v1756 = vpack.c.bf16 %v1721, %v1717
    %v1757 = vpack.c.bf16 %v1723, %v1719
    %v1758 = vpack.c.bf16 %v1482, %v1479
    %v1759 = vpack.c.bf16 %v1694, %v1693
    %v1760 = vpack.c.bf16 %v1725, %v1721
    %v1761 = vpack.c.bf16 %v1727, %v1723
    %v1762 = vpack.c.bf16 %v1485, %v1482
    %v1763 = vpack.c.bf16 %v1695, %v1694
    %v1764 = vpack.c.bf16 %v1729, %v1725
    %v1765 = vpack.c.bf16 %v1731, %v1727
    %v1766 = vpack.c.bf16 %v1488, %v1485
    %v1767 = vpack.c.bf16 %v1696, %v1695
    %v1768 = vpack.c.bf16 %v1485, %v1485
    %v1769 = vpack.c.bf16 %v1695, %v1695
    %v1770 = vpack.c.bf16 %v1729, %v1729
    %v1771 = vpack.c.bf16 %v1731, %v1731
    %v1772 = vpack.c.bf16 %v1488, %v1488
    %v1773 = vpack.c.bf16 %v1696, %v1696
    %v1774 = vpack.c.bf16 %v1745, %v1745
    %v1775 = vpack.c.bf16 %v1747, %v1747
    %v1776 = vpack.c.bf16 %v1491, %v1491
    %v1777 = vpack.c.bf16 %v1697, %v1697
    %v1938 = vunpack.c.l.b16 %v1531
    %v1939 = vunpack.c.h.b16 %v1531
    %v1940 = vunpack.c.l.b16 %v1532
    %v1941 = vunpack.c.h.b16 %v1532
    %v1942 = vunpack.c.l.b16 %v1533
    %v1943 = vunpack.c.h.b16 %v1533
    %v1944 = vunpack.c.l.b16 %v1534
    %v1945 = vunpack.c.h.b16 %v1534
    %v1946 = vunpack.c.l.b16 %v1535
    %v1947 = vunpack.c.h.b16 %v1535
    %v1948 = vunpack.c.l.b16 %v1536
    %v1949 = vunpack.c.h.b16 %v1536
    %v1950 = vunpack.c.l.b16 %v1537
    %v1951 = vunpack.c.h.b16 %v1537
    %v1952 = vunpack.c.l.b16 %v1538
    %v1953 = vunpack.c.h.b16 %v1538
    %v1954 = vunpack.c.l.b16 %v1539
    %v1955 = vunpack.c.h.b16 %v1539
    %v1956 = vunpack.c.l.b16 %v1540
    %v1957 = vunpack.c.h.b16 %v1540
    %v1958 = vunpack.c.l.b16 %v1541
    %v1959 = vunpack.c.h.b16 %v1541
    %v1960 = vunpack.c.l.b16 %v1542
    %v1961 = vunpack.c.h.b16 %v1542
    %v1962 = vunpack.c.l.b16 %v1543
    %v1963 = vunpack.c.h.b16 %v1543
    %v1964 = vunpack.c.l.b16 %v1544
    %v1965 = vunpack.c.h.b16 %v1544
    %v1966 = vunpack.c.l.b16 %v1545
    %v1967 = vunpack.c.h.b16 %v1545
    %v1968 = vunpack.c.l.b16 %v1546
    %v1969 = vunpack.c.h.b16 %v1546
    %v1970 = vunpack.c.l.b16 %v1547
    %v1971 = vunpack.c.h.b16 %v1547
    %v1972 = vunpack.c.l.b16 %v1548
    %v1973 = vunpack.c.h.b16 %v1548
    %v1974 = vunpack.c.l.b16 %v1549
    %v1975 = vunpack.c.h.b16 %v1549
    %v1976 = vunpack.c.l.b16 %v1550
    %v1977 = vunpack.c.h.b16 %v1550
    %v1978 = vunpack.c.l.b16 %v1551
    %v1979 = vunpack.c.h.b16 %v1551
    %v1980 = vunpack.c.l.b16 %v1552
    %v1981 = vunpack.c.h.b16 %v1552
    %v1982 = vunpack.c.l.b16 %v1553
    %v1983 = vunpack.c.h.b16 %v1553
    %v1984 = vunpack.c.l.b16 %v1554
    %v1985 = vunpack.c.h.b16 %v1554
    %v1986 = vunpack.c.l.b16 %v1555
    %v1987 = vunpack.c.h.b16 %v1555
    %v1988 = vunpack.c.l.b16 %v1556
    %v1989 = vunpack.c.h.b16 %v1556
    %v1990 = vunpack.c.l.b16 %v1557
    %v1991 = vunpack.c.h.b16 %v1557
    %v1992 = vunpack.c.l.b16 %v1558
    %v1993 = vunpack.c.h.b16 %v1558
    %v1994 = vunpack.c.l.b16 %v1559
    %v1995 = vunpack.c.h.b16 %v1559
    %v1996 = vunpack.c.l.b16 %v1560
    %v1997 = vunpack.c.h.b16 %v1560
    %v1998 = vunpack.c.l.b16 %v1561
    %v1999 = vunpack.c.h.b16 %v1561
    %v2000 = vunpack.c.l.b16 %v1562
    %v2001 = vunpack.c.h.b16 %v1562
    %v2002 = vunpack.c.l.b16 %v1563
    %v2003 = vunpack.c.h.b16 %v1563
    %v2004 = vunpack.c.l.b16 %v1564
    %v2005 = vunpack.c.h.b16 %v1564
    %v2006 = vunpack.c.l.b16 %v1565
    %v2007 = vunpack.c.h.b16 %v1565
    %v2008 = vunpack.c.l.b16 %v1566
    %v2009 = vunpack.c.h.b16 %v1566
    %v2010 = vunpack.c.l.b16 %v1567
    %v2011 = vunpack.c.h.b16 %v1567
    %v2012 = vunpack.c.l.b16 %v1568
    %v2013 = vunpack.c.h.b16 %v1568
    %v2014 = vunpack.c.l.b16 %v1569
    %v2015 = vunpack.c.h.b16 %v1569
    %v2016 = vunpack.c.l.b16 %v1570
    %v2017 = vunpack.c.h.b16 %v1570
    %v2018 = vunpack.c.l.b16 %v1571
    %v2019 = vunpack.c.h.b16 %v1571
    %v2020 = vunpack.c.l.b16 %v1572
    %v2021 = vunpack.c.h.b16 %v1572
    %v2022 = vunpack.c.l.b16 %v1573
    %v2023 = vunpack.c.h.b16 %v1573
    %v2024 = vunpack.c.l.b16 %v1574
    %v2025 = vunpack.c.h.b16 %v1574
    %v2026 = vunpack.c.l.b16 %v1575
    %v2027 = vunpack.c.h.b16 %v1575
    %v2028 = vunpack.c.l.b16 %v1576
    %v2029 = vunpack.c.h.b16 %v1576
    %v2030 = vunpack.c.l.b16 %v1577
    %v2031 = vunpack.c.h.b16 %v1577
    %v2032 = vunpack.c.l.b16 %v1578
    %v2033 = vunpack.c.h.b16 %v1578
    %v2034 = vunpack.c.l.b16 %v1579
    %v2035 = vunpack.c.h.b16 %v1579
    %v2036 = vunpack.c.l.b16 %v1580
    %v2037 = vunpack.c.h.b16 %v1580
    %v2038 = vunpack.c.l.b16 %v1581
    %v2039 = vunpack.c.h.b16 %v1581
    %v2040 = vunpack.c.l.b16 %v1582
    %v2041 = vunpack.c.h.b16 %v1582
    %v2042 = vunpack.c.l.b16 %v1583
    %v2043 = vunpack.c.h.b16 %v1583
    %v2044 = vunpack.c.l.b16 %v1584
    %v2045 = vunpack.c.h.b16 %v1584
    %v2046 = vunpack.c.l.b16 %v1585
    %v2047 = vunpack.c.h.b16 %v1585
    %v2048 = vunpack.c.l.b16 %v1586
    %v2049 = vunpack.c.h.b16 %v1586
    %v2050 = vunpack.c.l.b16 %v1587
    %v2051 = vunpack.c.h.b16 %v1587
    %v2052 = vunpack.c.l.b16 %v1588
    %v2053 = vunpack.c.h.b16 %v1588
    %v2054 = vunpack.c.l.b16 %v1589
    %v2055 = vunpack.c.h.b16 %v1589
    %v2056 = vunpack.c.l.b16 %v1590
    %v2057 = vunpack.c.h.b16 %v1590
    %v2058 = vunpack.c.l.b16 %v1591
    %v2059 = vunpack.c.h.b16 %v1591
    %v2060 = vunpack.c.l.b16 %v1592
    %v2061 = vunpack.c.h.b16 %v1592
    %v2062 = vunpack.c.l.b16 %v1593
    %v2063 = vunpack.c.h.b16 %v1593
    %v2064 = vunpack.c.l.b16 %v1594
    %v2065 = vunpack.c.h.b16 %v1594
    %v2066 = vunpack.c.l.b16 %v1595
    %v2067 = vunpack.c.h.b16 %v1595
    %v2068 = vunpack.c.l.b16 %v1596
    %v2069 = vunpack.c.h.b16 %v1596
    %v2070 = vunpack.c.l.b16 %v1597
    %v2071 = vunpack.c.h.b16 %v1597
    %v2072 = vunpack.c.l.b16 %v1598
    %v2073 = vunpack.c.h.b16 %v1598
    %v2074 = vunpack.c.l.b16 %v1599
    %v2075 = vunpack.c.h.b16 %v1599
    %v2076 = vunpack.c.l.b16 %v1600
    %v2077 = vunpack.c.h.b16 %v1600
    %v2078 = vunpack.c.l.b16 %v1601
    %v2079 = vunpack.c.h.b16 %v1601
    %v2080 = vunpack.c.l.b16 %v1602
    %v2081 = vunpack.c.h.b16 %v1602
    %v2082 = vunpack.c.l.b16 %v1603
    %v2083 = vunpack.c.h.b16 %v1603
    %v2084 = vunpack.c.l.b16 %v1604
    %v2085 = vunpack.c.h.b16 %v1604
    %v2086 = vunpack.c.l.b16 %v1605
    %v2087 = vunpack.c.h.b16 %v1605
    %v2088 = vunpack.c.l.b16 %v1606
    %v2089 = vunpack.c.h.b16 %v1606
    %v2090 = vunpack.c.l.b16 %v1607
    %v2091 = vunpack.c.h.b16 %v1607
    %v2092 = vunpack.c.l.b16 %v1608
    %v2093 = vunpack.c.h.b16 %v1608
    %v2094 = vunpack.c.l.b16 %v1609
    %v2095 = vunpack.c.h.b16 %v1609
    %v2096 = vunpack.c.l.b16 %v1610
    %v2097 = vunpack.c.h.b16 %v1610
    %v2098 = vunpack.c.l.b16 %v1611
    %v2099 = vunpack.c.h.b16 %v1611
    %v2100 = vunpack.c.l.b16 %v1612
    %v2101 = vunpack.c.h.b16 %v1612
    %v2102 = vunpack.c.l.b16 %v1613
    %v2103 = vunpack.c.h.b16 %v1613
    %v2104 = vunpack.c.l.b16 %v1614
    %v2105 = vunpack.c.h.b16 %v1614
    %v2106 = vunpack.c.l.b16 %v1615
    %v2107 = vunpack.c.h.b16 %v1615
    %v2108 = vunpack.c.l.b16 %v1616
    %v2109 = vunpack.c.h.b16 %v1616
    %v2110 = vunpack.c.l.b16 %v1617
    %v2111 = vunpack.c.h.b16 %v1617
    %v2112 = vunpack.c.l.b16 %v1618
    %v2113 = vunpack.c.h.b16 %v1618
    %v2114 = vunpack.c.l.b16 %v1619
    %v2115 = vunpack.c.h.b16 %v1619
    %v2116 = vunpack.c.l.b16 %v1620
    %v2117 = vunpack.c.h.b16 %v1620
    %v2118 = vunpack.c.l.b16 %v1621
    %v2119 = vunpack.c.h.b16 %v1621
    %v2120 = vunpack.c.l.b16 %v1622
    %v2121 = vunpack.c.h.b16 %v1622
    %v2122 = vunpack.c.l.b16 %v1623
    %v2123 = vunpack.c.h.b16 %v1623
    %v2124 = vunpack.c.l.b16 %v1624
    %v2125 = vunpack.c.h.b16 %v1624
    %v2126 = vunpack.c.l.b16 %v1625
    %v2127 = vunpack.c.h.b16 %v1625
    %v2128 = vunpack.c.l.b16 %v1626
    %v2129 = vunpack.c.h.b16 %v1626
    %v2130 = vunpack.c.l.b16 %v1627
    %v2131 = vunpack.c.h.b16 %v1627
    %v2132 = vunpack.c.l.b16 %v1628
    %v2133 = vunpack.c.h.b16 %v1628
    %v2134 = vunpack.c.l.b16 %v1629
    %v2135 = vunpack.c.h.b16 %v1629
    %v2136 = vunpack.c.l.b16 %v1630
    %v2137 = vunpack.c.h.b16 %v1630
    %v2138 = vunpack.c.l.b16 %v1631
    %v2139 = vunpack.c.h.b16 %v1631
    %v2140 = vunpack.c.l.b16 %v1632
    %v2141 = vunpack.c.h.b16 %v1632
    %v2142 = vunpack.c.l.b16 %v1633
    %v2143 = vunpack.c.h.b16 %v1633
    %v2144 = vunpack.c.l.b16 %v1634
    %v2145 = vunpack.c.h.b16 %v1634
    %v2146 = vunpack.c.l.b16 %v1635
    %v2147 = vunpack.c.h.b16 %v1635
    %v2148 = vunpack.c.l.b16 %v1636
    %v2149 = vunpack.c.h.b16 %v1636
    %v2150 = vunpack.c.l.b16 %v1637
    %v2151 = vunpack.c.h.b16 %v1637
    %v2152 = vunpack.c.l.b16 %v1638
    %v2153 = vunpack.c.h.b16 %v1638
    %v2154 = vunpack.c.l.b16 %v1639
    %v2155 = vunpack.c.h.b16 %v1639
    %v2156 = vunpack.c.l.b16 %v1640
    %v2157 = vunpack.c.h.b16 %v1640
    %v2158 = vunpack.c.l.b16 %v1641
    %v2159 = vunpack.c.h.b16 %v1641
    %v2160 = vunpack.c.l.b16 %v1642
    %v2161 = vunpack.c.h.b16 %v1642
    %v2162 = vunpack.c.l.b16 %v1643
    %v2163 = vunpack.c.h.b16 %v1643
    %v2164 = vunpack.c.l.b16 %v1644
    %v2165 = vunpack.c.h.b16 %v1644
    %v2166 = vunpack.c.l.b16 %v1645
    %v2167 = vunpack.c.h.b16 %v1645
    %v2168 = vunpack.c.l.b16 %v1646
    %v2169 = vunpack.c.h.b16 %v1646
    %v2170 = vunpack.c.l.b16 %v1647
    %v2171 = vunpack.c.h.b16 %v1647
    %v2172 = vunpack.c.l.b16 %v1648
    %v2173 = vunpack.c.h.b16 %v1648
    %v2174 = vunpack.c.l.b16 %v1649
    %v2175 = vunpack.c.h.b16 %v1649
    %v2176 = vunpack.c.l.b16 %v1650
    %v2177 = vunpack.c.h.b16 %v1650
    %v2178 = vunpack.c.l.b16 %v1651
    %v2179 = vunpack.c.h.b16 %v1651
    %v2180 = vunpack.c.l.b16 %v1652
    %v2181 = vunpack.c.h.b16 %v1652
    %v2182 = vunpack.c.l.b16 %v1653
    %v2183 = vunpack.c.h.b16 %v1653
    %v2184 = vunpack.c.l.b16 %v1654
    %v2185 = vunpack.c.h.b16 %v1654
    %v2186 = vunpack.c.l.b16 %v1655
    %v2187 = vunpack.c.h.b16 %v1655
    %v2188 = vunpack.c.l.b16 %v1656
    %v2189 = vunpack.c.h.b16 %v1656
    %v2190 = vunpack.c.l.b16 %v1657
    %v2191 = vunpack.c.h.b16 %v1657
    %v2192 = vunpack.c.l.b16 %v1658
    %v2193 = vunpack.c.h.b16 %v1658
    %v2194 = vunpack.c.l.b16 %v1659
    %v2195 = vunpack.c.h.b16 %v1659
    %v2196 = vunpack.c.l.b16 %v1660
    %v2197 = vunpack.c.h.b16 %v1660
    %v2198 = vunpack.c.l.b16 %v1661
    %v2199 = vunpack.c.h.b16 %v1661
    %v2200 = vunpack.c.l.b16 %v1662
    %v2201 = vunpack.c.h.b16 %v1662
    %v2202 = vunpack.c.l.b16 %v1663
    %v2203 = vunpack.c.h.b16 %v1663
    %v2204 = vunpack.c.l.b16 %v1664
    %v2205 = vunpack.c.h.b16 %v1664
    %v2206 = vunpack.c.l.b16 %v1665
    %v2207 = vunpack.c.h.b16 %v1665
    %v2208 = vunpack.c.l.b16 %v1666
    %v2209 = vunpack.c.h.b16 %v1666
    %v2210 = vunpack.c.l.b16 %v1667
    %v2211 = vunpack.c.h.b16 %v1667
    %v2212 = vunpack.c.l.b16 %v1668
    %v2213 = vunpack.c.h.b16 %v1668
    %v2214 = vunpack.c.l.b16 %v1669
    %v2215 = vunpack.c.h.b16 %v1669
    %v2216 = vunpack.c.l.b16 %v1670
    %v2217 = vunpack.c.h.b16 %v1670
    %v2218 = vunpack.c.l.b16 %v1671
    %v2219 = vunpack.c.h.b16 %v1671
    %v2220 = vunpack.c.l.b16 %v1672
    %v2221 = vunpack.c.h.b16 %v1672
    %v2222 = vunpack.c.l.b16 %v1673
    %v2223 = vunpack.c.h.b16 %v1673
    %v2224 = vunpack.c.l.b16 %v1674
    %v2225 = vunpack.c.h.b16 %v1674
    %v2226 = vunpack.c.l.b16 %v1675
    %v2227 = vunpack.c.h.b16 %v1675
    %v2228 = vunpack.c.l.b16 %v1676
    %v2229 = vunpack.c.h.b16 %v1676
    %v2230 = vunpack.c.l.b16 %v1677
    %v2231 = vunpack.c.h.b16 %v1677
    %v2232 = vunpack.c.l.b16 %v1678
    %v2233 = vunpack.c.h.b16 %v1678
    %v2234 = vunpack.c.l.b16 %v1679
    %v2235 = vunpack.c.h.b16 %v1679
    %v2236 = vunpack.c.l.b16 %v1680
    %v2237 = vunpack.c.h.b16 %v1680
    %v2238 = vunpack.c.l.b16 %v1681
    %v2239 = vunpack.c.h.b16 %v1681
    %v2240 = vunpack.c.l.b16 %v1682
    %v2241 = vunpack.c.h.b16 %v1682
    %v2242 = vunpack.c.l.b16 %v1683
    %v2243 = vunpack.c.h.b16 %v1683
    %v2244 = vunpack.c.l.b16 %v1684
    %v2245 = vunpack.c.h.b16 %v1684
    %v2246 = vunpack.c.l.b16 %v1685
    %v2247 = vunpack.c.h.b16 %v1685
    %v2248 = vunpack.c.l.b16 %v1686
    %v2249 = vunpack.c.h.b16 %v1686
    %v2250 = vunpack.c.l.b16 %v1687
    %v2251 = vunpack.c.h.b16 %v1687
    %v2252 = vunpack.c.l.b16 %v1688
    %v2253 = vunpack.c.h.b16 %v1688
    %v2254 = vunpack.c.l.b16 %v1689
    %v2255 = vunpack.c.h.b16 %v1689
    %v2256 = vunpack.c.l.b16 %v1690
    %v2257 = vunpack.c.h.b16 %v1690
    %v2258 = vpack.c.b16 %v1940, %v1938
    %v2259 = vpack.c.b16 %v1941, %v1939
    %v2260 = vpack.c.b16 %v1944, %v1942
    %v2261 = vpack.c.b16 %v1945, %v1943
    %v2262 = vpack.c.b16 %v1948, %v1946
    %v2263 = vpack.c.b16 %v1949, %v1947
    %v2264 = vpack.c.b16 %v1952, %v1950
    %v2265 = vpack.c.b16 %v1953, %v1951
    %v2266 = vpack.c.b16 %v1956, %v1954
    %v2267 = vpack.c.b16 %v1957, %v1955
    %v2268 = vpack.c.b16 %v1960, %v1958
    %v2269 = vpack.c.b16 %v1961, %v1959
    %v2270 = vpack.c.b16 %v1964, %v1962
    %v2271 = vpack.c.b16 %v1965, %v1963
    %v2272 = vpack.c.b16 %v1968, %v1966
    %v2273 = vpack.c.b16 %v1969, %v1967
    %v2274 = vpack.c.b16 %v1972, %v1970
    %v2275 = vpack.c.b16 %v1973, %v1971
    %v2276 = vpack.c.b16 %v1976, %v1974
    %v2277 = vpack.c.b16 %v1977, %v1975
    %v2278 = vpack.c.b16 %v1980, %v1978
    %v2279 = vpack.c.b16 %v1981, %v1979
    %v2280 = vpack.c.b16 %v1984, %v1982
    %v2281 = vpack.c.b16 %v1985, %v1983
    %v2282 = vpack.c.b16 %v1988, %v1986
    %v2283 = vpack.c.b16 %v1989, %v1987
    %v2284 = vpack.c.b16 %v1992, %v1990
    %v2285 = vpack.c.b16 %v1993, %v1991
    %v2286 = vpack.c.b16 %v1996, %v1994
    %v2287 = vpack.c.b16 %v1997, %v1995
    %v2288 = vpack.c.b16 %v2000, %v1998
    %v2289 = vpack.c.b16 %v2001, %v1999
    %v2290 = vpack.c.b16 %v2004, %v2002
    %v2291 = vpack.c.b16 %v2005, %v2003
    %v2292 = vpack.c.b16 %v2008, %v2006
    %v2293 = vpack.c.b16 %v2009, %v2007
    %v2294 = vpack.c.b16 %v2012, %v2010
    %v2295 = vpack.c.b16 %v2013, %v2011
    %v2296 = vpack.c.b16 %v2016, %v2014
    %v2297 = vpack.c.b16 %v2017, %v2015
    %v2298 = vpack.c.b16 %v2020, %v2018
    %v2299 = vpack.c.b16 %v2021, %v2019
    %v2300 = vpack.c.b16 %v2024, %v2022
    %v2301 = vpack.c.b16 %v2025, %v2023
    %v2302 = vpack.c.b16 %v2028, %v2026
    %v2303 = vpack.c.b16 %v2029, %v2027
    %v2304 = vpack.c.b16 %v2032, %v2030
    %v2305 = vpack.c.b16 %v2033, %v2031
    %v2306 = vpack.c.b16 %v2036, %v2034
    %v2307 = vpack.c.b16 %v2037, %v2035
    %v2308 = vpack.c.b16 %v2040, %v2038
    %v2309 = vpack.c.b16 %v2041, %v2039
    %v2310 = vpack.c.b16 %v2044, %v2042
    %v2311 = vpack.c.b16 %v2045, %v2043
    %v2312 = vpack.c.b16 %v2048, %v2046
    %v2313 = vpack.c.b16 %v2049, %v2047
    %v2314 = vpack.c.b16 %v2052, %v2050
    %v2315 = vpack.c.b16 %v2053, %v2051
    %v2316 = vpack.c.b16 %v2056, %v2054
    %v2317 = vpack.c.b16 %v2057, %v2055
    %v2318 = vpack.c.b16 %v2060, %v2058
    %v2319 = vpack.c.b16 %v2061, %v2059
    %v2320 = vpack.c.b16 %v2064, %v2062
    %v2321 = vpack.c.b16 %v2065, %v2063
    %v2322 = vpack.c.b16 %v2068, %v2066
    %v2323 = vpack.c.b16 %v2069, %v2067
    %v2324 = vpack.c.b16 %v2072, %v2070
    %v2325 = vpack.c.b16 %v2073, %v2071
    %v2326 = vpack.c.b16 %v2076, %v2074
    %v2327 = vpack.c.b16 %v2077, %v2075
    %v2328 = vpack.c.b16 %v2080, %v2078
    %v2329 = vpack.c.b16 %v2081, %v2079
    %v2330 = vpack.c.b16 %v2084, %v2082
    %v2331 = vpack.c.b16 %v2085, %v2083
    %v2332 = vpack.c.b16 %v2088, %v2086
    %v2333 = vpack.c.b16 %v2089, %v2087
    %v2334 = vpack.c.b16 %v2092, %v2090
    %v2335 = vpack.c.b16 %v2093, %v2091
    %v2336 = vpack.c.b16 %v2096, %v2094
    %v2337 = vpack.c.b16 %v2097, %v2095
    %v2338 = vpack.c.b16 %v2100, %v2098
    %v2339 = vpack.c.b16 %v2101, %v2099
    %v2340 = vpack.c.b16 %v2104, %v2102
    %v2341 = vpack.c.b16 %v2105, %v2103
    %v2342 = vpack.c.b16 %v2108, %v2106
    %v2343 = vpack.c.b16 %v2109, %v2107
    %v2344 = vpack.c.b16 %v2112, %v2110
    %v2345 = vpack.c.b16 %v2113, %v2111
    %v2346 = vpack.c.b16 %v2116, %v2114
    %v2347 = vpack.c.b16 %v2117, %v2115
    %v2348 = vpack.c.b16 %v2120, %v2118
    %v2349 = vpack.c.b16 %v2121, %v2119
    %v2350 = vpack.c.b16 %v2124, %v2122
    %v2351 = vpack.c.b16 %v2125, %v2123
    %v2352 = vpack.c.b16 %v2128, %v2126
    %v2353 = vpack.c.b16 %v2129, %v2127
    %v2354 = vpack.c.b16 %v2132, %v2130
    %v2355 = vpack.c.b16 %v2133, %v2131
    %v2356 = vpack.c.b16 %v2136, %v2134
    %v2357 = vpack.c.b16 %v2137, %v2135
    %v2358 = vpack.c.b16 %v2140, %v2138
    %v2359 = vpack.c.b16 %v2141, %v2139
    %v2360 = vpack.c.b16 %v2144, %v2142
    %v2361 = vpack.c.b16 %v2145, %v2143
    %v2362 = vpack.c.b16 %v2148, %v2146
    %v2363 = vpack.c.b16 %v2149, %v2147
    %v2364 = vpack.c.b16 %v2152, %v2150
    %v2365 = vpack.c.b16 %v2153, %v2151
    %v2366 = vpack.c.b16 %v2156, %v2154
    %v2367 = vpack.c.b16 %v2157, %v2155
    %v2368 = vpack.c.b16 %v2160, %v2158
    %v2369 = vpack.c.b16 %v2161, %v2159
    %v2370 = vpack.c.b16 %v2164, %v2162
    %v2371 = vpack.c.b16 %v2165, %v2163
    %v2372 = vpack.c.b16 %v2168, %v2166
    %v2373 = vpack.c.b16 %v2169, %v2167
    %v2374 = vpack.c.b16 %v2172, %v2170
    %v2375 = vpack.c.b16 %v2173, %v2171
    %v2376 = vpack.c.b16 %v2176, %v2174
    %v2377 = vpack.c.b16 %v2177, %v2175
    %v2378 = vpack.c.b16 %v2180, %v2178
    %v2379 = vpack.c.b16 %v2181, %v2179
    %v2380 = vpack.c.b16 %v2184, %v2182
    %v2381 = vpack.c.b16 %v2185, %v2183
    %v2382 = vpack.c.b16 %v2188, %v2186
    %v2383 = vpack.c.b16 %v2189, %v2187
    %v2384 = vpack.c.b16 %v2192, %v2190
    %v2385 = vpack.c.b16 %v2193, %v2191
    %v2386 = vpack.c.b16 %v2196, %v2194
    %v2387 = vpack.c.b16 %v2197, %v2195
    %v2388 = vpack.c.b16 %v2200, %v2198
    %v2389 = vpack.c.b16 %v2201, %v2199
    %v2390 = vpack.c.b16 %v2204, %v2202
    %v2391 = vpack.c.b16 %v2205, %v2203
    %v2392 = vpack.c.b16 %v2208, %v2206
    %v2393 = vpack.c.b16 %v2209, %v2207
    %v2394 = vpack.c.b16 %v2212, %v2210
    %v2395 = vpack.c.b16 %v2213, %v2211
    %v2396 = vpack.c.b16 %v2216, %v2214
    %v2397 = vpack.c.b16 %v2217, %v2215
    %v2398 = vpack.c.b16 %v2220, %v2218
    %v2399 = vpack.c.b16 %v2221, %v2219
    %v2400 = vpack.c.b16 %v2224, %v2222
    %v2401 = vpack.c.b16 %v2225, %v2223
    %v2402 = vpack.c.b16 %v2228, %v2226
    %v2403 = vpack.c.b16 %v2229, %v2227
    %v2404 = vpack.c.b16 %v2232, %v2230
    %v2405 = vpack.c.b16 %v2233, %v2231
    %v2406 = vpack.c.b16 %v2236, %v2234
    %v2407 = vpack.c.b16 %v2237, %v2235
    %v2408 = vpack.c.b16 %v2240, %v2238
    %v2409 = vpack.c.b16 %v2241, %v2239
    %v2410 = vpack.c.b16 %v2244, %v2242
    %v2411 = vpack.c.b16 %v2245, %v2243
    %v2412 = vpack.c.b16 %v2248, %v2246
    %v2413 = vpack.c.b16 %v2249, %v2247
    %v2414 = vpack.c.b16 %v2252, %v2250
    %v2415 = vpack.c.b16 %v2253, %v2251
    %v2416 = vpack.c.b16 %v2256, %v2254
    %v2417 = vpack.c.b16 %v2257, %v2255
    %2578 = vmatpush.bf16.msra.mxu0 %v2272
    %2579 = vmatpush.bf16.msra.mxu0 %v2270
    %2580 = vmatpush.bf16.msra.mxu0 %v2268
    %2581 = vmatpush.bf16.msra.mxu0 %v2266
    %2582 = vmatpush.bf16.msra.mxu0 %v2264
    %2583 = vmatpush.bf16.msra.mxu0 %v2262
    %2584 = vmatpush.bf16.msra.mxu0 %v2260
    %2585 = vmatpush.bf16.msra.mxu0 %v2258
    %2586 = vmatmul.bf16.gmra.mxu0 %v1750
    %v2587 = vpop.f32.mrf.mxu0
    %v2588 = vadd.f32 0.0, %v2587
    %v2589 = vpop.f32.mrf.mxu0
    %v2590 = vadd.f32 0.0, %v2589
    %2591 = vmatmul.bf16.gmra.mxu0 %v1758
    %v2592 = vpop.f32.mrf.mxu0
    %v2593 = vadd.f32 0.0, %v2592
    %v2594 = vpop.f32.mrf.mxu0
    %v2595 = vadd.f32 0.0, %v2594
    %2596 = vmatmul.bf16.gmra.mxu0 %v1768
    %v2597 = vpop.f32.mrf.mxu0
    %v2598 = vadd.f32 0.0, %v2597
    %v2599 = vpop.f32.mrf.mxu0
    %2600 = vdwg.mxu0
    %2601 = vmatpush.bf16.msra.mxu0 %v2288
    %2602 = vmatpush.bf16.msra.mxu0 %v2286
    %2603 = vmatpush.bf16.msra.mxu0 %v2284
    %2604 = vmatpush.bf16.msra.mxu0 %v2282
    %2605 = vmatpush.bf16.msra.mxu0 %v2280
    %2606 = vmatpush.bf16.msra.mxu0 %v2278
    %2607 = vmatpush.bf16.msra.mxu0 %v2276
    %2608 = vmatpush.bf16.msra.mxu0 %v2274
    %2609 = vmatmul.bf16.gmra.mxu0 %v1751
    %v2610 = vpop.f32.mrf.mxu0
    %v2611 = vadd.f32 %v2588, %v2610
    %v2612 = vpop.f32.mrf.mxu0
    %v2613 = vadd.f32 %v2590, %v2612
    %2614 = vmatmul.bf16.gmra.mxu0 %v1759
    %v2615 = vpop.f32.mrf.mxu0
    %v2616 = vadd.f32 %v2593, %v2615
    %v2617 = vpop.f32.mrf.mxu0
    %v2618 = vadd.f32 %v2595, %v2617
    %2619 = vmatmul.bf16.gmra.mxu0 %v1769
    %v2620 = vpop.f32.mrf.mxu0
    %v2621 = vadd.f32 %v2598, %v2620
    %v2622 = vpop.f32.mrf.mxu0
    %2623 = vdwg.mxu0
    %2624 = vmatpush.bf16.msra.mxu0 %v2304
    %2625 = vmatpush.bf16.msra.mxu0 %v2302
    %2626 = vmatpush.bf16.msra.mxu0 %v2300
    %2627 = vmatpush.bf16.msra.mxu0 %v2298
    %2628 = vmatpush.bf16.msra.mxu0 %v2296
    %2629 = vmatpush.bf16.msra.mxu0 %v2294
    %2630 = vmatpush.bf16.msra.mxu0 %v2292
    %2631 = vmatpush.bf16.msra.mxu0 %v2290
    %2632 = vmatmul.bf16.gmra.mxu0 %v1752
    %v2633 = vpop.f32.mrf.mxu0
    %v2634 = vadd.f32 %v2611, %v2633
    %v2635 = vpop.f32.mrf.mxu0
    %v2636 = vadd.f32 %v2613, %v2635
    %2637 = vmatmul.bf16.gmra.mxu0 %v1760
    %v2638 = vpop.f32.mrf.mxu0
    %v2639 = vadd.f32 %v2616, %v2638
    %v2640 = vpop.f32.mrf.mxu0
    %v2641 = vadd.f32 %v2618, %v2640
    %2642 = vmatmul.bf16.gmra.mxu0 %v1770
    %v2643 = vpop.f32.mrf.mxu0
    %v2644 = vadd.f32 %v2621, %v2643
    %v2645 = vpop.f32.mrf.mxu0
    %2646 = vdwg.mxu0
    %2647 = vmatpush.bf16.msra.mxu0 %v2320
    %2648 = vmatpush.bf16.msra.mxu0 %v2318
    %2649 = vmatpush.bf16.msra.mxu0 %v2316
    %2650 = vmatpush.bf16.msra.mxu0 %v2314
    %2651 = vmatpush.bf16.msra.mxu0 %v2312
    %2652 = vmatpush.bf16.msra.mxu0 %v2310
    %2653 = vmatpush.bf16.msra.mxu0 %v2308
    %2654 = vmatpush.bf16.msra.mxu0 %v2306
    %2655 = vmatmul.bf16.gmra.mxu0 %v1753
    %v2656 = vpop.f32.mrf.mxu0
    %v2657 = vadd.f32 %v2634, %v2656
    %v2658 = vpop.f32.mrf.mxu0
    %v2659 = vadd.f32 %v2636, %v2658
    %2660 = vmatmul.bf16.gmra.mxu0 %v1761
    %v2661 = vpop.f32.mrf.mxu0
    %v2662 = vadd.f32 %v2639, %v2661
    %v2663 = vpop.f32.mrf.mxu0
    %v2664 = vadd.f32 %v2641, %v2663
    %2665 = vmatmul.bf16.gmra.mxu0 %v1771
    %v2666 = vpop.f32.mrf.mxu0
    %v2667 = vadd.f32 %v2644, %v2666
    %v2668 = vpop.f32.mrf.mxu0
    %2669 = vdwg.mxu0
    %2670 = vmatpush.bf16.msra.mxu0 %v2336
    %2671 = vmatpush.bf16.msra.mxu0 %v2334
    %2672 = vmatpush.bf16.msra.mxu0 %v2332
    %2673 = vmatpush.bf16.msra.mxu0 %v2330
    %2674 = vmatpush.bf16.msra.mxu0 %v2328
    %2675 = vmatpush.bf16.msra.mxu0 %v2326
    %2676 = vmatpush.bf16.msra.mxu0 %v2324
    %2677 = vmatpush.bf16.msra.mxu0 %v2322
    %2678 = vmatmul.bf16.gmra.mxu0 %v1754
    %v2679 = vpop.f32.mrf.mxu0
    %v2680 = vadd.f32 %v2657, %v2679
    %v2681 = vpop.f32.mrf.mxu0
    %v2682 = vadd.f32 %v2659, %v2681
    %2683 = vmatmul.bf16.gmra.mxu0 %v1762
    %v2684 = vpop.f32.mrf.mxu0
    %v2685 = vadd.f32 %v2662, %v2684
    %v2686 = vpop.f32.mrf.mxu0
    %v2687 = vadd.f32 %v2664, %v2686
    %2688 = vmatmul.bf16.gmra.mxu0 %v1772
    %v2689 = vpop.f32.mrf.mxu0
    %v2690 = vadd.f32 %v2667, %v2689
    %v2691 = vpop.f32.mrf.mxu0
    %2692 = vdwg.mxu0
    %2693 = vmatpush.bf16.msra.mxu0 %v2352
    %2694 = vmatpush.bf16.msra.mxu0 %v2350
    %2695 = vmatpush.bf16.msra.mxu0 %v2348
    %2696 = vmatpush.bf16.msra.mxu0 %v2346
    %2697 = vmatpush.bf16.msra.mxu0 %v2344
    %2698 = vmatpush.bf16.msra.mxu0 %v2342
    %2699 = vmatpush.bf16.msra.mxu0 %v2340
    %2700 = vmatpush.bf16.msra.mxu0 %v2338
    %2701 = vmatmul.bf16.gmra.mxu0 %v1755
    %v2702 = vpop.f32.mrf.mxu0
    %v2703 = vadd.f32 %v2680, %v2702
    %v2704 = vpop.f32.mrf.mxu0
    %v2705 = vadd.f32 %v2682, %v2704
    %2706 = vmatmul.bf16.gmra.mxu0 %v1763
    %v2707 = vpop.f32.mrf.mxu0
    %v2708 = vadd.f32 %v2685, %v2707
    %v2709 = vpop.f32.mrf.mxu0
    %v2710 = vadd.f32 %v2687, %v2709
    %2711 = vmatmul.bf16.gmra.mxu0 %v1773
    %v2712 = vpop.f32.mrf.mxu0
    %v2713 = vadd.f32 %v2690, %v2712
    %v2714 = vpop.f32.mrf.mxu0
    %2715 = vdwg.mxu0
    %2716 = vmatpush.bf16.msra.mxu0 %v2368
    %2717 = vmatpush.bf16.msra.mxu0 %v2366
    %2718 = vmatpush.bf16.msra.mxu0 %v2364
    %2719 = vmatpush.bf16.msra.mxu0 %v2362
    %2720 = vmatpush.bf16.msra.mxu0 %v2360
    %2721 = vmatpush.bf16.msra.mxu0 %v2358
    %2722 = vmatpush.bf16.msra.mxu0 %v2356
    %2723 = vmatpush.bf16.msra.mxu0 %v2354
    %2724 = vmatmul.bf16.gmra.mxu0 %v1756
    %v2725 = vpop.f32.mrf.mxu0
    %v2726 = vadd.f32 %v2703, %v2725
    %v2727 = vpop.f32.mrf.mxu0
    %v2728 = vadd.f32 %v2705, %v2727
    %2729 = vmatmul.bf16.gmra.mxu0 %v1764
    %v2730 = vpop.f32.mrf.mxu0
    %v2731 = vadd.f32 %v2708, %v2730
    %v2732 = vpop.f32.mrf.mxu0
    %v2733 = vadd.f32 %v2710, %v2732
    %2734 = vmatmul.bf16.gmra.mxu0 %v1774
    %v2735 = vpop.f32.mrf.mxu0
    %v2736 = vadd.f32 %v2713, %v2735
    %v2737 = vpop.f32.mrf.mxu0
    %2738 = vdwg.mxu0
    %2739 = vmatpush.bf16.msra.mxu0 %v2384
    %2740 = vmatpush.bf16.msra.mxu0 %v2382
    %2741 = vmatpush.bf16.msra.mxu0 %v2380
    %2742 = vmatpush.bf16.msra.mxu0 %v2378
    %2743 = vmatpush.bf16.msra.mxu0 %v2376
    %2744 = vmatpush.bf16.msra.mxu0 %v2374
    %2745 = vmatpush.bf16.msra.mxu0 %v2372
    %2746 = vmatpush.bf16.msra.mxu0 %v2370
    %2747 = vmatmul.bf16.gmra.mxu0 %v1757
    %v2748 = vpop.f32.mrf.mxu0
    %v2749 = vadd.f32 %v2726, %v2748
    %v2750 = vpop.f32.mrf.mxu0
    %v2751 = vadd.f32 %v2728, %v2750
    %2752 = vmatmul.bf16.gmra.mxu0 %v1765
    %v2753 = vpop.f32.mrf.mxu0
    %v2754 = vadd.f32 %v2731, %v2753
    %v2755 = vpop.f32.mrf.mxu0
    %v2756 = vadd.f32 %v2733, %v2755
    %2757 = vmatmul.bf16.gmra.mxu0 %v1775
    %v2758 = vpop.f32.mrf.mxu0
    %v2759 = vadd.f32 %v2736, %v2758
    %v2760 = vpop.f32.mrf.mxu0
    %2761 = vdwg.mxu0
    %2762 = vmatpush.bf16.msra.mxu0 %v2400
    %2763 = vmatpush.bf16.msra.mxu0 %v2398
    %2764 = vmatpush.bf16.msra.mxu0 %v2396
    %2765 = vmatpush.bf16.msra.mxu0 %v2394
    %2766 = vmatpush.bf16.msra.mxu0 %v2392
    %2767 = vmatpush.bf16.msra.mxu0 %v2390
    %2768 = vmatpush.bf16.msra.mxu0 %v2388
    %2769 = vmatpush.bf16.msra.mxu0 %v2386
    %2770 = vmatmul.bf16.gmra.mxu0 %v1758
    %v2771 = vpop.f32.mrf.mxu0
    %v2772 = vadd.f32 %v2749, %v2771
    %v2773 = vpop.f32.mrf.mxu0
    %v2774 = vadd.f32 %v2751, %v2773
    %2775 = vmatmul.bf16.gmra.mxu0 %v1766
    %v2776 = vpop.f32.mrf.mxu0
    %v2777 = vadd.f32 %v2754, %v2776
    %v2778 = vpop.f32.mrf.mxu0
    %v2779 = vadd.f32 %v2756, %v2778
    %2780 = vmatmul.bf16.gmra.mxu0 %v1776
    %v2781 = vpop.f32.mrf.mxu0
    %v2782 = vadd.f32 %v2759, %v2781
    %v2783 = vpop.f32.mrf.mxu0
    %2784 = vdwg.mxu0
    %2785 = vmatpush.bf16.msra.mxu0 %v2416
    %2786 = vmatpush.bf16.msra.mxu0 %v2414
    %2787 = vmatpush.bf16.msra.mxu0 %v2412
    %2788 = vmatpush.bf16.msra.mxu0 %v2410
    %2789 = vmatpush.bf16.msra.mxu0 %v2408
    %2790 = vmatpush.bf16.msra.mxu0 %v2406
    %2791 = vmatpush.bf16.msra.mxu0 %v2404
    %2792 = vmatpush.bf16.msra.mxu0 %v2402
    %2793 = vmatmul.bf16.gmra.mxu0 %v1759
    %v2794 = vpop.f32.mrf.mxu0
    %v2795 = vadd.f32 %v2772, %v2794
    %v2796 = vpop.f32.mrf.mxu0
    %v2797 = vadd.f32 %v2774, %v2796
    %2798 = vmatmul.bf16.gmra.mxu0 %v1767
    %v2799 = vpop.f32.mrf.mxu0
    %v2800 = vadd.f32 %v2777, %v2799
    %v2801 = vpop.f32.mrf.mxu0
    %v2802 = vadd.f32 %v2779, %v2801
    %2803 = vmatmul.bf16.gmra.mxu0 %v1777
    %v2804 = vpop.f32.mrf.mxu0
    %v2805 = vadd.f32 %v2782, %v2804
    %v2806 = vpop.f32.mrf.mxu0
    %2807 = vdwg.mxu0
    %2808 = vmatpush.bf16.msra.mxu0 %v2273
    %2809 = vmatpush.bf16.msra.mxu0 %v2271
    %2810 = vmatpush.bf16.msra.mxu0 %v2269
    %2811 = vmatpush.bf16.msra.mxu0 %v2267
    %2812 = vmatpush.bf16.msra.mxu0 %v2265
    %2813 = vmatpush.bf16.msra.mxu0 %v2263
    %2814 = vmatpush.bf16.msra.mxu0 %v2261
    %2815 = vmatpush.bf16.msra.mxu0 %v2259
    %2816 = vmatmul.bf16.gmra.mxu0 %v1750
    %v2817 = vpop.f32.mrf.mxu0
    %v2818 = vadd.f32 0.0, %v2817
    %v2819 = vpop.f32.mrf.mxu0
    %v2820 = vadd.f32 0.0, %v2819
    %2821 = vmatmul.bf16.gmra.mxu0 %v1758
    %v2822 = vpop.f32.mrf.mxu0
    %v2823 = vadd.f32 0.0, %v2822
    %v2824 = vpop.f32.mrf.mxu0
    %v2825 = vadd.f32 0.0, %v2824
    %2826 = vmatmul.bf16.gmra.mxu0 %v1768
    %v2827 = vpop.f32.mrf.mxu0
    %v2828 = vadd.f32 0.0, %v2827
    %v2829 = vpop.f32.mrf.mxu0
    %2830 = vdwg.mxu0
    %2831 = vmatpush.bf16.msra.mxu0 %v2289
    %2832 = vmatpush.bf16.msra.mxu0 %v2287
    %2833 = vmatpush.bf16.msra.mxu0 %v2285
    %2834 = vmatpush.bf16.msra.mxu0 %v2283
    %2835 = vmatpush.bf16.msra.mxu0 %v2281
    %2836 = vmatpush.bf16.msra.mxu0 %v2279
    %2837 = vmatpush.bf16.msra.mxu0 %v2277
    %2838 = vmatpush.bf16.msra.mxu0 %v2275
    %2839 = vmatmul.bf16.gmra.mxu0 %v1751
    %v2840 = vpop.f32.mrf.mxu0
    %v2841 = vadd.f32 %v2818, %v2840
    %v2842 = vpop.f32.mrf.mxu0
    %v2843 = vadd.f32 %v2820, %v2842
    %2844 = vmatmul.bf16.gmra.mxu0 %v1759
    %v2845 = vpop.f32.mrf.mxu0
    %v2846 = vadd.f32 %v2823, %v2845
    %v2847 = vpop.f32.mrf.mxu0
    %v2848 = vadd.f32 %v2825, %v2847
    %2849 = vmatmul.bf16.gmra.mxu0 %v1769
    %v2850 = vpop.f32.mrf.mxu0
    %v2851 = vadd.f32 %v2828, %v2850
    %v2852 = vpop.f32.mrf.mxu0
    %2853 = vdwg.mxu0
    %2854 = vmatpush.bf16.msra.mxu0 %v2305
    %2855 = vmatpush.bf16.msra.mxu0 %v2303
    %2856 = vmatpush.bf16.msra.mxu0 %v2301
    %2857 = vmatpush.bf16.msra.mxu0 %v2299
    %2858 = vmatpush.bf16.msra.mxu0 %v2297
    %2859 = vmatpush.bf16.msra.mxu0 %v2295
    %2860 = vmatpush.bf16.msra.mxu0 %v2293
    %2861 = vmatpush.bf16.msra.mxu0 %v2291
    %2862 = vmatmul.bf16.gmra.mxu0 %v1752
    %v2863 = vpop.f32.mrf.mxu0
    %v2864 = vadd.f32 %v2841, %v2863
    %v2865 = vpop.f32.mrf.mxu0
    %v2866 = vadd.f32 %v2843, %v2865
    %2867 = vmatmul.bf16.gmra.mxu0 %v1760
    %v2868 = vpop.f32.mrf.mxu0
    %v2869 = vadd.f32 %v2846, %v2868
    %v2870 = vpop.f32.mrf.mxu0
    %v2871 = vadd.f32 %v2848, %v2870
    %2872 = vmatmul.bf16.gmra.mxu0 %v1770
    %v2873 = vpop.f32.mrf.mxu0
    %v2874 = vadd.f32 %v2851, %v2873
    %v2875 = vpop.f32.mrf.mxu0
    %2876 = vdwg.mxu0
    %2877 = vmatpush.bf16.msra.mxu0 %v2321
    %2878 = vmatpush.bf16.msra.mxu0 %v2319
    %2879 = vmatpush.bf16.msra.mxu0 %v2317
    %2880 = vmatpush.bf16.msra.mxu0 %v2315
    %2881 = vmatpush.bf16.msra.mxu0 %v2313
    %2882 = vmatpush.bf16.msra.mxu0 %v2311
    %2883 = vmatpush.bf16.msra.mxu0 %v2309
    %2884 = vmatpush.bf16.msra.mxu0 %v2307
    %2885 = vmatmul.bf16.gmra.mxu0 %v1753
    %v2886 = vpop.f32.mrf.mxu0
    %v2887 = vadd.f32 %v2864, %v2886
    %v2888 = vpop.f32.mrf.mxu0
    %v2889 = vadd.f32 %v2866, %v2888
    %2890 = vmatmul.bf16.gmra.mxu0 %v1761
    %v2891 = vpop.f32.mrf.mxu0
    %v2892 = vadd.f32 %v2869, %v2891
    %v2893 = vpop.f32.mrf.mxu0
    %v2894 = vadd.f32 %v2871, %v2893
    %2895 = vmatmul.bf16.gmra.mxu0 %v1771
    %v2896 = vpop.f32.mrf.mxu0
    %v2897 = vadd.f32 %v2874, %v2896
    %v2898 = vpop.f32.mrf.mxu0
    %2899 = vdwg.mxu0
    %2900 = vmatpush.bf16.msra.mxu0 %v2337
    %2901 = vmatpush.bf16.msra.mxu0 %v2335
    %2902 = vmatpush.bf16.msra.mxu0 %v2333
    %2903 = vmatpush.bf16.msra.mxu0 %v2331
    %2904 = vmatpush.bf16.msra.mxu0 %v2329
    %2905 = vmatpush.bf16.msra.mxu0 %v2327
    %2906 = vmatpush.bf16.msra.mxu0 %v2325
    %2907 = vmatpush.bf16.msra.mxu0 %v2323
    %2908 = vmatmul.bf16.gmra.mxu0 %v1754
    %v2909 = vpop.f32.mrf.mxu0
    %v2910 = vadd.f32 %v2887, %v2909
    %v2911 = vpop.f32.mrf.mxu0
    %v2912 = vadd.f32 %v2889, %v2911
    %2913 = vmatmul.bf16.gmra.mxu0 %v1762
    %v2914 = vpop.f32.mrf.mxu0
    %v2915 = vadd.f32 %v2892, %v2914
    %v2916 = vpop.f32.mrf.mxu0
    %v2917 = vadd.f32 %v2894, %v2916
    %2918 = vmatmul.bf16.gmra.mxu0 %v1772
    %v2919 = vpop.f32.mrf.mxu0
    %v2920 = vadd.f32 %v2897, %v2919
    %v2921 = vpop.f32.mrf.mxu0
    %2922 = vdwg.mxu0
    %2923 = vmatpush.bf16.msra.mxu0 %v2353
    %2924 = vmatpush.bf16.msra.mxu0 %v2351
    %2925 = vmatpush.bf16.msra.mxu0 %v2349
    %2926 = vmatpush.bf16.msra.mxu0 %v2347
    %2927 = vmatpush.bf16.msra.mxu0 %v2345
    %2928 = vmatpush.bf16.msra.mxu0 %v2343
    %2929 = vmatpush.bf16.msra.mxu0 %v2341
    %2930 = vmatpush.bf16.msra.mxu0 %v2339
    %2931 = vmatmul.bf16.gmra.mxu0 %v1755
    %v2932 = vpop.f32.mrf.mxu0
    %v2933 = vadd.f32 %v2910, %v2932
    %v2934 = vpop.f32.mrf.mxu0
    %v2935 = vadd.f32 %v2912, %v2934
    %2936 = vmatmul.bf16.gmra.mxu0 %v1763
    %v2937 = vpop.f32.mrf.mxu0
    %v2938 = vadd.f32 %v2915, %v2937
    %v2939 = vpop.f32.mrf.mxu0
    %v2940 = vadd.f32 %v2917, %v2939
    %2941 = vmatmul.bf16.gmra.mxu0 %v1773
    %v2942 = vpop.f32.mrf.mxu0
    %v2943 = vadd.f32 %v2920, %v2942
    %v2944 = vpop.f32.mrf.mxu0
    %2945 = vdwg.mxu0
    %2946 = vmatpush.bf16.msra.mxu0 %v2369
    %2947 = vmatpush.bf16.msra.mxu0 %v2367
    %2948 = vmatpush.bf16.msra.mxu0 %v2365
    %2949 = vmatpush.bf16.msra.mxu0 %v2363
    %2950 = vmatpush.bf16.msra.mxu0 %v2361
    %2951 = vmatpush.bf16.msra.mxu0 %v2359
    %2952 = vmatpush.bf16.msra.mxu0 %v2357
    %2953 = vmatpush.bf16.msra.mxu0 %v2355
    %2954 = vmatmul.bf16.gmra.mxu0 %v1756
    %v2955 = vpop.f32.mrf.mxu0
    %v2956 = vadd.f32 %v2933, %v2955
    %v2957 = vpop.f32.mrf.mxu0
    %v2958 = vadd.f32 %v2935, %v2957
    %2959 = vmatmul.bf16.gmra.mxu0 %v1764
    %v2960 = vpop.f32.mrf.mxu0
    %v2961 = vadd.f32 %v2938, %v2960
    %v2962 = vpop.f32.mrf.mxu0
    %v2963 = vadd.f32 %v2940, %v2962
    %2964 = vmatmul.bf16.gmra.mxu0 %v1774
    %v2965 = vpop.f32.mrf.mxu0
    %v2966 = vadd.f32 %v2943, %v2965
    %v2967 = vpop.f32.mrf.mxu0
    %2968 = vdwg.mxu0
    %2969 = vmatpush.bf16.msra.mxu0 %v2385
    %2970 = vmatpush.bf16.msra.mxu0 %v2383
    %2971 = vmatpush.bf16.msra.mxu0 %v2381
    %2972 = vmatpush.bf16.msra.mxu0 %v2379
    %2973 = vmatpush.bf16.msra.mxu0 %v2377
    %2974 = vmatpush.bf16.msra.mxu0 %v2375
    %2975 = vmatpush.bf16.msra.mxu0 %v2373
    %2976 = vmatpush.bf16.msra.mxu0 %v2371
    %2977 = vmatmul.bf16.gmra.mxu0 %v1757
    %v2978 = vpop.f32.mrf.mxu0
    %v2979 = vadd.f32 %v2956, %v2978
    %v2980 = vpop.f32.mrf.mxu0
    %v2981 = vadd.f32 %v2958, %v2980
    %2982 = vmatmul.bf16.gmra.mxu0 %v1765
    %v2983 = vpop.f32.mrf.mxu0
    %v2984 = vadd.f32 %v2961, %v2983
    %v2985 = vpop.f32.mrf.mxu0
    %v2986 = vadd.f32 %v2963, %v2985
    %2987 = vmatmul.bf16.gmra.mxu0 %v1775
    %v2988 = vpop.f32.mrf.mxu0
    %v2989 = vadd.f32 %v2966, %v2988
    %v2990 = vpop.f32.mrf.mxu0
    %2991 = vdwg.mxu0
    %2992 = vmatpush.bf16.msra.mxu0 %v2401
    %2993 = vmatpush.bf16.msra.mxu0 %v2399
    %2994 = vmatpush.bf16.msra.mxu0 %v2397
    %2995 = vmatpush.bf16.msra.mxu0 %v2395
    %2996 = vmatpush.bf16.msra.mxu0 %v2393
    %2997 = vmatpush.bf16.msra.mxu0 %v2391
    %2998 = vmatpush.bf16.msra.mxu0 %v2389
    %2999 = vmatpush.bf16.msra.mxu0 %v2387
    %3000 = vmatmul.bf16.gmra.mxu0 %v1758
    %v3001 = vpop.f32.mrf.mxu0
    %v3002 = vadd.f32 %v2979, %v3001
    %v3003 = vpop.f32.mrf.mxu0
    %v3004 = vadd.f32 %v2981, %v3003
    %3005 = vmatmul.bf16.gmra.mxu0 %v1766
    %v3006 = vpop.f32.mrf.mxu0
    %v3007 = vadd.f32 %v2984, %v3006
    %v3008 = vpop.f32.mrf.mxu0
    %v3009 = vadd.f32 %v2986, %v3008
    %3010 = vmatmul.bf16.gmra.mxu0 %v1776
    %v3011 = vpop.f32.mrf.mxu0
    %v3012 = vadd.f32 %v2989, %v3011
    %v3013 = vpop.f32.mrf.mxu0
    %3014 = vdwg.mxu0
    %3015 = vmatpush.bf16.msra.mxu0 %v2417
    %3016 = vmatpush.bf16.msra.mxu0 %v2415
    %3017 = vmatpush.bf16.msra.mxu0 %v2413
    %3018 = vmatpush.bf16.msra.mxu0 %v2411
    %3019 = vmatpush.bf16.msra.mxu0 %v2409
    %3020 = vmatpush.bf16.msra.mxu0 %v2407
    %3021 = vmatpush.bf16.msra.mxu0 %v2405
    %3022 = vmatpush.bf16.msra.mxu0 %v2403
    %3023 = vmatmul.bf16.gmra.mxu0 %v1759
    %v3024 = vpop.f32.mrf.mxu0
    %v3025 = vadd.f32 %v3002, %v3024
    %v3026 = vpop.f32.mrf.mxu0
    %v3027 = vadd.f32 %v3004, %v3026
    %3028 = vmatmul.bf16.gmra.mxu0 %v1767
    %v3029 = vpop.f32.mrf.mxu0
    %v3030 = vadd.f32 %v3007, %v3029
    %v3031 = vpop.f32.mrf.mxu0
    %v3032 = vadd.f32 %v3009, %v3031
    %3033 = vmatmul.bf16.gmra.mxu0 %v1777
    %v3034 = vpop.f32.mrf.mxu0
    %v3035 = vadd.f32 %v3012, %v3034
    %v3036 = vpop.f32.mrf.mxu0
    %3037 = vdwg.mxu0
    %v3038 = vld [vmem:[%s2 + $0x160] sm:$0xff]
    %v3039 = vld [vmem:[%s2 + $0x170] sm:$0xff]
    %v3040 = vld [vmem:[%s2 + $0x180] sm:$0xff]
    %v3041 = vld [vmem:[%s2 + $0x190] sm:$0xff]
    %v3042 = vld [vmem:[%s2 + $0x1a0] sm:$0xff]
    %v3043 = vld [vmem:[%s2 + $0x1b0] sm:$0xff]
    %v3044 = vld [vmem:[%s2 + $0x1c0] sm:$0xff]
    %v3045 = vld [vmem:[%s2 + $0x1d0] sm:$0xff]
    %v3046 = vld [vmem:[%s2 + $0x1e0] sm:$0xff]
    %v3047 = vld [vmem:[%s2 + $0x1f0] sm:$0xff]
    %v3048 = vld [vmem:[%s2 + $0x200] sm:$0xff]
    %v3049 = vld [vmem:[%s2 + $0x210] sm:$0xff]
    %v3050 = vld [vmem:[%s2 + $0x220] sm:$0xff]
    %v3051 = vld [vmem:[%s2 + $0x230] sm:$0xff]
    %v3052 = vld [vmem:[%s2 + $0x240] sm:$0xff]
    %v3053 = vld [vmem:[%s2 + $0x250] sm:$0xff]
    %v3054 = vld [vmem:[%s2 + $0x260] sm:$0xff]
    %v3055 = vld [vmem:[%s2 + $0x270] sm:$0xff]
    %v3056 = vld [vmem:[%s2 + $0x280] sm:$0xff]
    %v3057 = vld [vmem:[%s2 + $0x290] sm:$0xff]
    %v3058 = vld [vmem:[%s2 + $0x2a0] sm:$0xff]
    %v3059 = vld [vmem:[%s2 + $0x2a8] sm:$0xff]
    %v3060 = vld [vmem:[%s2 + $0x2b0] sm:$0xff]
    %v3061 = vld [vmem:[%s2 + $0x2b8] sm:$0xff]
    %v3062 = vld [vmem:[%s2 + $0x502] ss:$0 sm:$0xff]
    %s3063 = scalar_lea.vmem %s2, 1283
    %v3064 = vld [vmem:[%s3063] ss:$8 sm:$0x3]
    %v3065 = vsel %vm1207, 1.0, 0
    %3067 = vmatpush.msra.mxu0 0.0
    %3068 = vmatpush.msra.mxu0 0.0
    %3069 = vmatpush.msra.mxu0 0.0
    %3070 = vmatpush.msra.mxu0 0.0
    %3071 = vmatpush.msra.mxu0 0.0
    %3072 = vmatpush.msra.mxu0 0.0
    %3073 = vmatpush.msra.mxu0 0.0
    %3074 = vmatpush.msra.mxu0 0.0
    %3075 = vmatpush.msra.mxu0 0.0
    %3076 = vmatpush.msra.mxu0 0.0
    %3077 = vmatpush.msra.mxu0 0.0
    %3078 = vmatpush.msra.mxu0 %v2805
    %3079 = vmatpush.msra.mxu0 %v2802
    %3080 = vmatpush.msra.mxu0 %v2800
    %3081 = vmatpush.msra.mxu0 %v2797
    %3082 = vmatpush.msra.mxu0 %v2795
    %3083 = vmatmul.f32.gmra.mxu0 %v3065
    %v3084 = vpop.f32.mrf.mxu0
    %v3085 = vadd.f32 0.0, %v3084
    %3086 = vdwg.mxu0
    %3087 = vmatpush.msra.mxu0 0.0
    %3088 = vmatpush.msra.mxu0 0.0
    %3089 = vmatpush.msra.mxu0 0.0
    %3090 = vmatpush.msra.mxu0 0.0
    %3091 = vmatpush.msra.mxu0 0.0
    %3092 = vmatpush.msra.mxu0 0.0
    %3093 = vmatpush.msra.mxu0 0.0
    %3094 = vmatpush.msra.mxu0 0.0
    %3095 = vmatpush.msra.mxu0 0.0
    %3096 = vmatpush.msra.mxu0 0.0
    %3097 = vmatpush.msra.mxu0 0.0
    %3098 = vmatpush.msra.mxu0 %v3035
    %3099 = vmatpush.msra.mxu0 %v3032
    %3100 = vmatpush.msra.mxu0 %v3030
    %3101 = vmatpush.msra.mxu0 %v3027
    %3102 = vmatpush.msra.mxu0 %v3025
    %3103 = vmatmul.f32.gmra.mxu0 %v3065
    %v3104 = vpop.f32.mrf.mxu0
    %v3105 = vadd.f32 0.0, %v3104
    %3106 = vdwg.mxu0
    %v3107 = vmul.f32 %v2795, %v2795
    %v3108 = vmul.f32 %v3025, %v3025
    %v3109 = vmul.f32 %v2797, %v2797
    %v3110 = vmul.f32 %v3027, %v3027
    %v3111 = vmul.f32 %v2800, %v2800
    %v3112 = vmul.f32 %v3030, %v3030
    %v3113 = vmul.f32 %v2802, %v2802
    %v3114 = vmul.f32 %v3032, %v3032
    %v3115 = vmul.f32 %v2805, %v2805
    %v3116 = vmul.f32 %v3035, %v3035
    %3117 = vmatpush.msra.mxu0 0.0
    %3118 = vmatpush.msra.mxu0 0.0
    %3119 = vmatpush.msra.mxu0 0.0
    %3120 = vmatpush.msra.mxu0 0.0
    %3121 = vmatpush.msra.mxu0 0.0
    %3122 = vmatpush.msra.mxu0 0.0
    %3123 = vmatpush.msra.mxu0 0.0
    %3124 = vmatpush.msra.mxu0 0.0
    %3125 = vmatpush.msra.mxu0 0.0
    %3126 = vmatpush.msra.mxu0 0.0
    %3127 = vmatpush.msra.mxu0 0.0
    %3128 = vmatpush.msra.mxu0 %v3115
    %3129 = vmatpush.msra.mxu0 %v3113
    %3130 = vmatpush.msra.mxu0 %v3111
    %3131 = vmatpush.msra.mxu0 %v3109
    %3132 = vmatpush.msra.mxu0 %v3107
    %3133 = vmatmul.f32.gmra.mxu0 %v3065
    %v3134 = vpop.f32.mrf.mxu0
    %v3135 = vadd.f32 0.0, %v3134
    %3136 = vdwg.mxu0
    %3137 = vmatpush.msra.mxu0 0.0
    %3138 = vmatpush.msra.mxu0 0.0
    %3139 = vmatpush.msra.mxu0 0.0
    %3140 = vmatpush.msra.mxu0 0.0
    %3141 = vmatpush.msra.mxu0 0.0
    %3142 = vmatpush.msra.mxu0 0.0
    %3143 = vmatpush.msra.mxu0 0.0
    %3144 = vmatpush.msra.mxu0 0.0
    %3145 = vmatpush.msra.mxu0 0.0
    %3146 = vmatpush.msra.mxu0 0.0
    %3147 = vmatpush.msra.mxu0 0.0
    %3148 = vmatpush.msra.mxu0 %v3116
    %3149 = vmatpush.msra.mxu0 %v3114
    %3150 = vmatpush.msra.mxu0 %v3112
    %3151 = vmatpush.msra.mxu0 %v3110
    %3152 = vmatpush.msra.mxu0 %v3108
    %3153 = vmatmul.f32.gmra.mxu0 %v3065
    %v3154 = vpop.f32.mrf.mxu0
    %v3155 = vadd.f32 0.0, %v3154
    %3156 = vdwg.mxu0
    %v3159 = vrot.slane %v3135, 7
    %v3160 = vrot.slane %v3155, 7
    %v3163 = vsel %vm1204, %v3085, %v3159
    %v3164 = vsel %vm1204, %v3105, %v3160
    %vm3165 = vcmask 261120
    %v3167 = vsel %vm3165, %v3164, 0
    %3169 = vmatpush.msra.mxu0 %v3053
    %3170 = vmatpush.msra.mxu0 %v3052
    %3171 = vmatpush.msra.mxu0 %v3051
    %3172 = vmatpush.msra.mxu0 %v3050
    %3173 = vmatpush.msra.mxu0 %v3049
    %3174 = vmatpush.msra.mxu0 %v3048
    %3175 = vmatpush.msra.mxu0 %v3047
    %3176 = vmatpush.msra.mxu0 %v3046
    %3177 = vmatpush.msra.mxu0 %v3045
    %3178 = vmatpush.msra.mxu0 %v3044
    %3179 = vmatpush.msra.mxu0 %v3043
    %3180 = vmatpush.msra.mxu0 %v3042
    %3181 = vmatpush.msra.mxu0 %v3041
    %3182 = vmatpush.msra.mxu0 %v3040
    %3183 = vmatpush.msra.mxu0 %v3039
    %3184 = vmatpush.msra.mxu0 %v3038
    %3185 = vmatmul.f32.gmra.mxu0 %v3163
    %v3186 = vpop.f32.mrf.mxu0
    %v3187 = vadd.f32 0.0, %v3186
    %3188 = vdwg.mxu0
    %3189 = vmatpush.msra.mxu0 0.0
    %3190 = vmatpush.msra.mxu0 0.0
    %3191 = vmatpush.msra.mxu0 0.0
    %3192 = vmatpush.msra.mxu0 0.0
    %3193 = vmatpush.msra.mxu0 0.0
    %3194 = vmatpush.msra.mxu0 0.0
    %3195 = vmatpush.msra.mxu0 0.0
    %3196 = vmatpush.msra.mxu0 0.0
    %3197 = vmatpush.msra.mxu0 0.0
    %3198 = vmatpush.msra.mxu0 0.0
    %3199 = vmatpush.msra.mxu0 0.0
    %3200 = vmatpush.msra.mxu0 0.0
    %3201 = vmatpush.msra.mxu0 %v3057
    %3202 = vmatpush.msra.mxu0 %v3056
    %3203 = vmatpush.msra.mxu0 %v3055
    %3204 = vmatpush.msra.mxu0 %v3054
    %3205 = vmatmul.f32.gmra.mxu0 %v3167
    %v3206 = vpop.f32.mrf.mxu0
    %v3207 = vadd.f32 %v3187, %v3206
    %3208 = vdwg.mxu0
    %v3209 = vmul.f32 %v3207, 0.0025
    %v3210 = vmul.f32 %v3209, %v3209
    %v3212 = vrot.slane %v3210, 7
    %v3214 = vsub.f32 %v3209, %v3212
    %v3215 = vadd.f32 %v3214, 1e-05
    %v3216 = vrsqrt.pop %v3215
    %v3217 = vmul.f32 %v3216, %v3215
    %v3218 = vmul.f32 %v3217, %v3216
    %v3219 = vmul.f32 0.5, %v3218
    %v3220 = vsub.f32 1.5, %v3219
    %v3221 = vmul.f32 %v3216, %v3220
    %vm3222 = vweird.f32 %v3215
    %vm3223 = vweird.f32 %v3216
    %vm3224 = vmor %vm3222, %vm3223
    %v3225 = vsel %vm3224, %v3216, %v3221
    %v3226 = vmul.f32 %v3062, %v3225
    %v3228 = vrot.slane %v3226, 1
    %v3230 = vmul.f32 %v3209, %v3228
    %v3232 = vrot.slane %v3230, 7
    %v3234 = vsel %vm1204, %v3228, %v3232
    %vm3235 = vcmask 130048
    %v3237 = vsel %vm3235, %v3234, 0
    %3239 = vmatpush.msra.mxu0 0.0
    %3240 = vmatpush.msra.mxu0 0.0
    %3241 = vmatpush.msra.mxu0 0.0
    %3242 = vmatpush.msra.mxu0 0.0
    %3243 = vmatpush.msra.mxu0 0.0
    %3244 = vmatpush.msra.mxu0 0.0
    %3245 = vmatpush.msra.mxu0 0.0
    %3246 = vmatpush.msra.mxu0 0.0
    %3247 = vmatpush.msra.mxu0 0.0
    %3248 = vmatpush.msra.mxu0 0.0
    %3249 = vmatpush.msra.mxu0 0.0
    %3250 = vmatpush.msra.mxu0 0.0
    %3251 = vmatpush.msra.mxu0 0.0
    %3252 = vmatpush.msra.mxu0 0.0
    %3253 = vmatpush.msra.mxu0 %v3060
    %3254 = vmatpush.msra.mxu0 %v3058
    %3255 = vmatmul.f32.gmra.mxu0 %v3237
    %v3256 = vpop.f32.mrf.mxu0
    %v3257 = vadd.f32 0.0, %v3256
    %3258 = vdwg.mxu0
    %3259 = vmatpush.msra.mxu0 0.0
    %3260 = vmatpush.msra.mxu0 0.0
    %3261 = vmatpush.msra.mxu0 0.0
    %3262 = vmatpush.msra.mxu0 0.0
    %3263 = vmatpush.msra.mxu0 0.0
    %3264 = vmatpush.msra.mxu0 0.0
    %3265 = vmatpush.msra.mxu0 0.0
    %3266 = vmatpush.msra.mxu0 0.0
    %3267 = vmatpush.msra.mxu0 0.0
    %3268 = vmatpush.msra.mxu0 0.0
    %3269 = vmatpush.msra.mxu0 0.0
    %3270 = vmatpush.msra.mxu0 0.0
    %3271 = vmatpush.msra.mxu0 0.0
    %3272 = vmatpush.msra.mxu0 0.0
    %3273 = vmatpush.msra.mxu0 %v3061
    %3274 = vmatpush.msra.mxu0 %v3059
    %3275 = vmatmul.f32.gmra.mxu0 %v3237
    %v3276 = vpop.f32.mrf.mxu0
    %v3277 = vadd.f32 0.0, %v3276
    %3278 = vdwg.mxu0
    %v3279 = vperm.slane %v3257, 0
    %v3280 = vperm.slane %v3277, 0
    %v3281 = vmul.f32 %v2795, %v3279
    %v3282 = vmul.f32 %v3025, %v3280
    %v3283 = vmul.f32 %v2797, %v3279
    %v3284 = vmul.f32 %v3027, %v3280
    %v3285 = vmul.f32 %v2800, %v3279
    %v3286 = vmul.f32 %v3030, %v3280
    %v3287 = vmul.f32 %v2802, %v3279
    %v3288 = vmul.f32 %v3032, %v3280
    %v3289 = vmul.f32 %v2805, %v3279
    %v3290 = vmul.f32 %v3035, %v3280
    %3293 = vst [vmem:[#allocation1] sm:$0xff] %v3257
    %3294 = vst [vmem:[#allocation1 + $0x9] sm:$0xff] %v3277
    %s3295 = scalar_lea.vmem [#allocation1], 1
    %v3296 = vld [vmem:[%s3295] ss:$9 sm:$0xff]
    %v3298 = vsub.f32 %v3064, %v3296
    %v3300 = vperm.slane %v3298, 0
    %v3301 = vperm.slane %v3298, 1
    %v3304 = vadd.f32 %v3281, %v3300
    %v3305 = vadd.f32 %v3282, %v3301
    %v3306 = vadd.f32 %v3283, %v3300
    %v3307 = vadd.f32 %v3284, %v3301
    %v3308 = vadd.f32 %v3285, %v3300
    %v3309 = vadd.f32 %v3286, %v3301
    %v3310 = vadd.f32 %v3287, %v3300
    %v3311 = vadd.f32 %v3288, %v3301
    %v3312 = vadd.f32 %v3289, %v3300
    %v3313 = vadd.f32 %v3290, %v3301
    %v3314 = vmax.f32 %v3304, 0.0
    %v3315 = vmax.f32 %v3305, 0.0
    %v3316 = vmax.f32 %v3306, 0.0
    %v3317 = vmax.f32 %v3307, 0.0
    %v3318 = vmax.f32 %v3308, 0.0
    %v3319 = vmax.f32 %v3309, 0.0
    %v3320 = vmax.f32 %v3310, 0.0
    %v3321 = vmax.f32 %v3311, 0.0
    %v3322 = vmax.f32 %v3312, 0.0
    %v3323 = vmax.f32 %v3313, 0.0
    %v3324 = vld [vmem:[%s2 + $0x330] sm:$0xff]
    %v3325 = vld [vmem:[%s2 + $0x340] sm:$0xff]
    %v3326 = vld [vmem:[%s2 + $0x350] sm:$0xf]
    %v3328 = vsel %vm1207, %v3324, 0
    %v3331 = vsel %vm1207, %v3325, 0
    %v3334 = vsel %vm1207, %v3326, 0
    %3336 = vmatpush.msra.mxu0 0.0
    %3337 = vmatpush.msra.mxu0 0.0
    %3338 = vmatpush.msra.mxu0 0.0
    %3339 = vmatpush.msra.mxu0 0.0
    %3340 = vmatpush.msra.mxu0 0.0
    %3341 = vmatpush.msra.mxu0 0.0
    %3342 = vmatpush.msra.mxu0 0.0
    %3343 = vmatpush.msra.mxu0 0.0
    %3344 = vmatpush.msra.mxu0 0.0
    %3345 = vmatpush.msra.mxu0 0.0
    %3346 = vmatpush.msra.mxu0 0.0
    %3347 = vmatpush.msra.mxu0 %v3322
    %3348 = vmatpush.msra.mxu0 %v3320
    %3349 = vmatpush.msra.mxu0 %v3318
    %3350 = vmatpush.msra.mxu0 %v3316
    %3351 = vmatpush.msra.mxu0 %v3314
    %3352 = vmatmul.f32.gmra.mxu0 %v3328
    %v3353 = vpop.f32.mrf.mxu0
    %v3354 = vadd.f32 0.0, %v3353
    %3355 = vmatmul.f32.gmra.mxu0 %v3331
    %v3356 = vpop.f32.mrf.mxu0
    %v3357 = vadd.f32 0.0, %v3356
    %3358 = vmatmul.f32.gmra.mxu0 %v3334
    %v3359 = vpop.f32.mrf.mxu0
    %v3360 = vadd.f32 0.0, %v3359
    %3361 = vdwg.mxu0
    %3362 = vmatpush.msra.mxu0 0.0
    %3363 = vmatpush.msra.mxu0 0.0
    %3364 = vmatpush.msra.mxu0 0.0
    %3365 = vmatpush.msra.mxu0 0.0
    %3366 = vmatpush.msra.mxu0 0.0
    %3367 = vmatpush.msra.mxu0 0.0
    %3368 = vmatpush.msra.mxu0 0.0
    %3369 = vmatpush.msra.mxu0 0.0
    %3370 = vmatpush.msra.mxu0 0.0
    %3371 = vmatpush.msra.mxu0 0.0
    %3372 = vmatpush.msra.mxu0 0.0
    %3373 = vmatpush.msra.mxu0 %v3323
    %3374 = vmatpush.msra.mxu0 %v3321
    %3375 = vmatpush.msra.mxu0 %v3319
    %3376 = vmatpush.msra.mxu0 %v3317
    %3377 = vmatpush.msra.mxu0 %v3315
    %3378 = vmatmul.f32.gmra.mxu0 %v3328
    %v3379 = vpop.f32.mrf.mxu0
    %v3380 = vadd.f32 0.0, %v3379
    %3381 = vmatmul.f32.gmra.mxu0 %v3331
    %v3382 = vpop.f32.mrf.mxu0
    %v3383 = vadd.f32 0.0, %v3382
    %3384 = vmatmul.f32.gmra.mxu0 %v3334
    %v3385 = vpop.f32.mrf.mxu0
    %v3386 = vadd.f32 0.0, %v3385
    %3387 = vdwg.mxu0
    %v3388 = vld [vmem:[%s1 + $0x780] sm:$0xf]
    %v3389 = vld [vmem:[%s1 + $0x788] sm:$0xf]
    %v3390 = vld [vmem:[%s1 + $0x790] sm:$0xf]
    %v3391 = vld [vmem:[%s1 + $0x798] sm:$0xf]
    %v3392 = vld [vmem:[%s1 + $0x7a0] sm:$0xf]
    %v3393 = vld [vmem:[%s1 + $0x7a8] sm:$0xf]
    %v3394 = vld [vmem:[%s1 + $0x7b0] sm:$0xf]
    %v3395 = vld [vmem:[%s1 + $0x7b8] sm:$0xf]
    %v3396 = vld [vmem:[%s1 + $0x7c0] sm:$0xf]
    %v3397 = vld [vmem:[%s1 + $0x7c8] sm:$0xf]
    %v3398 = vld [vmem:[%s1 + $0x7d0] sm:$0xf]
    %v3399 = vld [vmem:[%s1 + $0x7d8] sm:$0xf]
    %v3400 = vld [vmem:[%s1 + $0x7e0] sm:$0xf]
    %v3401 = vld [vmem:[%s1 + $0x7e8] sm:$0xf]
    %v3402 = vld [vmem:[%s1 + $0x7f0] sm:$0xf]
    %v3403 = vld [vmem:[%s1 + $0x7f8] sm:$0xf]
    %v3404 = vld [vmem:[%s1 + $0x800] sm:$0xf]
    %v3405 = vld [vmem:[%s1 + $0x808] sm:$0xf]
    %v3406 = vld [vmem:[%s1 + $0x810] sm:$0xf]
    %v3407 = vld [vmem:[%s1 + $0x818] sm:$0xf]
    %v3408 = vld [vmem:[%s1 + $0x820] sm:$0xf]
    %v3409 = vld [vmem:[%s1 + $0x828] sm:$0xf]
    %v3410 = vld [vmem:[%s1 + $0x830] sm:$0xf]
    %v3411 = vld [vmem:[%s1 + $0x838] sm:$0xf]
    %v3412 = vld [vmem:[%s1 + $0x840] sm:$0xf]
    %v3413 = vld [vmem:[%s1 + $0x848] sm:$0xf]
    %v3414 = vld [vmem:[%s1 + $0x850] sm:$0xf]
    %v3415 = vld [vmem:[%s1 + $0x858] sm:$0xf]
    %v3416 = vld [vmem:[%s1 + $0x860] sm:$0xf]
    %v3417 = vld [vmem:[%s1 + $0x868] sm:$0xf]
    %v3418 = vld [vmem:[%s1 + $0x870] sm:$0xf]
    %v3419 = vld [vmem:[%s1 + $0x878] sm:$0xf]
    %v3420 = vld [vmem:[%s1 + $0x880] sm:$0xf]
    %v3421 = vld [vmem:[%s1 + $0x888] sm:$0xf]
    %v3422 = vld [vmem:[%s1 + $0x890] sm:$0xf]
    %v3423 = vld [vmem:[%s1 + $0x898] sm:$0xf]
    %v3424 = vld [vmem:[%s1 + $0x8a0] sm:$0xf]
    %v3425 = vld [vmem:[%s1 + $0x8a8] sm:$0xf]
    %v3426 = vld [vmem:[%s1 + $0x8b0] sm:$0xf]
    %v3427 = vld [vmem:[%s1 + $0x8b8] sm:$0xf]
    %v3428 = vld [vmem:[%s1 + $0x8c0] sm:$0xf]
    %v3429 = vld [vmem:[%s1 + $0x8c8] sm:$0xf]
    %v3430 = vld [vmem:[%s1 + $0x8d0] sm:$0xf]
    %v3431 = vld [vmem:[%s1 + $0x8d8] sm:$0xf]
    %v3432 = vld [vmem:[%s1 + $0x8e0] sm:$0xf]
    %v3433 = vld [vmem:[%s1 + $0x8e8] sm:$0xf]
    %v3434 = vld [vmem:[%s1 + $0x8f0] sm:$0xf]
    %v3435 = vld [vmem:[%s1 + $0x8f8] sm:$0xf]
    %v3436 = vld [vmem:[%s1 + $0x900] sm:$0xf]
    %v3437 = vld [vmem:[%s1 + $0x908] sm:$0xf]
    %v3438 = vld [vmem:[%s1 + $0x910] sm:$0xf]
    %v3439 = vld [vmem:[%s1 + $0x918] sm:$0xf]
    %v3440 = vld [vmem:[%s1 + $0x920] sm:$0xf]
    %v3441 = vld [vmem:[%s1 + $0x928] sm:$0xf]
    %v3442 = vld [vmem:[%s1 + $0x930] sm:$0xf]
    %v3443 = vld [vmem:[%s1 + $0x938] sm:$0xf]
    %v3444 = vld [vmem:[%s1 + $0x940] sm:$0xf]
    %v3445 = vld [vmem:[%s1 + $0x948] sm:$0xf]
    %v3446 = vld [vmem:[%s1 + $0x950] sm:$0xf]
    %v3447 = vld [vmem:[%s1 + $0x958] sm:$0xf]
    %v3448 = vld [vmem:[%s1 + $0x960] sm:$0xf]
    %v3449 = vld [vmem:[%s1 + $0x968] sm:$0xf]
    %v3450 = vld [vmem:[%s1 + $0x970] sm:$0xf]
    %v3451 = vld [vmem:[%s1 + $0x978] sm:$0xf]
    %v3452 = vld [vmem:[%s1 + $0x980] sm:$0xf]
    %v3453 = vld [vmem:[%s1 + $0x988] sm:$0xf]
    %v3454 = vld [vmem:[%s1 + $0x990] sm:$0xf]
    %v3455 = vld [vmem:[%s1 + $0x998] sm:$0xf]
    %v3456 = vld [vmem:[%s1 + $0x9a0] sm:$0xf]
    %v3457 = vld [vmem:[%s1 + $0x9a8] sm:$0xf]
    %v3458 = vld [vmem:[%s1 + $0x9b0] sm:$0xf]
    %v3459 = vld [vmem:[%s1 + $0x9b8] sm:$0xf]
    %v3460 = vld [vmem:[%s1 + $0x9c0] sm:$0xf]
    %v3461 = vld [vmem:[%s1 + $0x9c8] sm:$0xf]
    %v3462 = vld [vmem:[%s1 + $0x9d0] sm:$0xf]
    %v3463 = vld [vmem:[%s1 + $0x9d8] sm:$0xf]
    %v3464 = vld [vmem:[%s1 + $0x9e0] sm:$0xf]
    %v3465 = vld [vmem:[%s1 + $0x9e8] sm:$0xf]
    %v3466 = vld [vmem:[%s1 + $0x9f0] sm:$0xf]
    %v3467 = vld [vmem:[%s1 + $0x9f8] sm:$0xf]
    %v3468 = vld [vmem:[%s1 + $0xa00] sm:$0xf]
    %v3469 = vld [vmem:[%s1 + $0xa08] sm:$0xf]
    %v3470 = vld [vmem:[%s1 + $0xa10] sm:$0xf]
    %v3471 = vld [vmem:[%s1 + $0xa18] sm:$0xf]
    %v3472 = vld [vmem:[%s1 + $0xa20] sm:$0xf]
    %v3473 = vld [vmem:[%s1 + $0xa28] sm:$0xf]
    %v3474 = vld [vmem:[%s1 + $0xa30] sm:$0xf]
    %v3475 = vld [vmem:[%s1 + $0xa38] sm:$0xf]
    %v3476 = vld [vmem:[%s1 + $0xa40] sm:$0xf]
    %v3477 = vld [vmem:[%s1 + $0xa48] sm:$0xf]
    %v3478 = vld [vmem:[%s1 + $0xa50] sm:$0xf]
    %v3479 = vld [vmem:[%s1 + $0xa58] sm:$0xf]
    %v3480 = vld [vmem:[%s1 + $0xa60] sm:$0xf]
    %v3481 = vld [vmem:[%s1 + $0xa68] sm:$0xf]
    %v3482 = vld [vmem:[%s1 + $0xa70] sm:$0xf]
    %v3483 = vld [vmem:[%s1 + $0xa78] sm:$0xf]
    %v3484 = vld [vmem:[%s1 + $0xa80] sm:$0xf]
    %v3485 = vld [vmem:[%s1 + $0xa88] sm:$0xf]
    %v3486 = vld [vmem:[%s1 + $0xa90] sm:$0xf]
    %v3487 = vld [vmem:[%s1 + $0xa98] sm:$0xf]
    %v3488 = vld [vmem:[%s1 + $0xaa0] sm:$0xf]
    %v3489 = vld [vmem:[%s1 + $0xaa8] sm:$0xf]
    %v3490 = vld [vmem:[%s1 + $0xab0] sm:$0xf]
    %v3491 = vld [vmem:[%s1 + $0xab8] sm:$0xf]
    %v3492 = vld [vmem:[%s1 + $0xac0] sm:$0xf]
    %v3493 = vld [vmem:[%s1 + $0xac8] sm:$0xf]
    %v3494 = vld [vmem:[%s1 + $0xad0] sm:$0xf]
    %v3495 = vld [vmem:[%s1 + $0xad8] sm:$0xf]
    %v3496 = vld [vmem:[%s1 + $0xae0] sm:$0xf]
    %v3497 = vld [vmem:[%s1 + $0xae8] sm:$0xf]
    %v3498 = vld [vmem:[%s1 + $0xaf0] sm:$0xf]
    %v3499 = vld [vmem:[%s1 + $0xaf8] sm:$0xf]
    %v3500 = vld [vmem:[%s1 + $0xb00] sm:$0xf]
    %v3501 = vld [vmem:[%s1 + $0xb08] sm:$0xf]
    %v3502 = vld [vmem:[%s1 + $0xb10] sm:$0xf]
    %v3503 = vld [vmem:[%s1 + $0xb18] sm:$0xf]
    %v3504 = vld [vmem:[%s1 + $0xb20] sm:$0xf]
    %v3505 = vld [vmem:[%s1 + $0xb28] sm:$0xf]
    %v3506 = vld [vmem:[%s1 + $0xb30] sm:$0xf]
    %v3507 = vld [vmem:[%s1 + $0xb38] sm:$0xf]
    %v3508 = vld [vmem:[%s1 + $0xb40] sm:$0xf]
    %v3509 = vld [vmem:[%s1 + $0xb48] sm:$0xf]
    %v3510 = vld [vmem:[%s1 + $0xb50] sm:$0xf]
    %v3511 = vld [vmem:[%s1 + $0xb58] sm:$0xf]
    %v3512 = vld [vmem:[%s1 + $0xb60] sm:$0xf]
    %v3513 = vld [vmem:[%s1 + $0xb68] sm:$0xf]
    %v3514 = vld [vmem:[%s1 + $0xb70] sm:$0xf]
    %v3515 = vld [vmem:[%s1 + $0xb78] sm:$0xf]
    %v3516 = vld [vmem:[%s1 + $0xb80] sm:$0xf]
    %v3517 = vld [vmem:[%s1 + $0xb88] sm:$0xf]
    %v3518 = vld [vmem:[%s1 + $0xb90] sm:$0xf]
    %v3519 = vld [vmem:[%s1 + $0xb98] sm:$0xf]
    %v3520 = vld [vmem:[%s1 + $0xba0] sm:$0xf]
    %v3521 = vld [vmem:[%s1 + $0xba8] sm:$0xf]
    %v3522 = vld [vmem:[%s1 + $0xbb0] sm:$0xf]
    %v3523 = vld [vmem:[%s1 + $0xbb8] sm:$0xf]
    %v3524 = vld [vmem:[%s1 + $0xbc0] sm:$0xf]
    %v3525 = vld [vmem:[%s1 + $0xbc8] sm:$0xf]
    %v3526 = vld [vmem:[%s1 + $0xbd0] sm:$0xf]
    %v3527 = vld [vmem:[%s1 + $0xbd8] sm:$0xf]
    %v3528 = vld [vmem:[%s1 + $0xbe0] sm:$0xf]
    %v3529 = vld [vmem:[%s1 + $0xbe8] sm:$0xf]
    %v3530 = vld [vmem:[%s1 + $0xbf0] sm:$0xf]
    %v3531 = vld [vmem:[%s1 + $0xbf8] sm:$0xf]
    %v3532 = vld [vmem:[%s1 + $0xc00] sm:$0xf]
    %v3533 = vld [vmem:[%s1 + $0xc08] sm:$0xf]
    %v3534 = vld [vmem:[%s1 + $0xc10] sm:$0xf]
    %v3535 = vld [vmem:[%s1 + $0xc18] sm:$0xf]
    %v3536 = vld [vmem:[%s1 + $0xc20] sm:$0xf]
    %v3537 = vld [vmem:[%s1 + $0xc28] sm:$0xf]
    %v3538 = vld [vmem:[%s1 + $0xc30] sm:$0xf]
    %v3539 = vld [vmem:[%s1 + $0xc38] sm:$0xf]
    %v3540 = vld [vmem:[%s1 + $0xc40] sm:$0xf]
    %v3541 = vld [vmem:[%s1 + $0xc48] sm:$0xf]
    %v3542 = vld [vmem:[%s1 + $0xc50] sm:$0xf]
    %v3543 = vld [vmem:[%s1 + $0xc58] sm:$0xf]
    %v3544 = vld [vmem:[%s1 + $0xc60] sm:$0xf]
    %v3545 = vld [vmem:[%s1 + $0xc68] sm:$0xf]
    %v3546 = vld [vmem:[%s1 + $0xc70] sm:$0xf]
    %v3547 = vld [vmem:[%s1 + $0xc78] sm:$0xf]
    %v3548 = vsel %vm3165, %v3380, 0.0
    %v3549 = vsel %vm3165, %v3383, 0.0
    %v3550 = vsel %vm3165, %v3386, 0.0
    %v3553 = vrot.slane %v3354, 4
    %v3554 = vrot.slane %v3548, 4
    %v3559 = vrot.slane %v3357, 4
    %v3560 = vrot.slane %v3549, 4
    %v3563 = vpack.c.bf16 %v3354, %v3354
    %v3564 = vpack.c.bf16 %v3548, %v3548
    %v3565 = vpack.c.bf16 %v3553, %v3553
    %v3566 = vpack.c.bf16 %v3554, %v3554
    %v3567 = vpack.c.bf16 %v3357, %v3357
    %v3568 = vpack.c.bf16 %v3549, %v3549
    %v3569 = vpack.c.bf16 %v3559, %v3559
    %v3570 = vpack.c.bf16 %v3560, %v3560
    %v3571 = vpack.c.bf16 %v3360, %v3360
    %v3572 = vpack.c.bf16 %v3550, %v3550
    %v3733 = vunpack.c.l.b16 %v3388
    %v3734 = vunpack.c.l.b16 %v3389
    %v3735 = vunpack.c.l.b16 %v3390
    %v3736 = vunpack.c.l.b16 %v3391
    %v3737 = vunpack.c.l.b16 %v3392
    %v3738 = vunpack.c.l.b16 %v3393
    %v3739 = vunpack.c.l.b16 %v3394
    %v3740 = vunpack.c.l.b16 %v3395
    %v3741 = vunpack.c.l.b16 %v3396
    %v3742 = vunpack.c.l.b16 %v3397
    %v3743 = vunpack.c.l.b16 %v3398
    %v3744 = vunpack.c.l.b16 %v3399
    %v3745 = vunpack.c.l.b16 %v3400
    %v3746 = vunpack.c.l.b16 %v3401
    %v3747 = vunpack.c.l.b16 %v3402
    %v3748 = vunpack.c.l.b16 %v3403
    %v3749 = vunpack.c.l.b16 %v3404
    %v3750 = vunpack.c.l.b16 %v3405
    %v3751 = vunpack.c.l.b16 %v3406
    %v3752 = vunpack.c.l.b16 %v3407
    %v3753 = vunpack.c.l.b16 %v3408
    %v3754 = vunpack.c.l.b16 %v3409
    %v3755 = vunpack.c.l.b16 %v3410
    %v3756 = vunpack.c.l.b16 %v3411
    %v3757 = vunpack.c.l.b16 %v3412
    %v3758 = vunpack.c.l.b16 %v3413
    %v3759 = vunpack.c.l.b16 %v3414
    %v3760 = vunpack.c.l.b16 %v3415
    %v3761 = vunpack.c.l.b16 %v3416
    %v3762 = vunpack.c.l.b16 %v3417
    %v3763 = vunpack.c.l.b16 %v3418
    %v3764 = vunpack.c.l.b16 %v3419
    %v3765 = vunpack.c.l.b16 %v3420
    %v3766 = vunpack.c.l.b16 %v3421
    %v3767 = vunpack.c.l.b16 %v3422
    %v3768 = vunpack.c.l.b16 %v3423
    %v3769 = vunpack.c.l.b16 %v3424
    %v3770 = vunpack.c.l.b16 %v3425
    %v3771 = vunpack.c.l.b16 %v3426
    %v3772 = vunpack.c.l.b16 %v3427
    %v3773 = vunpack.c.l.b16 %v3428
    %v3774 = vunpack.c.l.b16 %v3429
    %v3775 = vunpack.c.l.b16 %v3430
    %v3776 = vunpack.c.l.b16 %v3431
    %v3777 = vunpack.c.l.b16 %v3432
    %v3778 = vunpack.c.l.b16 %v3433
    %v3779 = vunpack.c.l.b16 %v3434
    %v3780 = vunpack.c.l.b16 %v3435
    %v3781 = vunpack.c.l.b16 %v3436
    %v3782 = vunpack.c.l.b16 %v3437
    %v3783 = vunpack.c.l.b16 %v3438
    %v3784 = vunpack.c.l.b16 %v3439
    %v3785 = vunpack.c.l.b16 %v3440
    %v3786 = vunpack.c.l.b16 %v3441
    %v3787 = vunpack.c.l.b16 %v3442
    %v3788 = vunpack.c.l.b16 %v3443
    %v3789 = vunpack.c.l.b16 %v3444
    %v3790 = vunpack.c.l.b16 %v3445
    %v3791 = vunpack.c.l.b16 %v3446
    %v3792 = vunpack.c.l.b16 %v3447
    %v3793 = vunpack.c.l.b16 %v3448
    %v3794 = vunpack.c.l.b16 %v3449
    %v3795 = vunpack.c.l.b16 %v3450
    %v3796 = vunpack.c.l.b16 %v3451
    %v3797 = vunpack.c.l.b16 %v3452
    %v3798 = vunpack.c.l.b16 %v3453
    %v3799 = vunpack.c.l.b16 %v3454
    %v3800 = vunpack.c.l.b16 %v3455
    %v3801 = vunpack.c.l.b16 %v3456
    %v3802 = vunpack.c.l.b16 %v3457
    %v3803 = vunpack.c.l.b16 %v3458
    %v3804 = vunpack.c.l.b16 %v3459
    %v3805 = vunpack.c.l.b16 %v3460
    %v3806 = vunpack.c.l.b16 %v3461
    %v3807 = vunpack.c.l.b16 %v3462
    %v3808 = vunpack.c.l.b16 %v3463
    %v3809 = vunpack.c.l.b16 %v3464
    %v3810 = vunpack.c.l.b16 %v3465
    %v3811 = vunpack.c.l.b16 %v3466
    %v3812 = vunpack.c.l.b16 %v3467
    %v3813 = vunpack.c.l.b16 %v3468
    %v3814 = vunpack.c.l.b16 %v3469
    %v3815 = vunpack.c.l.b16 %v3470
    %v3816 = vunpack.c.l.b16 %v3471
    %v3817 = vunpack.c.l.b16 %v3472
    %v3818 = vunpack.c.l.b16 %v3473
    %v3819 = vunpack.c.l.b16 %v3474
    %v3820 = vunpack.c.l.b16 %v3475
    %v3821 = vunpack.c.l.b16 %v3476
    %v3822 = vunpack.c.l.b16 %v3477
    %v3823 = vunpack.c.l.b16 %v3478
    %v3824 = vunpack.c.l.b16 %v3479
    %v3825 = vunpack.c.l.b16 %v3480
    %v3826 = vunpack.c.l.b16 %v3481
    %v3827 = vunpack.c.l.b16 %v3482
    %v3828 = vunpack.c.l.b16 %v3483
    %v3829 = vunpack.c.l.b16 %v3484
    %v3830 = vunpack.c.l.b16 %v3485
    %v3831 = vunpack.c.l.b16 %v3486
    %v3832 = vunpack.c.l.b16 %v3487
    %v3833 = vunpack.c.l.b16 %v3488
    %v3834 = vunpack.c.l.b16 %v3489
    %v3835 = vunpack.c.l.b16 %v3490
    %v3836 = vunpack.c.l.b16 %v3491
    %v3837 = vunpack.c.l.b16 %v3492
    %v3838 = vunpack.c.l.b16 %v3493
    %v3839 = vunpack.c.l.b16 %v3494
    %v3840 = vunpack.c.l.b16 %v3495
    %v3841 = vunpack.c.l.b16 %v3496
    %v3842 = vunpack.c.l.b16 %v3497
    %v3843 = vunpack.c.l.b16 %v3498
    %v3844 = vunpack.c.l.b16 %v3499
    %v3845 = vunpack.c.l.b16 %v3500
    %v3846 = vunpack.c.l.b16 %v3501
    %v3847 = vunpack.c.l.b16 %v3502
    %v3848 = vunpack.c.l.b16 %v3503
    %v3849 = vunpack.c.l.b16 %v3504
    %v3850 = vunpack.c.l.b16 %v3505
    %v3851 = vunpack.c.l.b16 %v3506
    %v3852 = vunpack.c.l.b16 %v3507
    %v3853 = vunpack.c.l.b16 %v3508
    %v3854 = vunpack.c.l.b16 %v3509
    %v3855 = vunpack.c.l.b16 %v3510
    %v3856 = vunpack.c.l.b16 %v3511
    %v3857 = vunpack.c.l.b16 %v3512
    %v3858 = vunpack.c.l.b16 %v3513
    %v3859 = vunpack.c.l.b16 %v3514
    %v3860 = vunpack.c.l.b16 %v3515
    %v3861 = vunpack.c.l.b16 %v3516
    %v3862 = vunpack.c.l.b16 %v3517
    %v3863 = vunpack.c.l.b16 %v3518
    %v3864 = vunpack.c.l.b16 %v3519
    %v3865 = vunpack.c.l.b16 %v3520
    %v3866 = vunpack.c.l.b16 %v3521
    %v3867 = vunpack.c.l.b16 %v3522
    %v3868 = vunpack.c.l.b16 %v3523
    %v3869 = vunpack.c.l.b16 %v3524
    %v3870 = vunpack.c.l.b16 %v3525
    %v3871 = vunpack.c.l.b16 %v3526
    %v3872 = vunpack.c.l.b16 %v3527
    %v3873 = vunpack.c.l.b16 %v3528
    %v3874 = vunpack.c.l.b16 %v3529
    %v3875 = vunpack.c.l.b16 %v3530
    %v3876 = vunpack.c.l.b16 %v3531
    %v3877 = vunpack.c.l.b16 %v3532
    %v3878 = vunpack.c.l.b16 %v3533
    %v3879 = vunpack.c.l.b16 %v3534
    %v3880 = vunpack.c.l.b16 %v3535
    %v3881 = vunpack.c.l.b16 %v3536
    %v3882 = vunpack.c.l.b16 %v3537
    %v3883 = vunpack.c.l.b16 %v3538
    %v3884 = vunpack.c.l.b16 %v3539
    %v3885 = vunpack.c.l.b16 %v3540
    %v3886 = vunpack.c.l.b16 %v3541
    %v3887 = vunpack.c.l.b16 %v3542
    %v3888 = vunpack.c.l.b16 %v3543
    %v3889 = vunpack.c.l.b16 %v3544
    %v3890 = vunpack.c.l.b16 %v3545
    %v3891 = vunpack.c.l.b16 %v3546
    %v3892 = vunpack.c.l.b16 %v3547
    %v3893 = vpack.c.b16 %v3734, %v3733
    %v3894 = vpack.c.b16 %v3736, %v3735
    %v3895 = vpack.c.b16 %v3738, %v3737
    %v3896 = vpack.c.b16 %v3740, %v3739
    %v3897 = vpack.c.b16 %v3742, %v3741
    %v3898 = vpack.c.b16 %v3744, %v3743
    %v3899 = vpack.c.b16 %v3746, %v3745
    %v3900 = vpack.c.b16 %v3748, %v3747
    %v3901 = vpack.c.b16 %v3750, %v3749
    %v3902 = vpack.c.b16 %v3752, %v3751
    %v3903 = vpack.c.b16 %v3754, %v3753
    %v3904 = vpack.c.b16 %v3756, %v3755
    %v3905 = vpack.c.b16 %v3758, %v3757
    %v3906 = vpack.c.b16 %v3760, %v3759
    %v3907 = vpack.c.b16 %v3762, %v3761
    %v3908 = vpack.c.b16 %v3764, %v3763
    %v3909 = vpack.c.b16 %v3766, %v3765
    %v3910 = vpack.c.b16 %v3768, %v3767
    %v3911 = vpack.c.b16 %v3770, %v3769
    %v3912 = vpack.c.b16 %v3772, %v3771
    %v3913 = vpack.c.b16 %v3774, %v3773
    %v3914 = vpack.c.b16 %v3776, %v3775
    %v3915 = vpack.c.b16 %v3778, %v3777
    %v3916 = vpack.c.b16 %v3780, %v3779
    %v3917 = vpack.c.b16 %v3782, %v3781
    %v3918 = vpack.c.b16 %v3784, %v3783
    %v3919 = vpack.c.b16 %v3786, %v3785
    %v3920 = vpack.c.b16 %v3788, %v3787
    %v3921 = vpack.c.b16 %v3790, %v3789
    %v3922 = vpack.c.b16 %v3792, %v3791
    %v3923 = vpack.c.b16 %v3794, %v3793
    %v3924 = vpack.c.b16 %v3796, %v3795
    %v3925 = vpack.c.b16 %v3798, %v3797
    %v3926 = vpack.c.b16 %v3800, %v3799
    %v3927 = vpack.c.b16 %v3802, %v3801
    %v3928 = vpack.c.b16 %v3804, %v3803
    %v3929 = vpack.c.b16 %v3806, %v3805
    %v3930 = vpack.c.b16 %v3808, %v3807
    %v3931 = vpack.c.b16 %v3810, %v3809
    %v3932 = vpack.c.b16 %v3812, %v3811
    %v3933 = vpack.c.b16 %v3814, %v3813
    %v3934 = vpack.c.b16 %v3816, %v3815
    %v3935 = vpack.c.b16 %v3818, %v3817
    %v3936 = vpack.c.b16 %v3820, %v3819
    %v3937 = vpack.c.b16 %v3822, %v3821
    %v3938 = vpack.c.b16 %v3824, %v3823
    %v3939 = vpack.c.b16 %v3826, %v3825
    %v3940 = vpack.c.b16 %v3828, %v3827
    %v3941 = vpack.c.b16 %v3830, %v3829
    %v3942 = vpack.c.b16 %v3832, %v3831
    %v3943 = vpack.c.b16 %v3834, %v3833
    %v3944 = vpack.c.b16 %v3836, %v3835
    %v3945 = vpack.c.b16 %v3838, %v3837
    %v3946 = vpack.c.b16 %v3840, %v3839
    %v3947 = vpack.c.b16 %v3842, %v3841
    %v3948 = vpack.c.b16 %v3844, %v3843
    %v3949 = vpack.c.b16 %v3846, %v3845
    %v3950 = vpack.c.b16 %v3848, %v3847
    %v3951 = vpack.c.b16 %v3850, %v3849
    %v3952 = vpack.c.b16 %v3852, %v3851
    %v3953 = vpack.c.b16 %v3854, %v3853
    %v3954 = vpack.c.b16 %v3856, %v3855
    %v3955 = vpack.c.b16 %v3858, %v3857
    %v3956 = vpack.c.b16 %v3860, %v3859
    %v3957 = vpack.c.b16 %v3862, %v3861
    %v3958 = vpack.c.b16 %v3864, %v3863
    %v3959 = vpack.c.b16 %v3866, %v3865
    %v3960 = vpack.c.b16 %v3868, %v3867
    %v3961 = vpack.c.b16 %v3870, %v3869
    %v3962 = vpack.c.b16 %v3872, %v3871
    %v3963 = vpack.c.b16 %v3874, %v3873
    %v3964 = vpack.c.b16 %v3876, %v3875
    %v3965 = vpack.c.b16 %v3878, %v3877
    %v3966 = vpack.c.b16 %v3880, %v3879
    %v3967 = vpack.c.b16 %v3882, %v3881
    %v3968 = vpack.c.b16 %v3884, %v3883
    %v3969 = vpack.c.b16 %v3886, %v3885
    %v3970 = vpack.c.b16 %v3888, %v3887
    %v3971 = vpack.c.b16 %v3890, %v3889
    %v3972 = vpack.c.b16 %v3892, %v3891
    %4053 = vmatpush.bf16.msra.mxu0 %v3900
    %4054 = vmatpush.bf16.msra.mxu0 %v3899
    %4055 = vmatpush.bf16.msra.mxu0 %v3898
    %4056 = vmatpush.bf16.msra.mxu0 %v3897
    %4057 = vmatpush.bf16.msra.mxu0 %v3896
    %4058 = vmatpush.bf16.msra.mxu0 %v3895
    %4059 = vmatpush.bf16.msra.mxu0 %v3894
    %4060 = vmatpush.bf16.msra.mxu0 %v3893
    %4061 = vmatmul.bf16.gmra.mxu0 %v3563
    %v4062 = vpop.f32.mrf.mxu0
    %v4063 = vadd.f32 0.0, %v4062
    %v4064 = vpop.f32.mrf.mxu0
    %4065 = vdwg.mxu0
    %4066 = vmatpush.bf16.msra.mxu0 %v3908
    %4067 = vmatpush.bf16.msra.mxu0 %v3907
    %4068 = vmatpush.bf16.msra.mxu0 %v3906
    %4069 = vmatpush.bf16.msra.mxu0 %v3905
    %4070 = vmatpush.bf16.msra.mxu0 %v3904
    %4071 = vmatpush.bf16.msra.mxu0 %v3903
    %4072 = vmatpush.bf16.msra.mxu0 %v3902
    %4073 = vmatpush.bf16.msra.mxu0 %v3901
    %4074 = vmatmul.bf16.gmra.mxu0 %v3564
    %v4075 = vpop.f32.mrf.mxu0
    %v4076 = vadd.f32 %v4063, %v4075
    %v4077 = vpop.f32.mrf.mxu0
    %4078 = vdwg.mxu0
    %4079 = vmatpush.bf16.msra.mxu0 %v3916
    %4080 = vmatpush.bf16.msra.mxu0 %v3915
    %4081 = vmatpush.bf16.msra.mxu0 %v3914
    %4082 = vmatpush.bf16.msra.mxu0 %v3913
    %4083 = vmatpush.bf16.msra.mxu0 %v3912
    %4084 = vmatpush.bf16.msra.mxu0 %v3911
    %4085 = vmatpush.bf16.msra.mxu0 %v3910
    %4086 = vmatpush.bf16.msra.mxu0 %v3909
    %4087 = vmatmul.bf16.gmra.mxu0 %v3565
    %v4088 = vpop.f32.mrf.mxu0
    %v4089 = vadd.f32 %v4076, %v4088
    %v4090 = vpop.f32.mrf.mxu0
    %4091 = vdwg.mxu0
    %4092 = vmatpush.bf16.msra.mxu0 %v3924
    %4093 = vmatpush.bf16.msra.mxu0 %v3923
    %4094 = vmatpush.bf16.msra.mxu0 %v3922
    %4095 = vmatpush.bf16.msra.mxu0 %v3921
    %4096 = vmatpush.bf16.msra.mxu0 %v3920
    %4097 = vmatpush.bf16.msra.mxu0 %v3919
    %4098 = vmatpush.bf16.msra.mxu0 %v3918
    %4099 = vmatpush.bf16.msra.mxu0 %v3917
    %4100 = vmatmul.bf16.gmra.mxu0 %v3566
    %v4101 = vpop.f32.mrf.mxu0
    %v4102 = vadd.f32 %v4089, %v4101
    %v4103 = vpop.f32.mrf.mxu0
    %4104 = vdwg.mxu0
    %4105 = vmatpush.bf16.msra.mxu0 %v3932
    %4106 = vmatpush.bf16.msra.mxu0 %v3931
    %4107 = vmatpush.bf16.msra.mxu0 %v3930
    %4108 = vmatpush.bf16.msra.mxu0 %v3929
    %4109 = vmatpush.bf16.msra.mxu0 %v3928
    %4110 = vmatpush.bf16.msra.mxu0 %v3927
    %4111 = vmatpush.bf16.msra.mxu0 %v3926
    %4112 = vmatpush.bf16.msra.mxu0 %v3925
    %4113 = vmatmul.bf16.gmra.mxu0 %v3567
    %v4114 = vpop.f32.mrf.mxu0
    %v4115 = vadd.f32 %v4102, %v4114
    %v4116 = vpop.f32.mrf.mxu0
    %4117 = vdwg.mxu0
    %4118 = vmatpush.bf16.msra.mxu0 %v3940
    %4119 = vmatpush.bf16.msra.mxu0 %v3939
    %4120 = vmatpush.bf16.msra.mxu0 %v3938
    %4121 = vmatpush.bf16.msra.mxu0 %v3937
    %4122 = vmatpush.bf16.msra.mxu0 %v3936
    %4123 = vmatpush.bf16.msra.mxu0 %v3935
    %4124 = vmatpush.bf16.msra.mxu0 %v3934
    %4125 = vmatpush.bf16.msra.mxu0 %v3933
    %4126 = vmatmul.bf16.gmra.mxu0 %v3568
    %v4127 = vpop.f32.mrf.mxu0
    %v4128 = vadd.f32 %v4115, %v4127
    %v4129 = vpop.f32.mrf.mxu0
    %4130 = vdwg.mxu0
    %4131 = vmatpush.bf16.msra.mxu0 %v3948
    %4132 = vmatpush.bf16.msra.mxu0 %v3947
    %4133 = vmatpush.bf16.msra.mxu0 %v3946
    %4134 = vmatpush.bf16.msra.mxu0 %v3945
    %4135 = vmatpush.bf16.msra.mxu0 %v3944
    %4136 = vmatpush.bf16.msra.mxu0 %v3943
    %4137 = vmatpush.bf16.msra.mxu0 %v3942
    %4138 = vmatpush.bf16.msra.mxu0 %v3941
    %4139 = vmatmul.bf16.gmra.mxu0 %v3569
    %v4140 = vpop.f32.mrf.mxu0
    %v4141 = vadd.f32 %v4128, %v4140
    %v4142 = vpop.f32.mrf.mxu0
    %4143 = vdwg.mxu0
    %4144 = vmatpush.bf16.msra.mxu0 %v3956
    %4145 = vmatpush.bf16.msra.mxu0 %v3955
    %4146 = vmatpush.bf16.msra.mxu0 %v3954
    %4147 = vmatpush.bf16.msra.mxu0 %v3953
    %4148 = vmatpush.bf16.msra.mxu0 %v3952
    %4149 = vmatpush.bf16.msra.mxu0 %v3951
    %4150 = vmatpush.bf16.msra.mxu0 %v3950
    %4151 = vmatpush.bf16.msra.mxu0 %v3949
    %4152 = vmatmul.bf16.gmra.mxu0 %v3570
    %v4153 = vpop.f32.mrf.mxu0
    %v4154 = vadd.f32 %v4141, %v4153
    %v4155 = vpop.f32.mrf.mxu0
    %4156 = vdwg.mxu0
    %4157 = vmatpush.bf16.msra.mxu0 %v3964
    %4158 = vmatpush.bf16.msra.mxu0 %v3963
    %4159 = vmatpush.bf16.msra.mxu0 %v3962
    %4160 = vmatpush.bf16.msra.mxu0 %v3961
    %4161 = vmatpush.bf16.msra.mxu0 %v3960
    %4162 = vmatpush.bf16.msra.mxu0 %v3959
    %4163 = vmatpush.bf16.msra.mxu0 %v3958
    %4164 = vmatpush.bf16.msra.mxu0 %v3957
    %4165 = vmatmul.bf16.gmra.mxu0 %v3571
    %v4166 = vpop.f32.mrf.mxu0
    %v4167 = vadd.f32 %v4154, %v4166
    %v4168 = vpop.f32.mrf.mxu0
    %4169 = vdwg.mxu0
    %4170 = vmatpush.bf16.msra.mxu0 %v3972
    %4171 = vmatpush.bf16.msra.mxu0 %v3971
    %4172 = vmatpush.bf16.msra.mxu0 %v3970
    %4173 = vmatpush.bf16.msra.mxu0 %v3969
    %4174 = vmatpush.bf16.msra.mxu0 %v3968
    %4175 = vmatpush.bf16.msra.mxu0 %v3967
    %4176 = vmatpush.bf16.msra.mxu0 %v3966
    %4177 = vmatpush.bf16.msra.mxu0 %v3965
    %4178 = vmatmul.bf16.gmra.mxu0 %v3572
    %v4179 = vpop.f32.mrf.mxu0
    %v4180 = vadd.f32 %v4167, %v4179
    %v4181 = vpop.f32.mrf.mxu0
    %4182 = vdwg.mxu0
    %vm4183 = vcmask 31744
    %v4184 = vsel %vm4183, 1.0, 0
    %v4187 = vsel %vm143, %v4180, 0
    %4189 = vmatpush.msra.mxu0 0.0
    %4190 = vmatpush.msra.mxu0 0.0
    %4191 = vmatpush.msra.mxu0 0.0
    %4192 = vmatpush.msra.mxu0 0.0
    %4193 = vmatpush.msra.mxu0 0.0
    %4194 = vmatpush.msra.mxu0 0.0
    %4195 = vmatpush.msra.mxu0 0.0
    %4196 = vmatpush.msra.mxu0 0.0
    %4197 = vmatpush.msra.mxu0 0.0
    %4198 = vmatpush.msra.mxu0 0.0
    %4199 = vmatpush.msra.mxu0 0.0
    %4200 = vmatpush.msra.mxu0 0.0
    %4201 = vmatpush.msra.mxu0 0.0
    %4202 = vmatpush.msra.mxu0 0.0
    %4203 = vmatpush.msra.mxu0 0.0
    %4204 = vmatpush.msra.mxu0 %v4187
    %4205 = vmatmul.f32.gmra.mxu0 %v4184
    %v4206 = vpop.f32.mrf.mxu0
    %v4207 = vadd.f32 0.0, %v4206
    %4208 = vdwg.mxu0
    %v4209 = vmul.f32 %v4207, 0.25
    %v4210 = vmul.f32 %v4180, %v4180
    %v4212 = vsel %vm143, %v4210, 0
    %4214 = vmatpush.msra.mxu0 0.0
    %4215 = vmatpush.msra.mxu0 0.0
    %4216 = vmatpush.msra.mxu0 0.0
    %4217 = vmatpush.msra.mxu0 0.0
    %4218 = vmatpush.msra.mxu0 0.0
    %4219 = vmatpush.msra.mxu0 0.0
    %4220 = vmatpush.msra.mxu0 0.0
    %4221 = vmatpush.msra.mxu0 0.0
    %4222 = vmatpush.msra.mxu0 0.0
    %4223 = vmatpush.msra.mxu0 0.0
    %4224 = vmatpush.msra.mxu0 0.0
    %4225 = vmatpush.msra.mxu0 0.0
    %4226 = vmatpush.msra.mxu0 0.0
    %4227 = vmatpush.msra.mxu0 0.0
    %4228 = vmatpush.msra.mxu0 0.0
    %4229 = vmatpush.msra.mxu0 %v4212
    %4230 = vmatmul.f32.gmra.mxu0 %v4184
    %v4231 = vpop.f32.mrf.mxu0
    %v4232 = vadd.f32 0.0, %v4231
    %4233 = vdwg.mxu0
    %v4234 = vmul.f32 %v4232, 0.25
    %v4235 = vld [vmem:[%s2 + $0x504] ss:$0 sm:$0xff]
    %v4236 = vmul.f32 %v4209, %v4209
    %v4237 = vsub.f32 %v4234, %v4236
    %v4238 = vadd.f32 %v4237, 1e-05
    %v4239 = vrsqrt.pop %v4238
    %v4240 = vmul.f32 %v4239, %v4238
    %v4241 = vmul.f32 %v4240, %v4239
    %v4242 = vmul.f32 0.5, %v4241
    %v4243 = vsub.f32 1.5, %v4242
    %v4244 = vmul.f32 %v4239, %v4243
    %vm4245 = vweird.f32 %v4238
    %vm4246 = vweird.f32 %v4239
    %vm4247 = vmor %vm4245, %vm4246
    %v4248 = vsel %vm4247, %v4239, %v4244
    %v4249 = vmul.f32 %v4235, %v4248
    %v4250 = vperm.slane %v4209, 0
    %v4251 = vsub.f32 %v4180, %v4250
    %v4252 = vperm.slane %v4249, 0
    %v4253 = vmul.f32 %v4251, %v4252
    %v4254 = vld [vmem:[%s2 + $0x505] ss:$0 sm:$0xff]
    %v4255 = vadd.f32 %v4253, %v4254
    %v4256 = vmax.f32 %v4255, 0.0
    %v4257 = vld [vmem:[%s2 + $0x360] sm:$0xff]
    %v4258 = vld [vmem:[%s2 + $0x370] sm:$0xff]
    %v4259 = vld [vmem:[%s2 + $0x380] sm:$0xff]
    %v4260 = vld [vmem:[%s2 + $0x390] sm:$0xff]
    %v4261 = vld [vmem:[%s2 + $0x3a0] sm:$0xff]
    %v4262 = vld [vmem:[%s2 + $0x3b0] sm:$0xff]
    %v4263 = vld [vmem:[%s2 + $0x3c0] sm:$0xff]
    %v4264 = vld [vmem:[%s2 + $0x3d0] sm:$0xff]
    %v4265 = vld [vmem:[%s2 + $0x3e0] sm:$0xff]
    %v4266 = vld [vmem:[%s2 + $0x3f0] sm:$0xff]
    %v4267 = vld [vmem:[%s2 + $0x400] sm:$0xff]
    %v4268 = vld [vmem:[%s2 + $0x410] sm:$0xff]
    %v4269 = vld [vmem:[%s2 + $0x420] sm:$0xff]
    %v4270 = vld [vmem:[%s2 + $0x430] sm:$0xff]
    %v4271 = vld [vmem:[%s2 + $0x440] sm:$0xff]
    %v4272 = vld [vmem:[%s2 + $0x506] ss:$0 sm:$0xff]
    %vm4273 = vcmask 982016
    %v4275 = vsel %vm4273, %v4256, 0
    %4277 = vmatpush.msra.mxu0 0.0
    %4278 = vmatpush.msra.mxu0 %v4271
    %4279 = vmatpush.msra.mxu0 %v4270
    %4280 = vmatpush.msra.mxu0 %v4269
    %4281 = vmatpush.msra.mxu0 %v4268
    %4282 = vmatpush.msra.mxu0 %v4267
    %4283 = vmatpush.msra.mxu0 %v4266
    %4284 = vmatpush.msra.mxu0 %v4265
    %4285 = vmatpush.msra.mxu0 %v4264
    %4286 = vmatpush.msra.mxu0 %v4263
    %4287 = vmatpush.msra.mxu0 %v4262
    %4288 = vmatpush.msra.mxu0 %v4261
    %4289 = vmatpush.msra.mxu0 %v4260
    %4290 = vmatpush.msra.mxu0 %v4259
    %4291 = vmatpush.msra.mxu0 %v4258
    %4292 = vmatpush.msra.mxu0 %v4257
    %4293 = vmatmul.f32.gmra.mxu0 %v4275
    %v4294 = vpop.f32.mrf.mxu0
    %v4295 = vadd.f32 %v4272, %v4294
    %4296 = vdwg.mxu0
    %v4297 = vmax.f32 %v4295, 0.0
    %v4298 = vld [vmem:[%s2 + $0x450] sm:$0xff]
    %v4299 = vld [vmem:[%s2 + $0x460] sm:$0xff]
    %v4300 = vld [vmem:[%s2 + $0x470] sm:$0xff]
    %v4301 = vld [vmem:[%s2 + $0x480] sm:$0xff]
    %v4302 = vld [vmem:[%s2 + $0x490] sm:$0xff]
    %v4303 = vld [vmem:[%s2 + $0x4a0] sm:$0xff]
    %v4304 = vld [vmem:[%s2 + $0x4b0] sm:$0xff]
    %v4305 = vld [vmem:[%s2 + $0x4c0] sm:$0xff]
    %v4306 = vld [vmem:[%s2 + $0x4d0] sm:$0xff]
    %v4307 = vld [vmem:[%s2 + $0x4e0] sm:$0xff]
    %v4308 = vld [vmem:[%s2 + $0x4f0] sm:$0xf]
    %v4309 = vld [vmem:[%s2 + $0x507] ss:$0 sm:$0xff]
    %vm4310 = vcmask 687104
    %v4312 = vsel %vm4310, %v4297, 0
    %v4315 = vsel %vm143, %v4308, 0
    %4317 = vmatpush.msra.mxu0 0.0
    %4318 = vmatpush.msra.mxu0 0.0
    %4319 = vmatpush.msra.mxu0 0.0
    %4320 = vmatpush.msra.mxu0 0.0
    %4321 = vmatpush.msra.mxu0 0.0
    %4322 = vmatpush.msra.mxu0 %v4315
    %4323 = vmatpush.msra.mxu0 %v4307
    %4324 = vmatpush.msra.mxu0 %v4306
    %4325 = vmatpush.msra.mxu0 %v4305
    %4326 = vmatpush.msra.mxu0 %v4304
    %4327 = vmatpush.msra.mxu0 %v4303
    %4328 = vmatpush.msra.mxu0 %v4302
    %4329 = vmatpush.msra.mxu0 %v4301
    %4330 = vmatpush.msra.mxu0 %v4300
    %4331 = vmatpush.msra.mxu0 %v4299
    %4332 = vmatpush.msra.mxu0 %v4298
    %4333 = vmatmul.f32.gmra.mxu0 %v4312
    %v4334 = vpop.f32.mrf.mxu0
    %v4335 = vadd.f32 %v4309, %v4334
    %4336 = vdwg.mxu0
    %vm4337 = vcmask 76800
    %4338 = vst.msk [vmem:[#allocation2] sm:$0xf] %vm4337, %v4335
    // Predicated region
    $region14: #{lenet5_forward.1} parent=1 // pred_check
      _
    $region15: #{lenet5_forward.1} parent=1 // pred_check_branch
      %4340 = sbr.rel (0) target = $region17
    $region16: #{lenet5_forward.1} parent=1 // pred_region
      %4342 = vsyncadd [#allocation3], 0
      %s4344 = sshll.u32 [#allocation2], 4
      %s4345 = int_to_ptr.vmem [resolvable:$true] %s4344
      %s4346 = sshll.u32 %s3, 4
      %s4347 = int_to_ptr.hbm [resolvable:$true] %s4346
      %4349 = dma.vmem_to_hbm [thread:$0]  %s4345, 64, %s4347, [#allocation3]
    $region17: #{lenet5_forward.1} parent=1 // pred_fallthru
      _
    // Predicated region
    $region18: #{lenet5_forward.1} parent=1 // pred_check
      _
    $region19: #{lenet5_forward.1} parent=1 // pred_check_branch
      %4351 = sbr.rel (0) target = $region21
    $region20: #{lenet5_forward.1} parent=1 // pred_region
      %4353 = dma.done [#allocation3], 64
    $region21: #{lenet5_forward.1} parent=1 // pred_fallthru
      _
    %4354 = vsyncpa [#allocation3], 1

</llo_original>
